<compile_context>
chip_gen: v7x
topology: tpu7x:2x2x1
jax: 0.10.0
libtpu: 0.0.40
codegen_flags: <defaults>
</compile_context>

<pallas_src>
import functools
import math

import jax
import jax.numpy as jnp
import numpy as np
from jax.experimental import pallas as pl
from jax.experimental.pallas import tpu as pltpu


# ----------------------------------------------------------------------------
# Fused Pallas kernel
# ----------------------------------------------------------------------------

def _fused_temporal_attention_kernel(x_ref, enc_ref, wqkv_ref, bqkv_ref,
                                     wo_ref, bo_ref, out_ref, attn_ref,
                                     *, n_heads):
    """One batch tile: enc-add + QKV proj + per-head softmax attention + out proj.

    x_ref    : [TB, L, D]   f32
    enc_ref  : [L, D]       f32 (constant across grid)
    wqkv_ref : [D, 3D]      bf16 (Q block pre-scaled by 1/sqrt(head_dim))
    bqkv_ref : [1, 3D]      f32
    wo_ref   : [D, D]       bf16
    bo_ref   : [1, D]       f32
    out_ref  : [TB, L, D]   f32
    attn_ref : [TB, H, L*L] (lane-dense attention-weight writeback)
    """
    TB, L, D = x_ref.shape
    H = n_heads
    hd = D // H

    # Temporal-encoding add (f32) + fused QKV projection (bf16 MXU, f32 acc).
    # NOTE: the (TB, L) -> TB*L merge is relayout-free when L is a multiple of the
    # sublane packing (8 for f32 / 16 for bf16); L=16 in the demo satisfies both.
    xe = x_ref[...] + enc_ref[...]                              # [TB, L, D] f32
    x2 = xe.reshape(TB * L, D).astype(jnp.bfloat16)
    qkv = jnp.dot(x2, wqkv_ref[...], preferred_element_type=jnp.float32)
    qkv = qkv + bqkv_ref[...]                                   # [TB*L, 3D] f32
    qkv = qkv.reshape(TB, L, 3 * D)

    q = qkv[:, :, 0 * D:1 * D]                                  # scale already folded in
    k = qkv[:, :, 1 * D:2 * D].astype(jnp.bfloat16)
    v = qkv[:, :, 2 * D:3 * D].astype(jnp.bfloat16)

    # Per-head attention, entirely in VMEM.  With hd << 128 the MXU is inherently
    # under-utilized here; this math hides under the input/output DMAs, so no
    # further matmul tiling is attempted.
    ctx_heads = []
    for h in range(H):
        sl = slice(h * hd, (h + 1) * hd)
        qh = q[:, :, sl].astype(jnp.bfloat16)                   # [TB, L, hd]
        kh = k[:, :, sl]
        vh = v[:, :, sl]
        s = jnp.einsum('bld,bmd->blm', qh, kh,
                       preferred_element_type=jnp.float32)      # [TB, L, L] f32
        m = jnp.max(s, axis=-1, keepdims=True)
        e = jnp.exp(s - m)
        p = e * pl.reciprocal(jnp.sum(e, axis=-1, keepdims=True), approx=True)
        # Lane-dense writeback: last dim is L*L (>= 128) instead of L.
        attn_ref[:, h, :] = p.reshape(TB, L * L).astype(attn_ref.dtype)
        ctx_heads.append(
            jnp.einsum('blm,bmd->bld', p.astype(jnp.bfloat16), vh,
                       preferred_element_type=jnp.float32))      # [TB, L, hd]

    # Concatenating heads along the feature dim == transpose(1,2).view(B, L, D).
    ctx = jnp.concatenate(ctx_heads, axis=-1)                    # [TB, L, D] f32
    ctx2 = ctx.reshape(TB * L, D).astype(jnp.bfloat16)
    out = jnp.dot(ctx2, wo_ref[...], preferred_element_type=jnp.float32)
    out = out + bo_ref[...]
    out_ref[...] = out.reshape(TB, L, D).astype(out_ref.dtype)


# ----------------------------------------------------------------------------
# Tile selection (VMEM-byte budget, grid >= 2, cdiv + padding for awkward B)
# ----------------------------------------------------------------------------

def _per_batch_vmem_bytes(L, D, H):
    f32, bf16 = 4, 2
    x_blk = L * D * f32 * 2                        # double-buffered input block
    out_blk = L * D * f32 * 2                      # double-buffered output block
    attn_blk = H * L * L * f32 * 2                 # double-buffered attn block
    interm = (L * 3 * D * (f32 + bf16)             # qkv f32 + bf16 views
              + 4 * L * L * f32                    # scores / exp / p temporaries
              + 2 * L * D * (f32 + bf16))          # ctx f32 + bf16
    return x_blk + out_blk + attn_blk + interm


def _const_vmem_bytes(L, D):
    f32, bf16 = 4, 2
    # Constant blocks (enc, wqkv, bqkv, wo, bo) are double-buffered by default.
    return 2 * (L * D * f32 + 3 * D * D * bf16 + 3 * D * f32 + D * D * bf16 + D * f32)


def _choose_batch_tile(B, L, D, H, *, budget_bytes=24 << 20, min_grid=2):
    per_b = max(1, _per_batch_vmem_bytes(L, D, H))
    avail = max(budget_bytes - _const_vmem_bytes(L, D), per_b)
    tb = max(1, min(B, avail // per_b))
    if B >= min_grid:
        tb = min(tb, pl.cdiv(B, min_grid))         # grid >= 2 -> both TCs busy
    grid = pl.cdiv(B, tb)
    return int(tb), int(grid)


# ----------------------------------------------------------------------------
# Wrapper
# ----------------------------------------------------------------------------

def prepare_attention_params(raw, n_heads):
    """Pre-transpose / fuse weights once (PyTorch [out,in] -> lane-dense [in,out])."""
    d_model = raw['wq'].shape[0]
    head_dim = d_model // n_heads
    inv_scale = 1.0 / math.sqrt(head_dim)
    # Fused QKV weight [D, 3D]; fold 1/scale into Q so the kernel never divides.
    wqkv = jnp.concatenate(
        [raw['wq'].T * inv_scale, raw['wk'].T, raw['wv'].T], axis=1)
    bqkv = jnp.concatenate([raw['bq'] * inv_scale, raw['bk'], raw['bv']])
    return {
        'temporal_encoding': raw['temporal_encoding'].astype(jnp.float32),
        'wqkv': wqkv.astype(jnp.bfloat16),
        'bqkv': bqkv.reshape(1, 3 * d_model).astype(jnp.float32),
        'wo_t': raw['wo'].T.astype(jnp.bfloat16),
        'bo': raw['bo'].reshape(1, d_model).astype(jnp.float32),
    }


def temporal_attention_forward(params, x, *, n_heads, attn_dtype=jnp.float32):
    """Equivalent of TemporalAttention.forward(x, mask=None) in eval mode.

    x: [B, L, D] float32.  Returns (output [B, L, D], attention_weights [B, H, L, L]).
    attn_dtype: set to jnp.bfloat16 to halve the attention-weights HBM writeback.
    """
    B, L, D = x.shape
    H = n_heads
    assert D % H == 0, 'd_model must be divisible by n_heads'
    hd = D // H
    enc_table = params['temporal_encoding']
    assert L <= enc_table.shape[0], 'seq_len exceeds temporal_encoding table (1000)'
    enc = enc_table[:L].astype(jnp.float32)                     # [L, D]

    TB, grid = _choose_batch_tile(B, L, D, H)
    B_pad = TB * grid
    x_f32 = x.astype(jnp.float32)
    if B_pad != B:                                              # awkward B: pad, not tile=1
        x_f32 = jnp.pad(x_f32, ((0, B_pad - B), (0, 0), (0, 0)))

    attn_itemsize = jnp.dtype(attn_dtype).itemsize
    cost = pl.CostEstimate(
        flops=(2 * B_pad * L * D * (3 * D)            # QKV projection
               + 4 * B_pad * H * L * L * hd           # scores + PV
               + 2 * B_pad * L * D * D),              # output projection
        transcendentals=B_pad * H * L * L,            # exp
        bytes_accessed=(B_pad * L * D * 4 + L * D * 4
                        + 3 * D * D * 2 + 3 * D * 4 + D * D * 2 + D * 4
                        + B_pad * L * D * 4
                        + B_pad * H * L * L * attn_itemsize),
    )

    kernel = functools.partial(_fused_temporal_attention_kernel, n_heads=H)

    out_pad, attn_pad = pl.pallas_call(
        kernel,
        out_shape=(jax.ShapeDtypeStruct((B_pad, L, D), jnp.float32),
                   jax.ShapeDtypeStruct((B_pad, H, L * L), attn_dtype)),
        grid=(grid,),
        in_specs=[
            pl.BlockSpec((TB, L, D), lambda b: (b, 0, 0)),      # x tile
            pl.BlockSpec((L, D), lambda b: (0, 0)),             # temporal encoding
            pl.BlockSpec((D, 3 * D), lambda b: (0, 0)),         # fused QKV weight
            pl.BlockSpec((1, 3 * D), lambda b: (0, 0)),         # fused QKV bias
            pl.BlockSpec((D, D), lambda b: (0, 0)),             # out-proj weight
            pl.BlockSpec((1, D), lambda b: (0, 0)),             # out-proj bias
        ],
        out_specs=(pl.BlockSpec((TB, L, D), lambda b: (b, 0, 0)),
                   pl.BlockSpec((TB, H, L * L), lambda b: (b, 0, 0))),
        compiler_params=pltpu.CompilerParams(
            dimension_semantics=("parallel",),
            vmem_limit_bytes=48 * 1024 * 1024),
        cost_estimate=cost,
    )(x_f32, enc, params['wqkv'], params['bqkv'], params['wo_t'], params['bo'])

    output = out_pad[:B]
    # Free reshape: splitting the minor L*L dim back into (L, L).
    attention_weights = attn_pad[:B].astype(jnp.float32).reshape(B, H, L, L)
    return output, attention_weights


# ----------------------------------------------------------------------------
# Parameters (PyTorch nn.Linear-style init, [out_features, in_features])
# ----------------------------------------------------------------------------

def init_raw_params(key, d_model, max_positions=1000):
    ks = jax.random.split(key, 9)
    bound = 1.0 / math.sqrt(d_model)

    def lin_w(k):
        return jax.random.uniform(k, (d_model, d_model), jnp.float32, -bound, bound)

    def lin_b(k):
        return jax.random.uniform(k, (d_model,), jnp.float32, -bound, bound)

    return {
        'temporal_encoding': jax.random.normal(ks[0], (max_positions, d_model),
                                               jnp.float32),
        'wq': lin_w(ks[1]), 'bq': lin_b(ks[2]),
        'wk': lin_w(ks[3]), 'bk': lin_b(ks[4]),
        'wv': lin_w(ks[5]), 'bv': lin_b(ks[6]),
        'wo': lin_w(ks[7]), 'bo': lin_b(ks[8]),
    }


# ----------------------------------------------------------------------------
# Pure-JAX f32 reference (mirrors the PyTorch forward, mask=None, no dropout)
# ----------------------------------------------------------------------------

def temporal_attention_ref(raw, x, n_heads):
    B, L, D = x.shape
    H = n_heads
    hd = D // H
    xe = x + raw['temporal_encoding'][:L][None, :, :]
    q = xe @ raw['wq'].T + raw['bq']
    k = xe @ raw['wk'].T + raw['bk']
    v = xe @ raw['wv'].T + raw['bv']

    def split(t):
        return jnp.transpose(t.reshape(B, L, H, hd), (0, 2, 1, 3))

    qh, kh, vh = split(q), split(k), split(v)
    s = jnp.einsum('bhld,bhmd->bhlm', qh, kh) / math.sqrt(hd)
    a = jax.nn.softmax(s, axis=-1)
    ctx = jnp.einsum('bhlm,bhmd->bhld', a, vh)
    ctx = jnp.transpose(ctx, (0, 2, 1, 3)).reshape(B, L, D)
    out = ctx @ raw['wo'].T + raw['bo']
    return out, a


# ----------------------------------------------------------------------------
# Demo
# ----------------------------------------------------------------------------

if __name__ == "__main__":
    B, L, D, H = 4, 16, 32, 8                      # batch, seq_len, d_model, n_heads

    key = jax.random.PRNGKey(0)
    k_x, k_p = jax.random.split(key)
    x = jax.random.normal(k_x, (B, L, D), jnp.float32)
    raw_params = init_raw_params(k_p, D)
    params = prepare_attention_params(raw_params, n_heads=H)

    fwd = jax.jit(functools.partial(temporal_attention_forward, n_heads=H))
    out, attn = fwd(params, x)
    jax.block_until_ready(out)
    jax.block_until_ready(attn)

    assert out.shape == (B, L, D), out.shape
    assert attn.shape == (B, H, L, L), attn.shape

    ref_out, ref_attn = temporal_attention_ref(raw_params, x, H)
    np.testing.assert_allclose(np.asarray(out), np.asarray(ref_out),
                               rtol=5e-2, atol=5e-2)
    np.testing.assert_allclose(np.asarray(attn), np.asarray(ref_attn),
                               rtol=5e-2, atol=5e-2)
    print("KERNEL_OK")
</pallas_src>

<mosaic_0001>
module attributes {stable_mosaic.version = 11 : i64} {
  func.func @_fused_temporal_attention_kernel(%arg0: i32, %arg1: memref<2x16x32xf32, #tpu.memory_space<vmem>>, %arg2: memref<16x32xf32, #tpu.memory_space<vmem>>, %arg3: memref<32x96xbf16, #tpu.memory_space<vmem>>, %arg4: memref<1x96xf32, #tpu.memory_space<vmem>>, %arg5: memref<32x32xbf16, #tpu.memory_space<vmem>>, %arg6: memref<1x32xf32, #tpu.memory_space<vmem>>, %arg7: memref<2x16x32xf32, #tpu.memory_space<vmem>>, %arg8: memref<2x8x256xf32, #tpu.memory_space<vmem>>) attributes {dimension_semantics = [#tpu.dimension_semantics<parallel>], iteration_bounds = array<i64: 2>, scalar_prefetch = 0 : i64, scratch_operands = 0 : i64, tpu.core_type = #tpu.core_type<tc>, window_params = [{transform_indices = @transform_0, window_bounds = array<i64: 2, 16, 32>}, {pipeline_mode = #tpu.pipeline_mode<synchronous>, transform_indices = @transform_1, window_bounds = array<i64: 16, 32>}, {pipeline_mode = #tpu.pipeline_mode<synchronous>, transform_indices = @transform_2, window_bounds = array<i64: 32, 96>}, {pipeline_mode = #tpu.pipeline_mode<synchronous>, transform_indices = @transform_3, window_bounds = array<i64: 1, 96>}, {pipeline_mode = #tpu.pipeline_mode<synchronous>, transform_indices = @transform_4, window_bounds = array<i64: 32, 32>}, {pipeline_mode = #tpu.pipeline_mode<synchronous>, transform_indices = @transform_5, window_bounds = array<i64: 1, 32>}, {transform_indices = @transform_6, window_bounds = array<i64: 2, 16, 32>}, {transform_indices = @transform_7, window_bounds = array<i64: 2, 8, 256>}]} {
    %c0 = arith.constant 0 : index
    %c0_0 = arith.constant 0 : index
    %c0_1 = arith.constant 0 : index
    %0 = vector.load %arg1[%c0, %c0_0, %c0_1] : memref<2x16x32xf32, #tpu.memory_space<vmem>>, vector<2x16x32xf32>
    %c0_2 = arith.constant 0 : index
    %c0_3 = arith.constant 0 : index
    %1 = vector.load %arg2[%c0_2, %c0_3] : memref<16x32xf32, #tpu.memory_space<vmem>>, vector<16x32xf32>
    %2 = vector.shape_cast %1 : vector<16x32xf32> to vector<1x16x32xf32>
    %3 = vector.broadcast %2 : vector<1x16x32xf32> to vector<2x16x32xf32>
    %4 = arith.addf %0, %3 : vector<2x16x32xf32>
    %5 = vector.shape_cast %4 : vector<2x16x32xf32> to vector<32x32xf32>
    %6 = arith.truncf %5 : vector<32x32xf32> to vector<32x32xbf16>
    %c0_4 = arith.constant 0 : index
    %c0_5 = arith.constant 0 : index
    %7 = vector.load %arg3[%c0_4, %c0_5] : memref<32x96xbf16, #tpu.memory_space<vmem>>, vector<32x96xbf16>
    %cst = arith.constant dense<0.000000e+00> : vector<32x96xf32>
    %8 = tpu.matmul %6, %7, %cst {dimension_numbers = #tpu.dot_dimension_numbers<[1], [0], [0], [1], [0, 0, 1, 1], [], []>} : vector<32x32xbf16>, vector<32x96xbf16>, vector<32x96xf32> -> vector<32x96xf32>
    %c0_6 = arith.constant 0 : index
    %c0_7 = arith.constant 0 : index
    %9 = vector.load %arg4[%c0_6, %c0_7] : memref<1x96xf32, #tpu.memory_space<vmem>>, vector<1x96xf32>
    %10 = vector.broadcast %9 : vector<1x96xf32> to vector<32x96xf32>
    %11 = arith.addf %8, %10 : vector<32x96xf32>
    %12 = vector.shape_cast %11 : vector<32x96xf32> to vector<2x16x96xf32>
    %13 = vector.extract_strided_slice %12 {offsets = [0, 0, 0], sizes = [2, 16, 32], strides = [1, 1, 1]} : vector<2x16x96xf32> to vector<2x16x32xf32>
    %14 = vector.extract_strided_slice %12 {offsets = [0, 0, 32], sizes = [2, 16, 32], strides = [1, 1, 1]} : vector<2x16x96xf32> to vector<2x16x32xf32>
    %15 = arith.truncf %14 : vector<2x16x32xf32> to vector<2x16x32xbf16>
    %16 = vector.extract_strided_slice %12 {offsets = [0, 0, 64], sizes = [2, 16, 32], strides = [1, 1, 1]} : vector<2x16x96xf32> to vector<2x16x32xf32>
    %17 = arith.truncf %16 : vector<2x16x32xf32> to vector<2x16x32xbf16>
    %18 = vector.extract_strided_slice %13 {offsets = [0, 0, 0], sizes = [2, 16, 4], strides = [1, 1, 1]} : vector<2x16x32xf32> to vector<2x16x4xf32>
    %19 = arith.truncf %18 : vector<2x16x4xf32> to vector<2x16x4xbf16>
    %20 = vector.extract_strided_slice %15 {offsets = [0, 0, 0], sizes = [2, 16, 4], strides = [1, 1, 1]} : vector<2x16x32xbf16> to vector<2x16x4xbf16>
    %21 = vector.extract_strided_slice %17 {offsets = [0, 0, 0], sizes = [2, 16, 4], strides = [1, 1, 1]} : vector<2x16x32xbf16> to vector<2x16x4xbf16>
    "tpu.trace_start"() <{level = 10 : i32, message = "bld,bmd->blm"}> : () -> ()
    %cst_8 = arith.constant dense<0.000000e+00> : vector<2x16x16xf32>
    %22 = tpu.matmul %19, %20, %cst_8 {dimension_numbers = #tpu.dot_dimension_numbers<[2], [2], [1], [1], [0, 0, 0, 1, 1, 1], [0], [0]>} : vector<2x16x4xbf16>, vector<2x16x4xbf16>, vector<2x16x16xf32> -> vector<2x16x16xf32>
    "tpu.trace_stop"() : () -> ()
    %cst_9 = arith.constant dense<0xFF800000> : vector<2x16xf32>
    %23 = vector.multi_reduction <maximumf>, %22, %cst_9 [2] : vector<2x16x16xf32> to vector<2x16xf32>
    %24 = vector.shape_cast %23 : vector<2x16xf32> to vector<2x16x1xf32>
    %25 = vector.broadcast %24 : vector<2x16x1xf32> to vector<2x16x16xf32>
    %26 = arith.subf %22, %25 : vector<2x16x16xf32>
    %27 = math.exp %26 : vector<2x16x16xf32>
    %cst_10 = arith.constant dense<0.000000e+00> : vector<2x16xf32>
    %28 = vector.multi_reduction <add>, %27, %cst_10 [2] : vector<2x16x16xf32> to vector<2x16xf32>
    %29 = vector.shape_cast %28 : vector<2x16xf32> to vector<2x16x1xf32>
    %30 = tpu.reciprocal %29 {approx = true} : vector<2x16x1xf32> -> vector<2x16x1xf32>
    %31 = vector.broadcast %30 : vector<2x16x1xf32> to vector<2x16x16xf32>
    %32 = arith.mulf %27, %31 : vector<2x16x16xf32>
    %33 = vector.shape_cast %32 : vector<2x16x16xf32> to vector<2x256xf32>
    %c0_11 = arith.constant 0 : index
    %c0_12 = arith.constant 0 : index
    %c0_13 = arith.constant 0 : index
    %34 = vector.load %arg8[%c0_11, %c0_12, %c0_13] : memref<2x8x256xf32, #tpu.memory_space<vmem>>, vector<2x1x256xf32>
    %35 = vector.shape_cast %34 : vector<2x1x256xf32> to vector<2x256xf32>
    %36 = vector.shape_cast %33 : vector<2x256xf32> to vector<2x1x256xf32>
    tpu.vector_store %arg8[%c0_11, %c0_12, %c0_13], %36 {strides = array<i32>} : memref<2x8x256xf32, #tpu.memory_space<vmem>>, vector<2x1x256xf32>,
    %37 = arith.truncf %32 : vector<2x16x16xf32> to vector<2x16x16xbf16>
    "tpu.trace_start"() <{level = 10 : i32, message = "blm,bmd->bld"}> : () -> ()
    %cst_14 = arith.constant dense<0.000000e+00> : vector<2x16x4xf32>
    %38 = tpu.matmul %37, %21, %cst_14 {dimension_numbers = #tpu.dot_dimension_numbers<[2], [1], [1], [2], [0, 0, 0, 1, 1, 2], [0], [0]>} : vector<2x16x16xbf16>, vector<2x16x4xbf16>, vector<2x16x4xf32> -> vector<2x16x4xf32>
    "tpu.trace_stop"() : () -> ()
    %39 = vector.extract_strided_slice %13 {offsets = [0, 0, 4], sizes = [2, 16, 4], strides = [1, 1, 1]} : vector<2x16x32xf32> to vector<2x16x4xf32>
    %40 = arith.truncf %39 : vector<2x16x4xf32> to vector<2x16x4xbf16>
    %41 = vector.extract_strided_slice %15 {offsets = [0, 0, 4], sizes = [2, 16, 4], strides = [1, 1, 1]} : vector<2x16x32xbf16> to vector<2x16x4xbf16>
    %42 = vector.extract_strided_slice %17 {offsets = [0, 0, 4], sizes = [2, 16, 4], strides = [1, 1, 1]} : vector<2x16x32xbf16> to vector<2x16x4xbf16>
    "tpu.trace_start"() <{level = 10 : i32, message = "bld,bmd->blm"}> : () -> ()
    %cst_15 = arith.constant dense<0.000000e+00> : vector<2x16x16xf32>
    %43 = tpu.matmul %40, %41, %cst_15 {dimension_numbers = #tpu.dot_dimension_numbers<[2], [2], [1], [1], [0, 0, 0, 1, 1, 1], [0], [0]>} : vector<2x16x4xbf16>, vector<2x16x4xbf16>, vector<2x16x16xf32> -> vector<2x16x16xf32>
    "tpu.trace_stop"() : () -> ()
    %cst_16 = arith.constant dense<0xFF800000> : vector<2x16xf32>
    %44 = vector.multi_reduction <maximumf>, %43, %cst_16 [2] : vector<2x16x16xf32> to vector<2x16xf32>
    %45 = vector.shape_cast %44 : vector<2x16xf32> to vector<2x16x1xf32>
    %46 = vector.broadcast %45 : vector<2x16x1xf32> to vector<2x16x16xf32>
    %47 = arith.subf %43, %46 : vector<2x16x16xf32>
    %48 = math.exp %47 : vector<2x16x16xf32>
    %cst_17 = arith.constant dense<0.000000e+00> : vector<2x16xf32>
    %49 = vector.multi_reduction <add>, %48, %cst_17 [2] : vector<2x16x16xf32> to vector<2x16xf32>
    %50 = vector.shape_cast %49 : vector<2x16xf32> to vector<2x16x1xf32>
    %51 = tpu.reciprocal %50 {approx = true} : vector<2x16x1xf32> -> vector<2x16x1xf32>
    %52 = vector.broadcast %51 : vector<2x16x1xf32> to vector<2x16x16xf32>
    %53 = arith.mulf %48, %52 : vector<2x16x16xf32>
    %54 = vector.shape_cast %53 : vector<2x16x16xf32> to vector<2x256xf32>
    %c0_18 = arith.constant 0 : index
    %c1 = arith.constant 1 : index
    %c0_19 = arith.constant 0 : index
    %55 = vector.load %arg8[%c0_18, %c1, %c0_19] : memref<2x8x256xf32, #tpu.memory_space<vmem>>, vector<2x1x256xf32>
    %56 = vector.shape_cast %55 : vector<2x1x256xf32> to vector<2x256xf32>
    %57 = vector.shape_cast %54 : vector<2x256xf32> to vector<2x1x256xf32>
    tpu.vector_store %arg8[%c0_18, %c1, %c0_19], %57 {strides = array<i32>} : memref<2x8x256xf32, #tpu.memory_space<vmem>>, vector<2x1x256xf32>,
    %58 = arith.truncf %53 : vector<2x16x16xf32> to vector<2x16x16xbf16>
    "tpu.trace_start"() <{level = 10 : i32, message = "blm,bmd->bld"}> : () -> ()
    %cst_20 = arith.constant dense<0.000000e+00> : vector<2x16x4xf32>
    %59 = tpu.matmul %58, %42, %cst_20 {dimension_numbers = #tpu.dot_dimension_numbers<[2], [1], [1], [2], [0, 0, 0, 1, 1, 2], [0], [0]>} : vector<2x16x16xbf16>, vector<2x16x4xbf16>, vector<2x16x4xf32> -> vector<2x16x4xf32>
    "tpu.trace_stop"() : () -> ()
    %60 = vector.extract_strided_slice %13 {offsets = [0, 0, 8], sizes = [2, 16, 4], strides = [1, 1, 1]} : vector<2x16x32xf32> to vector<2x16x4xf32>
    %61 = arith.truncf %60 : vector<2x16x4xf32> to vector<2x16x4xbf16>
    %62 = vector.extract_strided_slice %15 {offsets = [0, 0, 8], sizes = [2, 16, 4], strides = [1, 1, 1]} : vector<2x16x32xbf16> to vector<2x16x4xbf16>
    %63 = vector.extract_strided_slice %17 {offsets = [0, 0, 8], sizes = [2, 16, 4], strides = [1, 1, 1]} : vector<2x16x32xbf16> to vector<2x16x4xbf16>
    "tpu.trace_start"() <{level = 10 : i32, message = "bld,bmd->blm"}> : () -> ()
    %cst_21 = arith.constant dense<0.000000e+00> : vector<2x16x16xf32>
    %64 = tpu.matmul %61, %62, %cst_21 {dimension_numbers = #tpu.dot_dimension_numbers<[2], [2], [1], [1], [0, 0, 0, 1, 1, 1], [0], [0]>} : vector<2x16x4xbf16>, vector<2x16x4xbf16>, vector<2x16x16xf32> -> vector<2x16x16xf32>
    "tpu.trace_stop"() : () -> ()
    %cst_22 = arith.constant dense<0xFF800000> : vector<2x16xf32>
    %65 = vector.multi_reduction <maximumf>, %64, %cst_22 [2] : vector<2x16x16xf32> to vector<2x16xf32>
    %66 = vector.shape_cast %65 : vector<2x16xf32> to vector<2x16x1xf32>
    %67 = vector.broadcast %66 : vector<2x16x1xf32> to vector<2x16x16xf32>
    %68 = arith.subf %64, %67 : vector<2x16x16xf32>
    %69 = math.exp %68 : vector<2x16x16xf32>
    %cst_23 = arith.constant dense<0.000000e+00> : vector<2x16xf32>
    %70 = vector.multi_reduction <add>, %69, %cst_23 [2] : vector<2x16x16xf32> to vector<2x16xf32>
    %71 = vector.shape_cast %70 : vector<2x16xf32> to vector<2x16x1xf32>
    %72 = tpu.reciprocal %71 {approx = true} : vector<2x16x1xf32> -> vector<2x16x1xf32>
    %73 = vector.broadcast %72 : vector<2x16x1xf32> to vector<2x16x16xf32>
    %74 = arith.mulf %69, %73 : vector<2x16x16xf32>
    %75 = vector.shape_cast %74 : vector<2x16x16xf32> to vector<2x256xf32>
    %c0_24 = arith.constant 0 : index
    %c2 = arith.constant 2 : index
    %c0_25 = arith.constant 0 : index
    %76 = vector.load %arg8[%c0_24, %c2, %c0_25] : memref<2x8x256xf32, #tpu.memory_space<vmem>>, vector<2x1x256xf32>
    %77 = vector.shape_cast %76 : vector<2x1x256xf32> to vector<2x256xf32>
    %78 = vector.shape_cast %75 : vector<2x256xf32> to vector<2x1x256xf32>
    tpu.vector_store %arg8[%c0_24, %c2, %c0_25], %78 {strides = array<i32>} : memref<2x8x256xf32, #tpu.memory_space<vmem>>, vector<2x1x256xf32>,
    %79 = arith.truncf %74 : vector<2x16x16xf32> to vector<2x16x16xbf16>
    "tpu.trace_start"() <{level = 10 : i32, message = "blm,bmd->bld"}> : () -> ()
    %cst_26 = arith.constant dense<0.000000e+00> : vector<2x16x4xf32>
    %80 = tpu.matmul %79, %63, %cst_26 {dimension_numbers = #tpu.dot_dimension_numbers<[2], [1], [1], [2], [0, 0, 0, 1, 1, 2], [0], [0]>} : vector<2x16x16xbf16>, vector<2x16x4xbf16>, vector<2x16x4xf32> -> vector<2x16x4xf32>
    "tpu.trace_stop"() : () -> ()
    %81 = vector.extract_strided_slice %13 {offsets = [0, 0, 12], sizes = [2, 16, 4], strides = [1, 1, 1]} : vector<2x16x32xf32> to vector<2x16x4xf32>
    %82 = arith.truncf %81 : vector<2x16x4xf32> to vector<2x16x4xbf16>
    %83 = vector.extract_strided_slice %15 {offsets = [0, 0, 12], sizes = [2, 16, 4], strides = [1, 1, 1]} : vector<2x16x32xbf16> to vector<2x16x4xbf16>
    %84 = vector.extract_strided_slice %17 {offsets = [0, 0, 12], sizes = [2, 16, 4], strides = [1, 1, 1]} : vector<2x16x32xbf16> to vector<2x16x4xbf16>
    "tpu.trace_start"() <{level = 10 : i32, message = "bld,bmd->blm"}> : () -> ()
    %cst_27 = arith.constant dense<0.000000e+00> : vector<2x16x16xf32>
    %85 = tpu.matmul %82, %83, %cst_27 {dimension_numbers = #tpu.dot_dimension_numbers<[2], [2], [1], [1], [0, 0, 0, 1, 1, 1], [0], [0]>} : vector<2x16x4xbf16>, vector<2x16x4xbf16>, vector<2x16x16xf32> -> vector<2x16x16xf32>
    "tpu.trace_stop"() : () -> ()
    %cst_28 = arith.constant dense<0xFF800000> : vector<2x16xf32>
    %86 = vector.multi_reduction <maximumf>, %85, %cst_28 [2] : vector<2x16x16xf32> to vector<2x16xf32>
    %87 = vector.shape_cast %86 : vector<2x16xf32> to vector<2x16x1xf32>
    %88 = vector.broadcast %87 : vector<2x16x1xf32> to vector<2x16x16xf32>
    %89 = arith.subf %85, %88 : vector<2x16x16xf32>
    %90 = math.exp %89 : vector<2x16x16xf32>
    %cst_29 = arith.constant dense<0.000000e+00> : vector<2x16xf32>
    %91 = vector.multi_reduction <add>, %90, %cst_29 [2] : vector<2x16x16xf32> to vector<2x16xf32>
    %92 = vector.shape_cast %91 : vector<2x16xf32> to vector<2x16x1xf32>
    %93 = tpu.reciprocal %92 {approx = true} : vector<2x16x1xf32> -> vector<2x16x1xf32>
    %94 = vector.broadcast %93 : vector<2x16x1xf32> to vector<2x16x16xf32>
    %95 = arith.mulf %90, %94 : vector<2x16x16xf32>
    %96 = vector.shape_cast %95 : vector<2x16x16xf32> to vector<2x256xf32>
    %c0_30 = arith.constant 0 : index
    %c3 = arith.constant 3 : index
    %c0_31 = arith.constant 0 : index
    %97 = vector.load %arg8[%c0_30, %c3, %c0_31] : memref<2x8x256xf32, #tpu.memory_space<vmem>>, vector<2x1x256xf32>
    %98 = vector.shape_cast %97 : vector<2x1x256xf32> to vector<2x256xf32>
    %99 = vector.shape_cast %96 : vector<2x256xf32> to vector<2x1x256xf32>
    tpu.vector_store %arg8[%c0_30, %c3, %c0_31], %99 {strides = array<i32>} : memref<2x8x256xf32, #tpu.memory_space<vmem>>, vector<2x1x256xf32>,
    %100 = arith.truncf %95 : vector<2x16x16xf32> to vector<2x16x16xbf16>
    "tpu.trace_start"() <{level = 10 : i32, message = "blm,bmd->bld"}> : () -> ()
    %cst_32 = arith.constant dense<0.000000e+00> : vector<2x16x4xf32>
    %101 = tpu.matmul %100, %84, %cst_32 {dimension_numbers = #tpu.dot_dimension_numbers<[2], [1], [1], [2], [0, 0, 0, 1, 1, 2], [0], [0]>} : vector<2x16x16xbf16>, vector<2x16x4xbf16>, vector<2x16x4xf32> -> vector<2x16x4xf32>
    "tpu.trace_stop"() : () -> ()
    %102 = vector.extract_strided_slice %13 {offsets = [0, 0, 16], sizes = [2, 16, 4], strides = [1, 1, 1]} : vector<2x16x32xf32> to vector<2x16x4xf32>
    %103 = arith.truncf %102 : vector<2x16x4xf32> to vector<2x16x4xbf16>
    %104 = vector.extract_strided_slice %15 {offsets = [0, 0, 16], sizes = [2, 16, 4], strides = [1, 1, 1]} : vector<2x16x32xbf16> to vector<2x16x4xbf16>
    %105 = vector.extract_strided_slice %17 {offsets = [0, 0, 16], sizes = [2, 16, 4], strides = [1, 1, 1]} : vector<2x16x32xbf16> to vector<2x16x4xbf16>
    "tpu.trace_start"() <{level = 10 : i32, message = "bld,bmd->blm"}> : () -> ()
    %cst_33 = arith.constant dense<0.000000e+00> : vector<2x16x16xf32>
    %106 = tpu.matmul %103, %104, %cst_33 {dimension_numbers = #tpu.dot_dimension_numbers<[2], [2], [1], [1], [0, 0, 0, 1, 1, 1], [0], [0]>} : vector<2x16x4xbf16>, vector<2x16x4xbf16>, vector<2x16x16xf32> -> vector<2x16x16xf32>
    "tpu.trace_stop"() : () -> ()
    %cst_34 = arith.constant dense<0xFF800000> : vector<2x16xf32>
    %107 = vector.multi_reduction <maximumf>, %106, %cst_34 [2] : vector<2x16x16xf32> to vector<2x16xf32>
    %108 = vector.shape_cast %107 : vector<2x16xf32> to vector<2x16x1xf32>
    %109 = vector.broadcast %108 : vector<2x16x1xf32> to vector<2x16x16xf32>
    %110 = arith.subf %106, %109 : vector<2x16x16xf32>
    %111 = math.exp %110 : vector<2x16x16xf32>
    %cst_35 = arith.constant dense<0.000000e+00> : vector<2x16xf32>
    %112 = vector.multi_reduction <add>, %111, %cst_35 [2] : vector<2x16x16xf32> to vector<2x16xf32>
    %113 = vector.shape_cast %112 : vector<2x16xf32> to vector<2x16x1xf32>
    %114 = tpu.reciprocal %113 {approx = true} : vector<2x16x1xf32> -> vector<2x16x1xf32>
    %115 = vector.broadcast %114 : vector<2x16x1xf32> to vector<2x16x16xf32>
    %116 = arith.mulf %111, %115 : vector<2x16x16xf32>
    %117 = vector.shape_cast %116 : vector<2x16x16xf32> to vector<2x256xf32>
    %c0_36 = arith.constant 0 : index
    %c4 = arith.constant 4 : index
    %c0_37 = arith.constant 0 : index
    %118 = vector.load %arg8[%c0_36, %c4, %c0_37] : memref<2x8x256xf32, #tpu.memory_space<vmem>>, vector<2x1x256xf32>
    %119 = vector.shape_cast %118 : vector<2x1x256xf32> to vector<2x256xf32>
    %120 = vector.shape_cast %117 : vector<2x256xf32> to vector<2x1x256xf32>
    tpu.vector_store %arg8[%c0_36, %c4, %c0_37], %120 {strides = array<i32>} : memref<2x8x256xf32, #tpu.memory_space<vmem>>, vector<2x1x256xf32>,
    %121 = arith.truncf %116 : vector<2x16x16xf32> to vector<2x16x16xbf16>
    "tpu.trace_start"() <{level = 10 : i32, message = "blm,bmd->bld"}> : () -> ()
    %cst_38 = arith.constant dense<0.000000e+00> : vector<2x16x4xf32>
    %122 = tpu.matmul %121, %105, %cst_38 {dimension_numbers = #tpu.dot_dimension_numbers<[2], [1], [1], [2], [0, 0, 0, 1, 1, 2], [0], [0]>} : vector<2x16x16xbf16>, vector<2x16x4xbf16>, vector<2x16x4xf32> -> vector<2x16x4xf32>
    "tpu.trace_stop"() : () -> ()
    %123 = vector.extract_strided_slice %13 {offsets = [0, 0, 20], sizes = [2, 16, 4], strides = [1, 1, 1]} : vector<2x16x32xf32> to vector<2x16x4xf32>
    %124 = arith.truncf %123 : vector<2x16x4xf32> to vector<2x16x4xbf16>
    %125 = vector.extract_strided_slice %15 {offsets = [0, 0, 20], sizes = [2, 16, 4], strides = [1, 1, 1]} : vector<2x16x32xbf16> to vector<2x16x4xbf16>
    %126 = vector.extract_strided_slice %17 {offsets = [0, 0, 20], sizes = [2, 16, 4], strides = [1, 1, 1]} : vector<2x16x32xbf16> to vector<2x16x4xbf16>
    "tpu.trace_start"() <{level = 10 : i32, message = "bld,bmd->blm"}> : () -> ()
    %cst_39 = arith.constant dense<0.000000e+00> : vector<2x16x16xf32>
    %127 = tpu.matmul %124, %125, %cst_39 {dimension_numbers = #tpu.dot_dimension_numbers<[2], [2], [1], [1], [0, 0, 0, 1, 1, 1], [0], [0]>} : vector<2x16x4xbf16>, vector<2x16x4xbf16>, vector<2x16x16xf32> -> vector<2x16x16xf32>
    "tpu.trace_stop"() : () -> ()
    %cst_40 = arith.constant dense<0xFF800000> : vector<2x16xf32>
    %128 = vector.multi_reduction <maximumf>, %127, %cst_40 [2] : vector<2x16x16xf32> to vector<2x16xf32>
    %129 = vector.shape_cast %128 : vector<2x16xf32> to vector<2x16x1xf32>
    %130 = vector.broadcast %129 : vector<2x16x1xf32> to vector<2x16x16xf32>
    %131 = arith.subf %127, %130 : vector<2x16x16xf32>
    %132 = math.exp %131 : vector<2x16x16xf32>
    %cst_41 = arith.constant dense<0.000000e+00> : vector<2x16xf32>
    %133 = vector.multi_reduction <add>, %132, %cst_41 [2] : vector<2x16x16xf32> to vector<2x16xf32>
    %134 = vector.shape_cast %133 : vector<2x16xf32> to vector<2x16x1xf32>
    %135 = tpu.reciprocal %134 {approx = true} : vector<2x16x1xf32> -> vector<2x16x1xf32>
    %136 = vector.broadcast %135 : vector<2x16x1xf32> to vector<2x16x16xf32>
    %137 = arith.mulf %132, %136 : vector<2x16x16xf32>
    %138 = vector.shape_cast %137 : vector<2x16x16xf32> to vector<2x256xf32>
    %c0_42 = arith.constant 0 : index
    %c5 = arith.constant 5 : index
    %c0_43 = arith.constant 0 : index
    %139 = vector.load %arg8[%c0_42, %c5, %c0_43] : memref<2x8x256xf32, #tpu.memory_space<vmem>>, vector<2x1x256xf32>
    %140 = vector.shape_cast %139 : vector<2x1x256xf32> to vector<2x256xf32>
    %141 = vector.shape_cast %138 : vector<2x256xf32> to vector<2x1x256xf32>
    tpu.vector_store %arg8[%c0_42, %c5, %c0_43], %141 {strides = array<i32>} : memref<2x8x256xf32, #tpu.memory_space<vmem>>, vector<2x1x256xf32>,
    %142 = arith.truncf %137 : vector<2x16x16xf32> to vector<2x16x16xbf16>
    "tpu.trace_start"() <{level = 10 : i32, message = "blm,bmd->bld"}> : () -> ()
    %cst_44 = arith.constant dense<0.000000e+00> : vector<2x16x4xf32>
    %143 = tpu.matmul %142, %126, %cst_44 {dimension_numbers = #tpu.dot_dimension_numbers<[2], [1], [1], [2], [0, 0, 0, 1, 1, 2], [0], [0]>} : vector<2x16x16xbf16>, vector<2x16x4xbf16>, vector<2x16x4xf32> -> vector<2x16x4xf32>
    "tpu.trace_stop"() : () -> ()
    %144 = vector.extract_strided_slice %13 {offsets = [0, 0, 24], sizes = [2, 16, 4], strides = [1, 1, 1]} : vector<2x16x32xf32> to vector<2x16x4xf32>
    %145 = arith.truncf %144 : vector<2x16x4xf32> to vector<2x16x4xbf16>
    %146 = vector.extract_strided_slice %15 {offsets = [0, 0, 24], sizes = [2, 16, 4], strides = [1, 1, 1]} : vector<2x16x32xbf16> to vector<2x16x4xbf16>
    %147 = vector.extract_strided_slice %17 {offsets = [0, 0, 24], sizes = [2, 16, 4], strides = [1, 1, 1]} : vector<2x16x32xbf16> to vector<2x16x4xbf16>
    "tpu.trace_start"() <{level = 10 : i32, message = "bld,bmd->blm"}> : () -> ()
    %cst_45 = arith.constant dense<0.000000e+00> : vector<2x16x16xf32>
    %148 = tpu.matmul %145, %146, %cst_45 {dimension_numbers = #tpu.dot_dimension_numbers<[2], [2], [1], [1], [0, 0, 0, 1, 1, 1], [0], [0]>} : vector<2x16x4xbf16>, vector<2x16x4xbf16>, vector<2x16x16xf32> -> vector<2x16x16xf32>
    "tpu.trace_stop"() : () -> ()
    %cst_46 = arith.constant dense<0xFF800000> : vector<2x16xf32>
    %149 = vector.multi_reduction <maximumf>, %148, %cst_46 [2] : vector<2x16x16xf32> to vector<2x16xf32>
    %150 = vector.shape_cast %149 : vector<2x16xf32> to vector<2x16x1xf32>
    %151 = vector.broadcast %150 : vector<2x16x1xf32> to vector<2x16x16xf32>
    %152 = arith.subf %148, %151 : vector<2x16x16xf32>
    %153 = math.exp %152 : vector<2x16x16xf32>
    %cst_47 = arith.constant dense<0.000000e+00> : vector<2x16xf32>
    %154 = vector.multi_reduction <add>, %153, %cst_47 [2] : vector<2x16x16xf32> to vector<2x16xf32>
    %155 = vector.shape_cast %154 : vector<2x16xf32> to vector<2x16x1xf32>
    %156 = tpu.reciprocal %155 {approx = true} : vector<2x16x1xf32> -> vector<2x16x1xf32>
    %157 = vector.broadcast %156 : vector<2x16x1xf32> to vector<2x16x16xf32>
    %158 = arith.mulf %153, %157 : vector<2x16x16xf32>
    %159 = vector.shape_cast %158 : vector<2x16x16xf32> to vector<2x256xf32>
    %c0_48 = arith.constant 0 : index
    %c6 = arith.constant 6 : index
    %c0_49 = arith.constant 0 : index
    %160 = vector.load %arg8[%c0_48, %c6, %c0_49] : memref<2x8x256xf32, #tpu.memory_space<vmem>>, vector<2x1x256xf32>
    %161 = vector.shape_cast %160 : vector<2x1x256xf32> to vector<2x256xf32>
    %162 = vector.shape_cast %159 : vector<2x256xf32> to vector<2x1x256xf32>
    tpu.vector_store %arg8[%c0_48, %c6, %c0_49], %162 {strides = array<i32>} : memref<2x8x256xf32, #tpu.memory_space<vmem>>, vector<2x1x256xf32>,
    %163 = arith.truncf %158 : vector<2x16x16xf32> to vector<2x16x16xbf16>
    "tpu.trace_start"() <{level = 10 : i32, message = "blm,bmd->bld"}> : () -> ()
    %cst_50 = arith.constant dense<0.000000e+00> : vector<2x16x4xf32>
    %164 = tpu.matmul %163, %147, %cst_50 {dimension_numbers = #tpu.dot_dimension_numbers<[2], [1], [1], [2], [0, 0, 0, 1, 1, 2], [0], [0]>} : vector<2x16x16xbf16>, vector<2x16x4xbf16>, vector<2x16x4xf32> -> vector<2x16x4xf32>
    "tpu.trace_stop"() : () -> ()
    %165 = vector.extract_strided_slice %13 {offsets = [0, 0, 28], sizes = [2, 16, 4], strides = [1, 1, 1]} : vector<2x16x32xf32> to vector<2x16x4xf32>
    %166 = arith.truncf %165 : vector<2x16x4xf32> to vector<2x16x4xbf16>
    %167 = vector.extract_strided_slice %15 {offsets = [0, 0, 28], sizes = [2, 16, 4], strides = [1, 1, 1]} : vector<2x16x32xbf16> to vector<2x16x4xbf16>
    %168 = vector.extract_strided_slice %17 {offsets = [0, 0, 28], sizes = [2, 16, 4], strides = [1, 1, 1]} : vector<2x16x32xbf16> to vector<2x16x4xbf16>
    "tpu.trace_start"() <{level = 10 : i32, message = "bld,bmd->blm"}> : () -> ()
    %cst_51 = arith.constant dense<0.000000e+00> : vector<2x16x16xf32>
    %169 = tpu.matmul %166, %167, %cst_51 {dimension_numbers = #tpu.dot_dimension_numbers<[2], [2], [1], [1], [0, 0, 0, 1, 1, 1], [0], [0]>} : vector<2x16x4xbf16>, vector<2x16x4xbf16>, vector<2x16x16xf32> -> vector<2x16x16xf32>
    "tpu.trace_stop"() : () -> ()
    %cst_52 = arith.constant dense<0xFF800000> : vector<2x16xf32>
    %170 = vector.multi_reduction <maximumf>, %169, %cst_52 [2] : vector<2x16x16xf32> to vector<2x16xf32>
    %171 = vector.shape_cast %170 : vector<2x16xf32> to vector<2x16x1xf32>
    %172 = vector.broadcast %171 : vector<2x16x1xf32> to vector<2x16x16xf32>
    %173 = arith.subf %169, %172 : vector<2x16x16xf32>
    %174 = math.exp %173 : vector<2x16x16xf32>
    %cst_53 = arith.constant dense<0.000000e+00> : vector<2x16xf32>
    %175 = vector.multi_reduction <add>, %174, %cst_53 [2] : vector<2x16x16xf32> to vector<2x16xf32>
    %176 = vector.shape_cast %175 : vector<2x16xf32> to vector<2x16x1xf32>
    %177 = tpu.reciprocal %176 {approx = true} : vector<2x16x1xf32> -> vector<2x16x1xf32>
    %178 = vector.broadcast %177 : vector<2x16x1xf32> to vector<2x16x16xf32>
    %179 = arith.mulf %174, %178 : vector<2x16x16xf32>
    %180 = vector.shape_cast %179 : vector<2x16x16xf32> to vector<2x256xf32>
    %c0_54 = arith.constant 0 : index
    %c7 = arith.constant 7 : index
    %c0_55 = arith.constant 0 : index
    %181 = vector.load %arg8[%c0_54, %c7, %c0_55] : memref<2x8x256xf32, #tpu.memory_space<vmem>>, vector<2x1x256xf32>
    %182 = vector.shape_cast %181 : vector<2x1x256xf32> to vector<2x256xf32>
    %183 = vector.shape_cast %180 : vector<2x256xf32> to vector<2x1x256xf32>
    tpu.vector_store %arg8[%c0_54, %c7, %c0_55], %183 {strides = array<i32>} : memref<2x8x256xf32, #tpu.memory_space<vmem>>, vector<2x1x256xf32>,
    %184 = arith.truncf %179 : vector<2x16x16xf32> to vector<2x16x16xbf16>
    "tpu.trace_start"() <{level = 10 : i32, message = "blm,bmd->bld"}> : () -> ()
    %cst_56 = arith.constant dense<0.000000e+00> : vector<2x16x4xf32>
    %185 = tpu.matmul %184, %168, %cst_56 {dimension_numbers = #tpu.dot_dimension_numbers<[2], [1], [1], [2], [0, 0, 0, 1, 1, 2], [0], [0]>} : vector<2x16x16xbf16>, vector<2x16x4xbf16>, vector<2x16x4xf32> -> vector<2x16x4xf32>
    "tpu.trace_stop"() : () -> ()
    %186 = tpu.concatenate %38, %59, %80, %101, %122, %143, %164, %185 in 2 : vector<2x16x4xf32>, vector<2x16x4xf32>, vector<2x16x4xf32>, vector<2x16x4xf32>, vector<2x16x4xf32>, vector<2x16x4xf32>, vector<2x16x4xf32>, vector<2x16x4xf32> -> vector<2x16x32xf32>
    %187 = vector.shape_cast %186 : vector<2x16x32xf32> to vector<32x32xf32>
    %188 = arith.truncf %187 : vector<32x32xf32> to vector<32x32xbf16>
    %c0_57 = arith.constant 0 : index
    %c0_58 = arith.constant 0 : index
    %189 = vector.load %arg5[%c0_57, %c0_58] : memref<32x32xbf16, #tpu.memory_space<vmem>>, vector<32x32xbf16>
    %cst_59 = arith.constant dense<0.000000e+00> : vector<32x32xf32>
    %190 = tpu.matmul %188, %189, %cst_59 {dimension_numbers = #tpu.dot_dimension_numbers<[1], [0], [0], [1], [0, 0, 1, 1], [], []>} : vector<32x32xbf16>, vector<32x32xbf16>, vector<32x32xf32> -> vector<32x32xf32>
    %c0_60 = arith.constant 0 : index
    %c0_61 = arith.constant 0 : index
    %191 = vector.load %arg6[%c0_60, %c0_61] : memref<1x32xf32, #tpu.memory_space<vmem>>, vector<1x32xf32>
    %192 = vector.broadcast %191 : vector<1x32xf32> to vector<32x32xf32>
    %193 = arith.addf %190, %192 : vector<32x32xf32>
    %194 = vector.shape_cast %193 : vector<32x32xf32> to vector<2x16x32xf32>
    %c0_62 = arith.constant 0 : index
    %c0_63 = arith.constant 0 : index
    %c0_64 = arith.constant 0 : index
    %195 = vector.load %arg7[%c0_62, %c0_63, %c0_64] : memref<2x16x32xf32, #tpu.memory_space<vmem>>, vector<2x16x32xf32>
    tpu.vector_store %arg7[%c0_62, %c0_63, %c0_64], %194 {strides = array<i32>} : memref<2x16x32xf32, #tpu.memory_space<vmem>>, vector<2x16x32xf32>,
    return
  }
  func.func @transform_0(%arg0: i32) -> (i32, i32, i32) {
    %c0_i32 = arith.constant 0 : i32
    %c0_i32_0 = arith.constant 0 : i32
    %c0_i32_1 = arith.constant 0 : i32
    return %arg0, %c0_i32, %c0_i32_0 : i32, i32, i32
  }
  func.func @transform_1(%arg0: i32) -> (i32, i32) {
    %c0_i32 = arith.constant 0 : i32
    %c0_i32_0 = arith.constant 0 : i32
    %c0_i32_1 = arith.constant 0 : i32
    return %c0_i32, %c0_i32_0 : i32, i32
  }
  func.func @transform_2(%arg0: i32) -> (i32, i32) {
    %c0_i32 = arith.constant 0 : i32
    %c0_i32_0 = arith.constant 0 : i32
    %c0_i32_1 = arith.constant 0 : i32
    return %c0_i32, %c0_i32_0 : i32, i32
  }
  func.func @transform_3(%arg0: i32) -> (i32, i32) {
    %c0_i32 = arith.constant 0 : i32
    %c0_i32_0 = arith.constant 0 : i32
    %c0_i32_1 = arith.constant 0 : i32
    return %c0_i32, %c0_i32_0 : i32, i32
  }
  func.func @transform_4(%arg0: i32) -> (i32, i32) {
    %c0_i32 = arith.constant 0 : i32
    %c0_i32_0 = arith.constant 0 : i32
    %c0_i32_1 = arith.constant 0 : i32
    return %c0_i32, %c0_i32_0 : i32, i32
  }
  func.func @transform_5(%arg0: i32) -> (i32, i32) {
    %c0_i32 = arith.constant 0 : i32
    %c0_i32_0 = arith.constant 0 : i32
    %c0_i32_1 = arith.constant 0 : i32
    return %c0_i32, %c0_i32_0 : i32, i32
  }
  func.func @transform_6(%arg0: i32) -> (i32, i32, i32) {
    %c0_i32 = arith.constant 0 : i32
    %c0_i32_0 = arith.constant 0 : i32
    %c0_i32_1 = arith.constant 0 : i32
    return %arg0, %c0_i32, %c0_i32_0 : i32, i32, i32
  }
  func.func @transform_7(%arg0: i32) -> (i32, i32, i32) {
    %c0_i32 = arith.constant 0 : i32
    %c0_i32_0 = arith.constant 0 : i32
    %c0_i32_1 = arith.constant 0 : i32
    return %arg0, %c0_i32, %c0_i32_0 : i32, i32, i32
  }
}

</mosaic_0001>

<llo_original>
// kernel: temporal_attention_forward.1
$region0: #{temporal_attention_forward.1}
  #allocation0 [shape = 'u32[]', space=smem, size = 0x4, offset = 0x4, fixed_abs, tag = 'smem constant byte address 0x4 - core index']
  #allocation1 [shape = 'u32[144,128]{1,0:T(1,128)}', space=vmem, size = 0x12000, scoped, tag = 'internal scratch']
  %s0 = inlined_call_operand.vmem [shape: f32[4,16,32], index: 0, kind: input, shape index: {}]
  %s1 = inlined_call_operand.vmem [shape: f32[16,32], index: 1, kind: input, shape index: {}]
  %s2 = inlined_call_operand.vmem [shape: bf16[32,96], index: 2, kind: input, shape index: {}]
  %s3 = inlined_call_operand.vmem [shape: f32[1,96], index: 3, kind: input, shape index: {}]
  %s4 = inlined_call_operand.hbm [shape: bf16[32,32], index: 4, kind: input, shape index: {}]
  %s5 = inlined_call_operand.hbm [shape: f32[1,32], index: 5, kind: input, shape index: {}]
  %s6 = inlined_call_operand.hbm [shape: f32[4,16,32], index: 6, kind: output, shape index: {0}]
  %s7 = inlined_call_operand.vmem [shape: f32[4,8,256], index: 7, kind: output, shape index: {1}]
  %8 = xla_tuple %s6, %s7
  %s9 = sld [smem:[#allocation0]]
  $region73: #{temporal_attention_forward.1} parent=0
    _
  %s11 = ssub.s32 1, %s9
  %s12 = scalar_select 0, %s11, %s9
  $region1: #{temporal_attention_forward.1} parent=0
    #allocation2 [shape = 'u8[8192]{0}', space=vmem, size = 0x2000, scoped, tag = 'input window, operand 4, single buffered']
    #allocation3 [shape = 's32[2]{0}', space=sflag, size = 0x8, scoped, tag = 'scoped memory for temporal_attention_forward.1']
    #allocation4 [shape = 's32[2]{0}', space=sflag, size = 0x8, scoped, tag = 'scoped memory for temporal_attention_forward.1']
    #allocation5 [shape = 'u8[512]{0}', space=vmem, size = 0x400, scoped, tag = 'input window, operand 5, single buffered']
    #allocation6 [shape = 's32[1]{0}', space=sflag, size = 0x4, scoped, tag = 'scoped memory for temporal_attention_forward.1']
    #allocation7 [shape = 'u8[32768]{0}', space=vmem, size = 0x8000, scoped, tag = 'output window, operand 0']
    %13 = vsyncpa [#allocation3], 0
    %14 = vsyncpa [#allocation6], 0
    %15 = vsyncpa [#allocation4], 0
    %s16 = scalar_lea.sflag [#allocation4], 1
    %17 = vsyncpa %s16, 0
    loop: start=0, step=1, limit=4
    $region2: #{temporal_attention_forward.1} parent=1 // loop_pre_header
      _
    $region3: #{temporal_attention_forward.1} parent=1 // loop_header
      %s19 = sphi 0, %s23
      %p20 = scmp.ge.s32.totalorder %s19, 4
      %s29 = sphi 0, %s31
      %s32 = sphi 0, %s29
      %s33 = sphi 0, %s32
      %s49 = sphi 0, %s33
      %s53 = sphi 0, %s53
      %s55 = sphi 0, %s53
      %s56 = sphi 0, %s55
      %s70 = sphi 0, %s56
      %s74 = sphi 0, %s74
      %s76 = sphi 0, %s74
      %s77 = sphi 0, %s76
      %s91 = sphi 0, %s77
      %s95 = sphi 0, %s95
      %s97 = sphi 0, %s95
      %s98 = sphi 0, %s97
      %s112 = sphi 0, %s98
      %s116 = sphi 0, %s116
      %s118 = sphi 0, %s116
      %s119 = sphi 0, %s118
      %s133 = sphi 0, %s119
      %s137 = sphi 0, %s137
      %s139 = sphi 0, %s137
      %s140 = sphi 0, %s139
      %s154 = sphi 0, %s140
      %s160 = sphi 0, %s162
      %s163 = sphi 0, %s160
      %s164 = sphi 0, %s163
      %s180 = sphi 0, %s164
      %s186 = sphi 0, %s188
      %s189 = sphi 0, %s186
      %s190 = sphi 0, %s189
      %s206 = sphi 0, %s190
    $region4: #{temporal_attention_forward.1} parent=1 // loop_header_branch
      %22 = sbr.rel (%p20) target = $region8
    $region5: #{temporal_attention_forward.1} parent=1 // loop_body
      %s24 = ssub.s32 %s19, 1
      %s25 = ssub.s32 %s19, 2
      %s26 = sadd.s32 %s19, 1
      %s27 = ssub.s32 %s19, %s26
      %p28 = scmp.eq.s32.totalorder %s27, 0
      %s30 = sadd.s32 %s29, 1
      %s31 = scalar_select %p28, %s29, %s30
      %p34 = pneg %p28
      %p35 = scmp.eq.s32.totalorder %s19, 1
      %p36 = por %p34, %p35
      %p37 = scmp.ne.s32.totalorder %s29, %s32
      %p38 = scmp.eq.s32.totalorder %s19, 0
      %p39 = por %p37, %p38
      %p40 = scmp.ne.s32.totalorder %s29, %s32
      %p41 = scmp.eq.s32.totalorder %s24, 1
      %p42 = por %p40, %p41
      %p43 = scmp.ne.s32.totalorder %s32, %s33
      %p44 = scmp.eq.s32.totalorder %s24, 0
      %p45 = por %p43, %p44
      %p46 = scmp.ne.s32.totalorder %s32, %s33
      %p47 = scmp.eq.s32.totalorder %s25, 1
      %p48 = por %p46, %p47
      %p50 = scmp.ne.s32.totalorder %s33, %s49
      %p51 = scmp.eq.s32.totalorder %s25, 0
      %p52 = por %p50, %p51
      %s54 = sadd.s32 %s53, 1
      %p57 = scmp.eq.s32.totalorder %s19, 1
      %p58 = scmp.ne.s32.totalorder %s53, %s55
      %p59 = scmp.eq.s32.totalorder %s19, 0
      %p60 = por %p58, %p59
      %p61 = scmp.ne.s32.totalorder %s53, %s55
      %p62 = scmp.eq.s32.totalorder %s24, 1
      %p63 = por %p61, %p62
      %p64 = scmp.ne.s32.totalorder %s55, %s56
      %p65 = scmp.eq.s32.totalorder %s24, 0
      %p66 = por %p64, %p65
      %p67 = scmp.ne.s32.totalorder %s55, %s56
      %p68 = scmp.eq.s32.totalorder %s25, 1
      %p69 = por %p67, %p68
      %p71 = scmp.ne.s32.totalorder %s56, %s70
      %p72 = scmp.eq.s32.totalorder %s25, 0
      %p73 = por %p71, %p72
      %s75 = sadd.s32 %s74, 1
      %p78 = scmp.eq.s32.totalorder %s19, 1
      %p79 = scmp.ne.s32.totalorder %s74, %s76
      %p80 = scmp.eq.s32.totalorder %s19, 0
      %p81 = por %p79, %p80
      %p82 = scmp.ne.s32.totalorder %s74, %s76
      %p83 = scmp.eq.s32.totalorder %s24, 1
      %p84 = por %p82, %p83
      %p85 = scmp.ne.s32.totalorder %s76, %s77
      %p86 = scmp.eq.s32.totalorder %s24, 0
      %p87 = por %p85, %p86
      %p88 = scmp.ne.s32.totalorder %s76, %s77
      %p89 = scmp.eq.s32.totalorder %s25, 1
      %p90 = por %p88, %p89
      %p92 = scmp.ne.s32.totalorder %s77, %s91
      %p93 = scmp.eq.s32.totalorder %s25, 0
      %p94 = por %p92, %p93
      %s96 = sadd.s32 %s95, 1
      %p99 = scmp.eq.s32.totalorder %s19, 1
      %p100 = scmp.ne.s32.totalorder %s95, %s97
      %p101 = scmp.eq.s32.totalorder %s19, 0
      %p102 = por %p100, %p101
      %p103 = scmp.ne.s32.totalorder %s95, %s97
      %p104 = scmp.eq.s32.totalorder %s24, 1
      %p105 = por %p103, %p104
      %p106 = scmp.ne.s32.totalorder %s97, %s98
      %p107 = scmp.eq.s32.totalorder %s24, 0
      %p108 = por %p106, %p107
      %p109 = scmp.ne.s32.totalorder %s97, %s98
      %p110 = scmp.eq.s32.totalorder %s25, 1
      %p111 = por %p109, %p110
      %p113 = scmp.ne.s32.totalorder %s98, %s112
      %p114 = scmp.eq.s32.totalorder %s25, 0
      %p115 = por %p113, %p114
      %s117 = sadd.s32 %s116, 1
      %p120 = scmp.eq.s32.totalorder %s19, 1
      %p121 = scmp.ne.s32.totalorder %s116, %s118
      %p122 = scmp.eq.s32.totalorder %s19, 0
      %p123 = por %p121, %p122
      %p124 = scmp.ne.s32.totalorder %s116, %s118
      %p125 = scmp.eq.s32.totalorder %s24, 1
      %p126 = por %p124, %p125
      %p127 = scmp.ne.s32.totalorder %s118, %s119
      %p128 = scmp.eq.s32.totalorder %s24, 0
      %p129 = por %p127, %p128
      %p130 = scmp.ne.s32.totalorder %s118, %s119
      %p131 = scmp.eq.s32.totalorder %s25, 1
      %p132 = por %p130, %p131
      %p134 = scmp.ne.s32.totalorder %s119, %s133
      %p135 = scmp.eq.s32.totalorder %s25, 0
      %p136 = por %p134, %p135
      %s138 = sadd.s32 %s137, 1
      %p141 = scmp.eq.s32.totalorder %s19, 1
      %p142 = scmp.ne.s32.totalorder %s137, %s139
      %p143 = scmp.eq.s32.totalorder %s19, 0
      %p144 = por %p142, %p143
      %p145 = scmp.ne.s32.totalorder %s137, %s139
      %p146 = scmp.eq.s32.totalorder %s24, 1
      %p147 = por %p145, %p146
      %p148 = scmp.ne.s32.totalorder %s139, %s140
      %p149 = scmp.eq.s32.totalorder %s24, 0
      %p150 = por %p148, %p149
      %p151 = scmp.ne.s32.totalorder %s139, %s140
      %p152 = scmp.eq.s32.totalorder %s25, 1
      %p153 = por %p151, %p152
      %p155 = scmp.ne.s32.totalorder %s140, %s154
      %p156 = scmp.eq.s32.totalorder %s25, 0
      %p157 = por %p155, %p156
      %s158 = ssub.s32 %s19, %s26
      %p159 = scmp.eq.s32.totalorder %s158, 0
      %s161 = sadd.s32 %s160, 1
      %s162 = scalar_select %p159, %s160, %s161
      %p165 = pneg %p159
      %p166 = scmp.eq.s32.totalorder %s19, 1
      %p167 = por %p165, %p166
      %p168 = scmp.ne.s32.totalorder %s160, %s163
      %p169 = scmp.eq.s32.totalorder %s19, 0
      %p170 = por %p168, %p169
      %p171 = scmp.ne.s32.totalorder %s160, %s163
      %p172 = scmp.eq.s32.totalorder %s24, 1
      %p173 = por %p171, %p172
      %p174 = scmp.ne.s32.totalorder %s163, %s164
      %p175 = scmp.eq.s32.totalorder %s24, 0
      %p176 = por %p174, %p175
      %p177 = scmp.ne.s32.totalorder %s163, %s164
      %p178 = scmp.eq.s32.totalorder %s25, 1
      %p179 = por %p177, %p178
      %p181 = scmp.ne.s32.totalorder %s164, %s180
      %p182 = scmp.eq.s32.totalorder %s25, 0
      %p183 = por %p181, %p182
      %s184 = ssub.s32 %s19, %s26
      %p185 = scmp.eq.s32.totalorder %s184, 0
      %s187 = sadd.s32 %s186, 1
      %s188 = scalar_select %p185, %s186, %s187
      %p191 = pneg %p185
      %p192 = scmp.eq.s32.totalorder %s19, 1
      %p193 = por %p191, %p192
      %p194 = scmp.ne.s32.totalorder %s186, %s189
      %p195 = scmp.eq.s32.totalorder %s19, 0
      %p196 = por %p194, %p195
      %p197 = scmp.ne.s32.totalorder %s186, %s189
      %p198 = scmp.eq.s32.totalorder %s24, 1
      %p199 = por %p197, %p198
      %p200 = scmp.ne.s32.totalorder %s189, %s190
      %p201 = scmp.eq.s32.totalorder %s24, 0
      %p202 = por %p200, %p201
      %p203 = scmp.ne.s32.totalorder %s189, %s190
      %p204 = scmp.eq.s32.totalorder %s25, 1
      %p205 = por %p203, %p204
      %p207 = scmp.ne.s32.totalorder %s190, %s206
      %p208 = scmp.eq.s32.totalorder %s25, 0
      %p209 = por %p207, %p208
      %p210 = scmp.le.s32.totalorder 1, %s19
      %p211 = scmp.lt.s32.totalorder %s19, 3
      %p212 = pnand %p210, %p211
      %p213 = pneg %p212
      // Predicated region
      $region9: #{temporal_attention_forward.1} parent=5 // pred_check
        _
      $region10: #{temporal_attention_forward.1} parent=5 // pred_check_branch
        %215 = sbr.rel (%p212) target = $region12
      $region11: #{temporal_attention_forward.1} parent=5 // pred_region
        %s216 = ssub.s32 %s19, 1
        // Predicated region
        $region13: #{temporal_attention_forward.1} parent=11 // pred_check
          %p217 = pneg %p66
        $region14: #{temporal_attention_forward.1} parent=11 // pred_check_branch
          %219 = sbr.rel (%p217) target = $region16
        $region15: #{temporal_attention_forward.1} parent=11 // pred_region
          _
        $region16: #{temporal_attention_forward.1} parent=11 // pred_fallthru
          _
        // Predicated region
        $region17: #{temporal_attention_forward.1} parent=11 // pred_check
          %p220 = pneg %p87
        $region18: #{temporal_attention_forward.1} parent=11 // pred_check_branch
          %222 = sbr.rel (%p220) target = $region20
        $region19: #{temporal_attention_forward.1} parent=11 // pred_region
          _
        $region20: #{temporal_attention_forward.1} parent=11 // pred_fallthru
          _
        // Predicated region
        $region21: #{temporal_attention_forward.1} parent=11 // pred_check
          %p223 = pneg %p108
        $region22: #{temporal_attention_forward.1} parent=11 // pred_check_branch
          %225 = sbr.rel (%p223) target = $region24
        $region23: #{temporal_attention_forward.1} parent=11 // pred_region
          _
        $region24: #{temporal_attention_forward.1} parent=11 // pred_fallthru
          _
        // Predicated region
        $region25: #{temporal_attention_forward.1} parent=11 // pred_check
          %p226 = pneg %p129
        $region26: #{temporal_attention_forward.1} parent=11 // pred_check_branch
          %228 = sbr.rel (%p226) target = $region28
        $region27: #{temporal_attention_forward.1} parent=11 // pred_region
          %s230 = ssub.s32 256, 256
          %231 = vsyncadd [#allocation3], %s230
          %s232 = sshll.u32 [#allocation2], 4
          %s233 = int_to_ptr.vmem [resolvable:$true] %s232
          %238 = dma.hbm_to_vmem [thread:$0]  %s4, 256, %s233, [#allocation3], 64, 64, 4
        $region28: #{temporal_attention_forward.1} parent=11 // pred_fallthru
          _
        // Predicated region
        $region29: #{temporal_attention_forward.1} parent=11 // pred_check
          %p239 = pneg %p150
        $region30: #{temporal_attention_forward.1} parent=11 // pred_check_branch
          %241 = sbr.rel (%p239) target = $region32
        $region31: #{temporal_attention_forward.1} parent=11 // pred_region
          %s243 = ssub.s32 16, 16
          %244 = vsyncadd [#allocation6], %s243
          %s246 = sshll.u32 [#allocation5], 4
          %s247 = int_to_ptr.vmem [resolvable:$true] %s246
          %249 = dma.hbm_to_vmem [thread:$0]  %s5, 16, %s247, [#allocation6]
        $region32: #{temporal_attention_forward.1} parent=11 // pred_fallthru
          _
      $region12: #{temporal_attention_forward.1} parent=5 // pred_fallthru
        _
      %p250 = scmp.lt.s32.totalorder %s19, 2
      // Predicated region
      $region33: #{temporal_attention_forward.1} parent=5 // pred_check
        %p251 = pneg %p250
      $region34: #{temporal_attention_forward.1} parent=5 // pred_check_branch
        %253 = sbr.rel (%p251) target = $region36
      $region35: #{temporal_attention_forward.1} parent=5 // pred_region
        // Predicated region
        $region37: #{temporal_attention_forward.1} parent=35 // pred_check
          %p254 = pneg %p39
        $region38: #{temporal_attention_forward.1} parent=35 // pred_check_branch
          %256 = sbr.rel (%p254) target = $region40
        $region39: #{temporal_attention_forward.1} parent=35 // pred_region
          %s257 = smul.u32 2, %s19
          %p258 = scmp.lt.s32.totalorder %s257, 3
          %s259 = scalar_select %p258, %s257, 3
          %s260 = smul.addr %s259, 2
          %s261 = smul.addr %s260, 8
          %s262 = scalar_lea.vmem %s0, %s261
          %s263 = smul.u32 2, %s19
        $region40: #{temporal_attention_forward.1} parent=35 // pred_fallthru
          _
      $region36: #{temporal_attention_forward.1} parent=5 // pred_fallthru
        _
      %p264 = scmp.le.s32.totalorder 1, %s19
      %p265 = scmp.lt.s32.totalorder %s19, 3
      %p266 = pnand %p264, %p265
      %p267 = pneg %p266
      // Predicated region
      $region41: #{temporal_attention_forward.1} parent=5 // pred_check
        _
      $region42: #{temporal_attention_forward.1} parent=5 // pred_check_branch
        %269 = sbr.rel (%p266) target = $region44
      $region43: #{temporal_attention_forward.1} parent=5 // pred_region
        %s270 = ssub.s32 %s19, 1
        // Predicated region
        $region45: #{temporal_attention_forward.1} parent=43 // pred_check
          %p271 = pneg %p129
        $region46: #{temporal_attention_forward.1} parent=43 // pred_check_branch
          %273 = sbr.rel (%p271) target = $region48
        $region47: #{temporal_attention_forward.1} parent=43 // pred_region
          %274 = dma.done [#allocation3], 256
        $region48: #{temporal_attention_forward.1} parent=43 // pred_fallthru
          _
        // Predicated region
        $region49: #{temporal_attention_forward.1} parent=43 // pred_check
          %p275 = pneg %p150
        $region50: #{temporal_attention_forward.1} parent=43 // pred_check_branch
          %277 = sbr.rel (%p275) target = $region52
        $region51: #{temporal_attention_forward.1} parent=43 // pred_region
          %278 = dma.done [#allocation6], 16
        $region52: #{temporal_attention_forward.1} parent=43 // pred_fallthru
          _
        %s279 = smul.u32 2, %s24
        %p280 = scmp.lt.s32.totalorder %s279, 3
        %s281 = scalar_select %p280, %s279, 3
        %s282 = smul.addr %s281, 2
        %s283 = smul.addr %s282, 8
        %s284 = scalar_lea.vmem %s0, %s283
        %p285 = pneg %p45
        %p286 = pneg %p42
        %p287 = pneg %p66
        %p288 = pneg %p63
        %p289 = pneg %p87
        %p290 = pneg %p84
        %p291 = pneg %p108
        %p292 = pneg %p105
        %p293 = pneg %p129
        %p294 = pneg %p126
        %p295 = pneg %p150
        %p296 = pneg %p147
        %p297 = pneg %p176
        %p298 = pneg %p173
        %s299 = sand.u32 %s163, 1
        %s300 = scalar_lea.sflag [#allocation4], %s299
        %s301 = sand.u32 %s163, 1
        %s302 = smul.addr %s301, 32
        %s303 = scalar_lea.vmem [#allocation7], %s302
        %p304 = pneg %p202
        %p305 = pneg %p199
        %s306 = smul.u32 2, %s24
        %p307 = scmp.lt.s32.totalorder %s306, 3
        %s308 = scalar_select %p307, %s306, 3
        %s309 = smul.addr %s308, 2
        %s310 = smul.addr %s309, 8
        %s311 = scalar_lea.vmem %s7, %s310
        %s312 = smul.u32 2, %s24
        %p313 = scmp.lt.s32.totalorder %s312, 3
        %s314 = scalar_select %p313, %s312, 3
        %s315 = smul.addr %s314, 2
        %s316 = smul.addr %s315, 8
        %s317 = scalar_lea.vmem %s0, %s316
        %s318 = smul.u32 2, %s24
        %s319 = smul.u32 2, %s24
        %s320 = smul.u32 2, %s24
        %p321 = scmp.lt.s32.totalorder %s320, 3
        %s322 = scalar_select %p321, %s320, 3
        %s323 = smul.addr %s322, 2
        %s324 = smul.addr %s323, 8
        %s325 = scalar_lea.vmem %s7, %s324
        %s326 = smul.u32 2, %s24
        %v328 = vld [vmem:[%s317] sm:$0xff]
        %v329 = vld [vmem:[%s317 + $0x8] sm:$0xff]
        %v330 = vld [vmem:[%s317 + $0x10] sm:$0xff]
        %v331 = vld [vmem:[%s317 + $0x18] sm:$0xff]
        %v332 = vld [vmem:[%s1] sm:$0xff]
        %v333 = vld [vmem:[%s1 + $0x8] sm:$0xff]
        %v334 = vadd.f32 %v328, %v332
        %v335 = vadd.f32 %v329, %v333
        %v336 = vadd.f32 %v330, %v332
        %v337 = vadd.f32 %v331, %v333
        %v338 = vpack.c.bf16 %v335, %v334
        %v339 = vpack.c.bf16 %v337, %v336
        %v340 = vld [vmem:[%s2] sm:$0xf]
        %v341 = vld [vmem:[%s2 + $0x4] sm:$0xf]
        %v342 = vld [vmem:[%s2 + $0x8] sm:$0xf]
        %v343 = vld [vmem:[%s2 + $0xc] sm:$0xf]
        %v344 = vld [vmem:[%s3] sm:$0x1]
        %v346 = vlaneseq
        %v347 = vshrl.u32 %v346, 7
        %v348 = vsub.s32 0, %v347
        %v349 = vrot.slane %v344, %v348
        %v355 = vunpack.c.l.b16 %v340
        %v356 = vunpack.c.l.b16 %v341
        %v357 = vunpack.c.l.b16 %v342
        %v358 = vunpack.c.l.b16 %v343
        %v359 = vpack.c.b16 %v356, %v355
        %v360 = vpack.c.b16 %v358, %v357
        %vm363 = vcmask 261120
        %v365 = vsel %vm363, %v338, 0
        %v368 = vsel %vm363, %v339, 0
        %370 = vmatprep.subr.bf16.mxu0 0
        %371 = vmatpush1.bf16.msra.mxu0 %v359
        %372 = vmatprep.subr.bf16.mxu0 0
        %373 = vmatpush1.bf16.msra.mxu0 %v360
        %374 = vmatprep.subr.bf16.mxu0 0
        %375 = vmatpush1.bf16.msra.mxu0 0
        %376 = vmatprep.subr.bf16.mxu0 0
        %377 = vmatpush1.bf16.msra.mxu0 0
        %378 = vmatprep.subr.bf16.mxu0 0
        %379 = vmatpush1.bf16.msra.mxu0 0
        %380 = vmatprep.subr.bf16.mxu0 0
        %381 = vmatpush1.bf16.msra.mxu0 0
        %382 = vmatprep.subr.bf16.mxu0 0
        %383 = vmatpush1.bf16.msra.mxu0 0
        %384 = vmatprep.subr.bf16.mxu0 0
        %385 = vmatpush1.bf16.msra.mxu0 0
        %386 = vmatprep.subr.bf16.mxu0 0
        %387 = vmatpush1.bf16.msra.mxu0 0
        %388 = vmatprep.subr.bf16.mxu0 0
        %389 = vmatpush1.bf16.msra.mxu0 0
        %390 = vmatprep.subr.bf16.mxu0 0
        %391 = vmatpush1.bf16.msra.mxu0 0
        %392 = vmatprep.subr.bf16.mxu0 0
        %393 = vmatpush1.bf16.msra.mxu0 0
        %394 = vmatprep.subr.bf16.mxu0 0
        %395 = vmatpush1.bf16.msra.mxu0 0
        %396 = vmatprep.subr.bf16.mxu0 0
        %397 = vmatpush1.bf16.msra.mxu0 0
        %398 = vmatprep.subr.bf16.mxu0 0
        %399 = vmatpush1.bf16.msra.mxu0 0
        %400 = vmatprep.subr.bf16.mxu0 0
        %401 = vmatpush1.bf16.msra.mxu0 0
        %402 = vmatprep.mubr.bf16.mxu0 0
        %403 = vmatmul.mubr.bf16.gmra.mrb[0].mxu0 %v365
        %v404 = vpop.f32.mrb[0].mxu0
        %v405 = vadd.f32 %v349, %v404
        %v406 = vpop.f32.mrb[0].mxu0
        %v407 = vpop.f32.mrb[0].mxu0
        %v408 = vadd.f32 %v349, %v407
        %v409 = vpop.f32.mrb[0].mxu0
        %410 = vmatprep.mubr.bf16.mxu0 0
        %411 = vmatmul.mubr.bf16.gmra.mrb[0].mxu0 %v368
        %v412 = vpop.f32.mrb[0].mxu0
        %v413 = vadd.f32 %v349, %v412
        %v414 = vpop.f32.mrb[0].mxu0
        %v415 = vpop.f32.mrb[0].mxu0
        %v416 = vadd.f32 %v349, %v415
        %v417 = vpop.f32.mrb[0].mxu0
        %418 = vdwg.mxu0
        %v419 = vpack.c.bf16 %v408, %v405
        %v420 = vpack.c.bf16 %v416, %v413
        %422 = vrot.lane.b32.xlu0 %v419, 96
        %v423 = vpop.permute.xlu0 %422
        %vm424 = vcmask 31744
        %v426 = vsel %vm424, %v419, 0
        %v429 = vsel %vm424, %v423, 0
        %431 = vmatprep.subr.bf16.mxu0 0
        %432 = vmatpush1.bf16.xpose.msra.mxu0 %v429
        %433 = vmatprep.subr.bf16.mxu0 0
        %434 = vmatpush1.bf16.xpose.msra.mxu0 0
        %435 = vmatprep.subr.bf16.mxu0 0
        %436 = vmatpush1.bf16.xpose.msra.mxu0 0
        %437 = vmatprep.subr.bf16.mxu0 0
        %438 = vmatpush1.bf16.xpose.msra.mxu0 0
        %439 = vmatprep.subr.bf16.mxu0 0
        %440 = vmatpush1.bf16.xpose.msra.mxu0 0
        %441 = vmatprep.subr.bf16.mxu0 0
        %442 = vmatpush1.bf16.xpose.msra.mxu0 0
        %443 = vmatprep.subr.bf16.mxu0 0
        %444 = vmatpush1.bf16.xpose.msra.mxu0 0
        %445 = vmatprep.subr.bf16.mxu0 0
        %446 = vmatpush1.bf16.xpose.msra.mxu0 0
        %447 = vmatprep.subr.bf16.mxu0 0
        %448 = vmatpush1.bf16.xpose.msra.mxu0 0
        %449 = vmatprep.subr.bf16.mxu0 0
        %450 = vmatpush1.bf16.xpose.msra.mxu0 0
        %451 = vmatprep.subr.bf16.mxu0 0
        %452 = vmatpush1.bf16.xpose.msra.mxu0 0
        %453 = vmatprep.subr.bf16.mxu0 0
        %454 = vmatpush1.bf16.xpose.msra.mxu0 0
        %455 = vmatprep.subr.bf16.mxu0 0
        %456 = vmatpush1.bf16.xpose.msra.mxu0 0
        %457 = vmatprep.subr.bf16.mxu0 0
        %458 = vmatpush1.bf16.xpose.msra.mxu0 0
        %459 = vmatprep.subr.bf16.mxu0 0
        %460 = vmatpush1.bf16.xpose.msra.mxu0 0
        %461 = vmatprep.subr.bf16.mxu0 0
        %462 = vmatpush1.bf16.xpose.msra.mxu0 0
        %463 = vmatprep.mubr.bf16.mxu0 0
        %464 = vmatmul.mubr.bf16.gmra.mrb[0].mxu0 %v426
        %v465 = vpop.f32.mrb[0].mxu0
        %v466 = vadd.f32 0.0, %v465
        %v467 = vpop.f32.mrb[0].mxu0
        %v468 = vpop.f32.mrb[0].mxu0
        %v469 = vadd.f32 0.0, %v468
        %v470 = vpop.f32.mrb[0].mxu0
        %471 = vdwg.mxu0
        %473 = vrot.lane.b32.xlu0 %v420, 96
        %v474 = vpop.permute.xlu0 %473
        %v476 = vsel %vm424, %v420, 0
        %v479 = vsel %vm424, %v474, 0
        %481 = vmatprep.subr.bf16.mxu0 0
        %482 = vmatpush1.bf16.xpose.msra.mxu0 %v479
        %483 = vmatprep.subr.bf16.mxu0 0
        %484 = vmatpush1.bf16.xpose.msra.mxu0 0
        %485 = vmatprep.subr.bf16.mxu0 0
        %486 = vmatpush1.bf16.xpose.msra.mxu0 0
        %487 = vmatprep.subr.bf16.mxu0 0
        %488 = vmatpush1.bf16.xpose.msra.mxu0 0
        %489 = vmatprep.subr.bf16.mxu0 0
        %490 = vmatpush1.bf16.xpose.msra.mxu0 0
        %491 = vmatprep.subr.bf16.mxu0 0
        %492 = vmatpush1.bf16.xpose.msra.mxu0 0
        %493 = vmatprep.subr.bf16.mxu0 0
        %494 = vmatpush1.bf16.xpose.msra.mxu0 0
        %495 = vmatprep.subr.bf16.mxu0 0
        %496 = vmatpush1.bf16.xpose.msra.mxu0 0
        %497 = vmatprep.subr.bf16.mxu0 0
        %498 = vmatpush1.bf16.xpose.msra.mxu0 0
        %499 = vmatprep.subr.bf16.mxu0 0
        %500 = vmatpush1.bf16.xpose.msra.mxu0 0
        %501 = vmatprep.subr.bf16.mxu0 0
        %502 = vmatpush1.bf16.xpose.msra.mxu0 0
        %503 = vmatprep.subr.bf16.mxu0 0
        %504 = vmatpush1.bf16.xpose.msra.mxu0 0
        %505 = vmatprep.subr.bf16.mxu0 0
        %506 = vmatpush1.bf16.xpose.msra.mxu0 0
        %507 = vmatprep.subr.bf16.mxu0 0
        %508 = vmatpush1.bf16.xpose.msra.mxu0 0
        %509 = vmatprep.subr.bf16.mxu0 0
        %510 = vmatpush1.bf16.xpose.msra.mxu0 0
        %511 = vmatprep.subr.bf16.mxu0 0
        %512 = vmatpush1.bf16.xpose.msra.mxu0 0
        %513 = vmatprep.mubr.bf16.mxu0 0
        %514 = vmatmul.mubr.bf16.gmra.mrb[0].mxu0 %v476
        %v515 = vpop.f32.mrb[0].mxu0
        %v516 = vadd.f32 0.0, %v515
        %v517 = vpop.f32.mrb[0].mxu0
        %v518 = vpop.f32.mrb[0].mxu0
        %v519 = vadd.f32 0.0, %v518
        %v520 = vpop.f32.mrb[0].mxu0
        %521 = vdwg.mxu0
        %vm522 = vcmask 130048
        %v523 = vsel %vm522, %v466, -inf
        %524 = vmax.xlane.f32.xlu0 %v523
        %v525 = vpop.xlane.xlu0 %524
        %v526 = vsel %vm522, %v469, -inf
        %527 = vmax.xlane.f32.xlu0 %v526
        %v528 = vpop.xlane.xlu0 %527
        %v529 = vsel %vm522, %v516, -inf
        %530 = vmax.xlane.f32.xlu0 %v529
        %v531 = vpop.xlane.xlu0 %530
        %v532 = vsel %vm522, %v519, -inf
        %533 = vmax.xlane.f32.xlu0 %v532
        %v534 = vpop.xlane.xlu0 %533
        %v535 = vsub.f32 %v466, %v525
        %v536 = vsub.f32 %v469, %v528
        %v537 = vsub.f32 %v516, %v531
        %v538 = vsub.f32 %v519, %v534
        %v539 = vmul.f32 %v535, 1.442695
        %v540 = vpow.pop %v539
        %v541 = vmul.f32 %v536, 1.442695
        %v542 = vpow.pop %v541
        %v543 = vmul.f32 %v537, 1.442695
        %v544 = vpow.pop %v543
        %v545 = vmul.f32 %v538, 1.442695
        %v546 = vpow.pop %v545
        %v547 = vsel %vm522, %v540, 0.0
        %548 = vadd.xlane.f32.xlu0 %v547
        %v549 = vpop.xlane.xlu0 %548
        %v550 = vsel %vm522, %v542, 0.0
        %551 = vadd.xlane.f32.xlu0 %v550
        %v552 = vpop.xlane.xlu0 %551
        %v553 = vsel %vm522, %v544, 0.0
        %554 = vadd.xlane.f32.xlu0 %v553
        %v555 = vpop.xlane.xlu0 %554
        %v556 = vsel %vm522, %v546, 0.0
        %557 = vadd.xlane.f32.xlu0 %v556
        %v558 = vpop.xlane.xlu0 %557
        %v559 = vrcp.pop %v549
        %v560 = vrcp.pop %v552
        %v561 = vrcp.pop %v555
        %v562 = vrcp.pop %v558
        %v563 = vmul.f32 %v540, %v559
        %v564 = vmul.f32 %v542, %v560
        %v565 = vmul.f32 %v544, %v561
        %v566 = vmul.f32 %v546, %v562
        %v567 = vcombine.high %v563, 0.0
        %v569 = vunpack.c.l.s4 1983009808
        %v570 = vunpack.c.0.s8 %v569
        %v571 = vlaneseq
        %v572 = vshrl.u32 %v571, 7
        %v573 = vsub.s32 %v570, %v572
        %v574 = vrot.slane %v563, %v573
        %v576 = vunpack.c.l.s4 1983009808
        %v577 = vunpack.c.0.s8 %v576
        %v578 = vlaneseq
        %v579 = vshrl.u32 %v578, 7
        %v580 = vsub.s32 %v577, %v579
        %v581 = vrot.slane %v567, %v580
        %v582 = vcombine.high %v574, 0.0
        %v584 = vunpack.c.l.s4 1934713408
        %v585 = vunpack.c.0.s8 %v584
        %v586 = vlaneseq
        %v587 = vshrl.u32 %v586, 7
        %v588 = vsub.s32 %v585, %v587
        %v589 = vrot.slane %v574, %v588
        %v591 = vunpack.c.l.s4 1934713408
        %v592 = vunpack.c.0.s8 %v591
        %v593 = vlaneseq
        %v594 = vshrl.u32 %v593, 7
        %v595 = vsub.s32 %v592, %v594
        %v596 = vrot.slane %v582, %v595
        %v597 = vcombine.high %v581, 0.0
        %v599 = vunpack.c.l.s4 1934713408
        %v600 = vunpack.c.0.s8 %v599
        %v601 = vlaneseq
        %v602 = vshrl.u32 %v601, 7
        %v603 = vsub.s32 %v600, %v602
        %v604 = vrot.slane %v581, %v603
        %v606 = vunpack.c.l.s4 1934713408
        %v607 = vunpack.c.0.s8 %v606
        %v608 = vlaneseq
        %v609 = vshrl.u32 %v608, 7
        %v610 = vsub.s32 %v607, %v609
        %v611 = vrot.slane %v597, %v610
        %v612 = vcombine.high %v589, 0.0
        %v613 = vcombine.high %v596, 0.0
        %v614 = vcombine.high %v604, 0.0
        %v615 = vcombine.high %v611, 0.0
        %v616 = vcombine.high %v564, 0.0
        %v618 = vunpack.c.l.s4 1983009808
        %v619 = vunpack.c.0.s8 %v618
        %v620 = vlaneseq
        %v621 = vshrl.u32 %v620, 7
        %v622 = vsub.s32 %v619, %v621
        %v623 = vrot.slane %v564, %v622
        %v625 = vunpack.c.l.s4 1983009808
        %v626 = vunpack.c.0.s8 %v625
        %v627 = vlaneseq
        %v628 = vshrl.u32 %v627, 7
        %v629 = vsub.s32 %v626, %v628
        %v630 = vrot.slane %v616, %v629
        %v631 = vcombine.high %v623, 0.0
        %v633 = vunpack.c.l.s4 1934713408
        %v634 = vunpack.c.0.s8 %v633
        %v635 = vlaneseq
        %v636 = vshrl.u32 %v635, 7
        %v637 = vsub.s32 %v634, %v636
        %v638 = vrot.slane %v623, %v637
        %v640 = vunpack.c.l.s4 1934713408
        %v641 = vunpack.c.0.s8 %v640
        %v642 = vlaneseq
        %v643 = vshrl.u32 %v642, 7
        %v644 = vsub.s32 %v641, %v643
        %v645 = vrot.slane %v631, %v644
        %v646 = vcombine.high %v630, 0.0
        %v648 = vunpack.c.l.s4 1934713408
        %v649 = vunpack.c.0.s8 %v648
        %v650 = vlaneseq
        %v651 = vshrl.u32 %v650, 7
        %v652 = vsub.s32 %v649, %v651
        %v653 = vrot.slane %v630, %v652
        %v655 = vunpack.c.l.s4 1934713408
        %v656 = vunpack.c.0.s8 %v655
        %v657 = vlaneseq
        %v658 = vshrl.u32 %v657, 7
        %v659 = vsub.s32 %v656, %v658
        %v660 = vrot.slane %v646, %v659
        %v661 = vcombine.high %v638, 0.0
        %v662 = vcombine.high %v645, 0.0
        %v663 = vcombine.high %v653, 0.0
        %v664 = vcombine.high %v660, 0.0
        %v665 = vcombine.high %v565, 0.0
        %v667 = vunpack.c.l.s4 1983009808
        %v668 = vunpack.c.0.s8 %v667
        %v669 = vlaneseq
        %v670 = vshrl.u32 %v669, 7
        %v671 = vsub.s32 %v668, %v670
        %v672 = vrot.slane %v565, %v671
        %v674 = vunpack.c.l.s4 1983009808
        %v675 = vunpack.c.0.s8 %v674
        %v676 = vlaneseq
        %v677 = vshrl.u32 %v676, 7
        %v678 = vsub.s32 %v675, %v677
        %v679 = vrot.slane %v665, %v678
        %v680 = vcombine.high %v672, 0.0
        %v682 = vunpack.c.l.s4 1934713408
        %v683 = vunpack.c.0.s8 %v682
        %v684 = vlaneseq
        %v685 = vshrl.u32 %v684, 7
        %v686 = vsub.s32 %v683, %v685
        %v687 = vrot.slane %v672, %v686
        %v689 = vunpack.c.l.s4 1934713408
        %v690 = vunpack.c.0.s8 %v689
        %v691 = vlaneseq
        %v692 = vshrl.u32 %v691, 7
        %v693 = vsub.s32 %v690, %v692
        %v694 = vrot.slane %v680, %v693
        %v695 = vcombine.high %v679, 0.0
        %v697 = vunpack.c.l.s4 1934713408
        %v698 = vunpack.c.0.s8 %v697
        %v699 = vlaneseq
        %v700 = vshrl.u32 %v699, 7
        %v701 = vsub.s32 %v698, %v700
        %v702 = vrot.slane %v679, %v701
        %v704 = vunpack.c.l.s4 1934713408
        %v705 = vunpack.c.0.s8 %v704
        %v706 = vlaneseq
        %v707 = vshrl.u32 %v706, 7
        %v708 = vsub.s32 %v705, %v707
        %v709 = vrot.slane %v695, %v708
        %v710 = vcombine.high %v687, 0.0
        %v711 = vcombine.high %v694, 0.0
        %v712 = vcombine.high %v702, 0.0
        %v713 = vcombine.high %v709, 0.0
        %v714 = vcombine.high %v566, 0.0
        %v716 = vunpack.c.l.s4 1983009808
        %v717 = vunpack.c.0.s8 %v716
        %v718 = vlaneseq
        %v719 = vshrl.u32 %v718, 7
        %v720 = vsub.s32 %v717, %v719
        %v721 = vrot.slane %v566, %v720
        %v723 = vunpack.c.l.s4 1983009808
        %v724 = vunpack.c.0.s8 %v723
        %v725 = vlaneseq
        %v726 = vshrl.u32 %v725, 7
        %v727 = vsub.s32 %v724, %v726
        %v728 = vrot.slane %v714, %v727
        %v729 = vcombine.high %v721, 0.0
        %v731 = vunpack.c.l.s4 1934713408
        %v732 = vunpack.c.0.s8 %v731
        %v733 = vlaneseq
        %v734 = vshrl.u32 %v733, 7
        %v735 = vsub.s32 %v732, %v734
        %v736 = vrot.slane %v721, %v735
        %v738 = vunpack.c.l.s4 1934713408
        %v739 = vunpack.c.0.s8 %v738
        %v740 = vlaneseq
        %v741 = vshrl.u32 %v740, 7
        %v742 = vsub.s32 %v739, %v741
        %v743 = vrot.slane %v729, %v742
        %v744 = vcombine.high %v728, 0.0
        %v746 = vunpack.c.l.s4 1934713408
        %v747 = vunpack.c.0.s8 %v746
        %v748 = vlaneseq
        %v749 = vshrl.u32 %v748, 7
        %v750 = vsub.s32 %v747, %v749
        %v751 = vrot.slane %v728, %v750
        %v753 = vunpack.c.l.s4 1934713408
        %v754 = vunpack.c.0.s8 %v753
        %v755 = vlaneseq
        %v756 = vshrl.u32 %v755, 7
        %v757 = vsub.s32 %v754, %v756
        %v758 = vrot.slane %v744, %v757
        %v759 = vcombine.high %v736, 0.0
        %v760 = vcombine.high %v743, 0.0
        %v761 = vcombine.high %v751, 0.0
        %v762 = vcombine.high %v758, 0.0
        %765 = vrot.lane.b32.xlu0 %v612, 16
        %v766 = vpop.permute.xlu0 %765
        %767 = vrot.lane.b32.xlu0 %v710, 16
        %v768 = vpop.permute.xlu0 %767
        %773 = vrot.lane.b32.xlu0 %v596, 32
        %v774 = vpop.permute.xlu0 %773
        %775 = vrot.lane.b32.xlu0 %v694, 32
        %v776 = vpop.permute.xlu0 %775
        %781 = vrot.lane.b32.xlu0 %v613, 48
        %v782 = vpop.permute.xlu0 %781
        %783 = vrot.lane.b32.xlu0 %v711, 48
        %v784 = vpop.permute.xlu0 %783
        %789 = vrot.lane.b32.xlu0 %v604, 64
        %v790 = vpop.permute.xlu0 %789
        %791 = vrot.lane.b32.xlu0 %v702, 64
        %v792 = vpop.permute.xlu0 %791
        %797 = vrot.lane.b32.xlu0 %v614, 80
        %v798 = vpop.permute.xlu0 %797
        %799 = vrot.lane.b32.xlu0 %v712, 80
        %v800 = vpop.permute.xlu0 %799
        %805 = vrot.lane.b32.xlu0 %v611, 96
        %v806 = vpop.permute.xlu0 %805
        %807 = vrot.lane.b32.xlu0 %v709, 96
        %v808 = vpop.permute.xlu0 %807
        %813 = vrot.lane.b32.xlu0 %v615, 112
        %v814 = vpop.permute.xlu0 %813
        %815 = vrot.lane.b32.xlu0 %v713, 112
        %v816 = vpop.permute.xlu0 %815
        %821 = vrot.lane.b32.xlu0 %v661, 16
        %v822 = vpop.permute.xlu0 %821
        %823 = vrot.lane.b32.xlu0 %v759, 16
        %v824 = vpop.permute.xlu0 %823
        %829 = vrot.lane.b32.xlu0 %v645, 32
        %v830 = vpop.permute.xlu0 %829
        %831 = vrot.lane.b32.xlu0 %v743, 32
        %v832 = vpop.permute.xlu0 %831
        %837 = vrot.lane.b32.xlu0 %v662, 48
        %v838 = vpop.permute.xlu0 %837
        %839 = vrot.lane.b32.xlu0 %v760, 48
        %v840 = vpop.permute.xlu0 %839
        %845 = vrot.lane.b32.xlu0 %v653, 64
        %v846 = vpop.permute.xlu0 %845
        %847 = vrot.lane.b32.xlu0 %v751, 64
        %v848 = vpop.permute.xlu0 %847
        %853 = vrot.lane.b32.xlu0 %v663, 80
        %v854 = vpop.permute.xlu0 %853
        %855 = vrot.lane.b32.xlu0 %v761, 80
        %v856 = vpop.permute.xlu0 %855
        %861 = vrot.lane.b32.xlu0 %v660, 96
        %v862 = vpop.permute.xlu0 %861
        %863 = vrot.lane.b32.xlu0 %v758, 96
        %v864 = vpop.permute.xlu0 %863
        %869 = vrot.lane.b32.xlu0 %v664, 112
        %v870 = vpop.permute.xlu0 %869
        %871 = vrot.lane.b32.xlu0 %v762, 112
        %v872 = vpop.permute.xlu0 %871
        %v875 = vsel %vm522, %v589, %v766
        %v876 = vsel %vm522, %v687, %v768
        %v877 = vsel %vm363, %v875, %v774
        %v878 = vsel %vm363, %v876, %v776
        %vm879 = vcmask 392192
        %v880 = vsel %vm879, %v877, %v782
        %v881 = vsel %vm879, %v878, %v784
        %vm882 = vcmask 523264
        %v883 = vsel %vm882, %v880, %v790
        %v884 = vsel %vm882, %v881, %v792
        %vm885 = vcmask 654336
        %v886 = vsel %vm885, %v883, %v798
        %v887 = vsel %vm885, %v884, %v800
        %vm888 = vcmask 785408
        %v889 = vsel %vm888, %v886, %v806
        %v890 = vsel %vm888, %v887, %v808
        %vm891 = vcmask 916480
        %v892 = vsel %vm891, %v889, %v814
        %v893 = vsel %vm891, %v890, %v816
        %v894 = vsel %vm522, %v638, %v822
        %v895 = vsel %vm522, %v736, %v824
        %v896 = vsel %vm363, %v894, %v830
        %v897 = vsel %vm363, %v895, %v832
        %v898 = vsel %vm879, %v896, %v838
        %v899 = vsel %vm879, %v897, %v840
        %v900 = vsel %vm882, %v898, %v846
        %v901 = vsel %vm882, %v899, %v848
        %v902 = vsel %vm885, %v900, %v854
        %v903 = vsel %vm885, %v901, %v856
        %v904 = vsel %vm888, %v902, %v862
        %v905 = vsel %vm888, %v903, %v864
        %v906 = vsel %vm891, %v904, %v870
        %v907 = vsel %vm891, %v905, %v872
        %v912 = vcombine.low %v892, %v906
        %v914 = vunpack.c.l.s4 1966171168
        %v915 = vunpack.c.0.s8 %v914
        %v916 = vlaneseq
        %v917 = vshrl.u32 %v916, 7
        %v918 = vsub.s32 %v915, %v917
        %v919 = vrot.slane %v912, %v918
        %v921 = vunpack.c.l.s4 1966171168
        %v922 = vunpack.c.0.s8 %v921
        %v923 = vlaneseq
        %v924 = vshrl.u32 %v923, 7
        %v925 = vsub.s32 %v922, %v924
        %v926 = vrot.slane %v919, %v925
        %v927 = vcombine.low %v893, %v907
        %v929 = vunpack.c.l.s4 1966171168
        %v930 = vunpack.c.0.s8 %v929
        %v931 = vlaneseq
        %v932 = vshrl.u32 %v931, 7
        %v933 = vsub.s32 %v930, %v932
        %v934 = vrot.slane %v927, %v933
        %v936 = vunpack.c.l.s4 1966171168
        %v937 = vunpack.c.0.s8 %v936
        %v938 = vlaneseq
        %v939 = vshrl.u32 %v938, 7
        %v940 = vsub.s32 %v937, %v939
        %v941 = vrot.slane %v934, %v940
        %v944 = vlaneseq
        %vm945 = vcmp.ge.s32.totalorder %v944, 0
        %vm946 = vcmp.lt.s32.totalorder %v944, 256
        %vm947 = vmand %vm945, %vm946
        %948 = vst.msk [vmem:[%s325] ss:$8 sm:$0x3] %vm947, %v926
        %949 = vst.msk [vmem:[%s325] ss:$8 sm:$0x0] %vm947, %v926
        %s950 = scalar_lea.vmem %s325, 16
        %951 = vst.msk [vmem:[%s950] ss:$8 sm:$0x3] %vm947, %v941
        %952 = vst.msk [vmem:[%s950] ss:$8 sm:$0x0] %vm947, %v941
        %v953 = vpack.c.bf16 %v564, %v563
        %v954 = vpack.c.bf16 %v566, %v565
        %955 = vrot.lane.b32.xlu0 %v419, 64
        %v956 = vpop.permute.xlu0 %955
        %v959 = vsel %vm522, %v953, 0
        %961 = vmatprep.subr.bf16.mxu0 0
        %962 = vmatpush1.bf16.msra.mxu0 %v956
        %963 = vmatprep.subr.bf16.mxu0 0
        %964 = vmatpush1.bf16.msra.mxu0 0
        %965 = vmatprep.subr.bf16.mxu0 0
        %966 = vmatpush1.bf16.msra.mxu0 0
        %967 = vmatprep.subr.bf16.mxu0 0
        %968 = vmatpush1.bf16.msra.mxu0 0
        %969 = vmatprep.subr.bf16.mxu0 0
        %970 = vmatpush1.bf16.msra.mxu0 0
        %971 = vmatprep.subr.bf16.mxu0 0
        %972 = vmatpush1.bf16.msra.mxu0 0
        %973 = vmatprep.subr.bf16.mxu0 0
        %974 = vmatpush1.bf16.msra.mxu0 0
        %975 = vmatprep.subr.bf16.mxu0 0
        %976 = vmatpush1.bf16.msra.mxu0 0
        %977 = vmatprep.subr.bf16.mxu0 0
        %978 = vmatpush1.bf16.msra.mxu0 0
        %979 = vmatprep.subr.bf16.mxu0 0
        %980 = vmatpush1.bf16.msra.mxu0 0
        %981 = vmatprep.subr.bf16.mxu0 0
        %982 = vmatpush1.bf16.msra.mxu0 0
        %983 = vmatprep.subr.bf16.mxu0 0
        %984 = vmatpush1.bf16.msra.mxu0 0
        %985 = vmatprep.subr.bf16.mxu0 0
        %986 = vmatpush1.bf16.msra.mxu0 0
        %987 = vmatprep.subr.bf16.mxu0 0
        %988 = vmatpush1.bf16.msra.mxu0 0
        %989 = vmatprep.subr.bf16.mxu0 0
        %990 = vmatpush1.bf16.msra.mxu0 0
        %991 = vmatprep.subr.bf16.mxu0 0
        %992 = vmatpush1.bf16.msra.mxu0 0
        %993 = vmatprep.mubr.bf16.mxu0 0
        %994 = vmatmul.mubr.bf16.gmra.mrb[0].mxu0 %v959
        %v995 = vpop.f32.mrb[0].mxu0
        %v996 = vadd.f32 0.0, %v995
        %v997 = vpop.f32.mrb[0].mxu0
        %v998 = vpop.f32.mrb[0].mxu0
        %v999 = vadd.f32 0.0, %v998
        %v1000 = vpop.f32.mrb[0].mxu0
        %1001 = vdwg.mxu0
        %1002 = vrot.lane.b32.xlu0 %v420, 64
        %v1003 = vpop.permute.xlu0 %1002
        %v1006 = vsel %vm522, %v954, 0
        %1008 = vmatprep.subr.bf16.mxu0 0
        %1009 = vmatpush1.bf16.msra.mxu0 %v1003
        %1010 = vmatprep.subr.bf16.mxu0 0
        %1011 = vmatpush1.bf16.msra.mxu0 0
        %1012 = vmatprep.subr.bf16.mxu0 0
        %1013 = vmatpush1.bf16.msra.mxu0 0
        %1014 = vmatprep.subr.bf16.mxu0 0
        %1015 = vmatpush1.bf16.msra.mxu0 0
        %1016 = vmatprep.subr.bf16.mxu0 0
        %1017 = vmatpush1.bf16.msra.mxu0 0
        %1018 = vmatprep.subr.bf16.mxu0 0
        %1019 = vmatpush1.bf16.msra.mxu0 0
        %1020 = vmatprep.subr.bf16.mxu0 0
        %1021 = vmatpush1.bf16.msra.mxu0 0
        %1022 = vmatprep.subr.bf16.mxu0 0
        %1023 = vmatpush1.bf16.msra.mxu0 0
        %1024 = vmatprep.subr.bf16.mxu0 0
        %1025 = vmatpush1.bf16.msra.mxu0 0
        %1026 = vmatprep.subr.bf16.mxu0 0
        %1027 = vmatpush1.bf16.msra.mxu0 0
        %1028 = vmatprep.subr.bf16.mxu0 0
        %1029 = vmatpush1.bf16.msra.mxu0 0
        %1030 = vmatprep.subr.bf16.mxu0 0
        %1031 = vmatpush1.bf16.msra.mxu0 0
        %1032 = vmatprep.subr.bf16.mxu0 0
        %1033 = vmatpush1.bf16.msra.mxu0 0
        %1034 = vmatprep.subr.bf16.mxu0 0
        %1035 = vmatpush1.bf16.msra.mxu0 0
        %1036 = vmatprep.subr.bf16.mxu0 0
        %1037 = vmatpush1.bf16.msra.mxu0 0
        %1038 = vmatprep.subr.bf16.mxu0 0
        %1039 = vmatpush1.bf16.msra.mxu0 0
        %1040 = vmatprep.mubr.bf16.mxu0 0
        %1041 = vmatmul.mubr.bf16.gmra.mrb[0].mxu0 %v1006
        %v1042 = vpop.f32.mrb[0].mxu0
        %v1043 = vadd.f32 0.0, %v1042
        %v1044 = vpop.f32.mrb[0].mxu0
        %v1045 = vpop.f32.mrb[0].mxu0
        %v1046 = vadd.f32 0.0, %v1045
        %v1047 = vpop.f32.mrb[0].mxu0
        %1048 = vdwg.mxu0
        %1049 = vrot.lane.b32.xlu0 %v419, 124
        %v1050 = vpop.permute.xlu0 %1049
        %1051 = vrot.lane.b32.xlu0 %v419, 92
        %v1052 = vpop.permute.xlu0 %1051
        %v1054 = vsel %vm424, %v1050, 0
        %v1057 = vsel %vm424, %v1052, 0
        %1059 = vmatprep.subr.bf16.mxu0 0
        %1060 = vmatpush1.bf16.xpose.msra.mxu0 %v1057
        %1061 = vmatprep.subr.bf16.mxu0 0
        %1062 = vmatpush1.bf16.xpose.msra.mxu0 0
        %1063 = vmatprep.subr.bf16.mxu0 0
        %1064 = vmatpush1.bf16.xpose.msra.mxu0 0
        %1065 = vmatprep.subr.bf16.mxu0 0
        %1066 = vmatpush1.bf16.xpose.msra.mxu0 0
        %1067 = vmatprep.subr.bf16.mxu0 0
        %1068 = vmatpush1.bf16.xpose.msra.mxu0 0
        %1069 = vmatprep.subr.bf16.mxu0 0
        %1070 = vmatpush1.bf16.xpose.msra.mxu0 0
        %1071 = vmatprep.subr.bf16.mxu0 0
        %1072 = vmatpush1.bf16.xpose.msra.mxu0 0
        %1073 = vmatprep.subr.bf16.mxu0 0
        %1074 = vmatpush1.bf16.xpose.msra.mxu0 0
        %1075 = vmatprep.subr.bf16.mxu0 0
        %1076 = vmatpush1.bf16.xpose.msra.mxu0 0
        %1077 = vmatprep.subr.bf16.mxu0 0
        %1078 = vmatpush1.bf16.xpose.msra.mxu0 0
        %1079 = vmatprep.subr.bf16.mxu0 0
        %1080 = vmatpush1.bf16.xpose.msra.mxu0 0
        %1081 = vmatprep.subr.bf16.mxu0 0
        %1082 = vmatpush1.bf16.xpose.msra.mxu0 0
        %1083 = vmatprep.subr.bf16.mxu0 0
        %1084 = vmatpush1.bf16.xpose.msra.mxu0 0
        %1085 = vmatprep.subr.bf16.mxu0 0
        %1086 = vmatpush1.bf16.xpose.msra.mxu0 0
        %1087 = vmatprep.subr.bf16.mxu0 0
        %1088 = vmatpush1.bf16.xpose.msra.mxu0 0
        %1089 = vmatprep.subr.bf16.mxu0 0
        %1090 = vmatpush1.bf16.xpose.msra.mxu0 0
        %1091 = vmatprep.mubr.bf16.mxu0 0
        %1092 = vmatmul.mubr.bf16.gmra.mrb[0].mxu0 %v1054
        %v1093 = vpop.f32.mrb[0].mxu0
        %v1094 = vadd.f32 0.0, %v1093
        %v1095 = vpop.f32.mrb[0].mxu0
        %v1096 = vpop.f32.mrb[0].mxu0
        %v1097 = vadd.f32 0.0, %v1096
        %v1098 = vpop.f32.mrb[0].mxu0
        %1099 = vdwg.mxu0
        %1100 = vrot.lane.b32.xlu0 %v420, 124
        %v1101 = vpop.permute.xlu0 %1100
        %1102 = vrot.lane.b32.xlu0 %v420, 92
        %v1103 = vpop.permute.xlu0 %1102
        %v1105 = vsel %vm424, %v1101, 0
        %v1108 = vsel %vm424, %v1103, 0
        %1110 = vmatprep.subr.bf16.mxu0 0
        %1111 = vmatpush1.bf16.xpose.msra.mxu0 %v1108
        %1112 = vmatprep.subr.bf16.mxu0 0
        %1113 = vmatpush1.bf16.xpose.msra.mxu0 0
        %1114 = vmatprep.subr.bf16.mxu0 0
        %1115 = vmatpush1.bf16.xpose.msra.mxu0 0
        %1116 = vmatprep.subr.bf16.mxu0 0
        %1117 = vmatpush1.bf16.xpose.msra.mxu0 0
        %1118 = vmatprep.subr.bf16.mxu0 0
        %1119 = vmatpush1.bf16.xpose.msra.mxu0 0
        %1120 = vmatprep.subr.bf16.mxu0 0
        %1121 = vmatpush1.bf16.xpose.msra.mxu0 0
        %1122 = vmatprep.subr.bf16.mxu0 0
        %1123 = vmatpush1.bf16.xpose.msra.mxu0 0
        %1124 = vmatprep.subr.bf16.mxu0 0
        %1125 = vmatpush1.bf16.xpose.msra.mxu0 0
        %1126 = vmatprep.subr.bf16.mxu0 0
        %1127 = vmatpush1.bf16.xpose.msra.mxu0 0
        %1128 = vmatprep.subr.bf16.mxu0 0
        %1129 = vmatpush1.bf16.xpose.msra.mxu0 0
        %1130 = vmatprep.subr.bf16.mxu0 0
        %1131 = vmatpush1.bf16.xpose.msra.mxu0 0
        %1132 = vmatprep.subr.bf16.mxu0 0
        %1133 = vmatpush1.bf16.xpose.msra.mxu0 0
        %1134 = vmatprep.subr.bf16.mxu0 0
        %1135 = vmatpush1.bf16.xpose.msra.mxu0 0
        %1136 = vmatprep.subr.bf16.mxu0 0
        %1137 = vmatpush1.bf16.xpose.msra.mxu0 0
        %1138 = vmatprep.subr.bf16.mxu0 0
        %1139 = vmatpush1.bf16.xpose.msra.mxu0 0
        %1140 = vmatprep.subr.bf16.mxu0 0
        %1141 = vmatpush1.bf16.xpose.msra.mxu0 0
        %1142 = vmatprep.mubr.bf16.mxu0 0
        %1143 = vmatmul.mubr.bf16.gmra.mrb[0].mxu0 %v1105
        %v1144 = vpop.f32.mrb[0].mxu0
        %v1145 = vadd.f32 0.0, %v1144
        %v1146 = vpop.f32.mrb[0].mxu0
        %v1147 = vpop.f32.mrb[0].mxu0
        %v1148 = vadd.f32 0.0, %v1147
        %v1149 = vpop.f32.mrb[0].mxu0
        %1150 = vdwg.mxu0
        %v1151 = vsel %vm522, %v1094, -inf
        %1152 = vmax.xlane.f32.xlu0 %v1151
        %v1153 = vpop.xlane.xlu0 %1152
        %v1154 = vsel %vm522, %v1097, -inf
        %1155 = vmax.xlane.f32.xlu0 %v1154
        %v1156 = vpop.xlane.xlu0 %1155
        %v1157 = vsel %vm522, %v1145, -inf
        %1158 = vmax.xlane.f32.xlu0 %v1157
        %v1159 = vpop.xlane.xlu0 %1158
        %v1160 = vsel %vm522, %v1148, -inf
        %1161 = vmax.xlane.f32.xlu0 %v1160
        %v1162 = vpop.xlane.xlu0 %1161
        %v1163 = vsub.f32 %v1094, %v1153
        %v1164 = vsub.f32 %v1097, %v1156
        %v1165 = vsub.f32 %v1145, %v1159
        %v1166 = vsub.f32 %v1148, %v1162
        %v1167 = vmul.f32 %v1163, 1.442695
        %v1168 = vpow.pop %v1167
        %v1169 = vmul.f32 %v1164, 1.442695
        %v1170 = vpow.pop %v1169
        %v1171 = vmul.f32 %v1165, 1.442695
        %v1172 = vpow.pop %v1171
        %v1173 = vmul.f32 %v1166, 1.442695
        %v1174 = vpow.pop %v1173
        %v1175 = vsel %vm522, %v1168, 0.0
        %1176 = vadd.xlane.f32.xlu0 %v1175
        %v1177 = vpop.xlane.xlu0 %1176
        %v1178 = vsel %vm522, %v1170, 0.0
        %1179 = vadd.xlane.f32.xlu0 %v1178
        %v1180 = vpop.xlane.xlu0 %1179
        %v1181 = vsel %vm522, %v1172, 0.0
        %1182 = vadd.xlane.f32.xlu0 %v1181
        %v1183 = vpop.xlane.xlu0 %1182
        %v1184 = vsel %vm522, %v1174, 0.0
        %1185 = vadd.xlane.f32.xlu0 %v1184
        %v1186 = vpop.xlane.xlu0 %1185
        %v1187 = vrcp.pop %v1177
        %v1188 = vrcp.pop %v1180
        %v1189 = vrcp.pop %v1183
        %v1190 = vrcp.pop %v1186
        %v1191 = vmul.f32 %v1168, %v1187
        %v1192 = vmul.f32 %v1170, %v1188
        %v1193 = vmul.f32 %v1172, %v1189
        %v1194 = vmul.f32 %v1174, %v1190
        %v1195 = vcombine.high %v1191, 0.0
        %v1197 = vunpack.c.l.s4 1983009808
        %v1198 = vunpack.c.0.s8 %v1197
        %v1199 = vlaneseq
        %v1200 = vshrl.u32 %v1199, 7
        %v1201 = vsub.s32 %v1198, %v1200
        %v1202 = vrot.slane %v1191, %v1201
        %v1204 = vunpack.c.l.s4 1983009808
        %v1205 = vunpack.c.0.s8 %v1204
        %v1206 = vlaneseq
        %v1207 = vshrl.u32 %v1206, 7
        %v1208 = vsub.s32 %v1205, %v1207
        %v1209 = vrot.slane %v1195, %v1208
        %v1210 = vcombine.high %v1202, 0.0
        %v1212 = vunpack.c.l.s4 1934713408
        %v1213 = vunpack.c.0.s8 %v1212
        %v1214 = vlaneseq
        %v1215 = vshrl.u32 %v1214, 7
        %v1216 = vsub.s32 %v1213, %v1215
        %v1217 = vrot.slane %v1202, %v1216
        %v1219 = vunpack.c.l.s4 1934713408
        %v1220 = vunpack.c.0.s8 %v1219
        %v1221 = vlaneseq
        %v1222 = vshrl.u32 %v1221, 7
        %v1223 = vsub.s32 %v1220, %v1222
        %v1224 = vrot.slane %v1210, %v1223
        %v1225 = vcombine.high %v1209, 0.0
        %v1227 = vunpack.c.l.s4 1934713408
        %v1228 = vunpack.c.0.s8 %v1227
        %v1229 = vlaneseq
        %v1230 = vshrl.u32 %v1229, 7
        %v1231 = vsub.s32 %v1228, %v1230
        %v1232 = vrot.slane %v1209, %v1231
        %v1234 = vunpack.c.l.s4 1934713408
        %v1235 = vunpack.c.0.s8 %v1234
        %v1236 = vlaneseq
        %v1237 = vshrl.u32 %v1236, 7
        %v1238 = vsub.s32 %v1235, %v1237
        %v1239 = vrot.slane %v1225, %v1238
        %v1240 = vcombine.high %v1217, 0.0
        %v1241 = vcombine.high %v1224, 0.0
        %v1242 = vcombine.high %v1232, 0.0
        %v1243 = vcombine.high %v1239, 0.0
        %v1244 = vcombine.high %v1192, 0.0
        %v1246 = vunpack.c.l.s4 1983009808
        %v1247 = vunpack.c.0.s8 %v1246
        %v1248 = vlaneseq
        %v1249 = vshrl.u32 %v1248, 7
        %v1250 = vsub.s32 %v1247, %v1249
        %v1251 = vrot.slane %v1192, %v1250
        %v1253 = vunpack.c.l.s4 1983009808
        %v1254 = vunpack.c.0.s8 %v1253
        %v1255 = vlaneseq
        %v1256 = vshrl.u32 %v1255, 7
        %v1257 = vsub.s32 %v1254, %v1256
        %v1258 = vrot.slane %v1244, %v1257
        %v1259 = vcombine.high %v1251, 0.0
        %v1261 = vunpack.c.l.s4 1934713408
        %v1262 = vunpack.c.0.s8 %v1261
        %v1263 = vlaneseq
        %v1264 = vshrl.u32 %v1263, 7
        %v1265 = vsub.s32 %v1262, %v1264
        %v1266 = vrot.slane %v1251, %v1265
        %v1268 = vunpack.c.l.s4 1934713408
        %v1269 = vunpack.c.0.s8 %v1268
        %v1270 = vlaneseq
        %v1271 = vshrl.u32 %v1270, 7
        %v1272 = vsub.s32 %v1269, %v1271
        %v1273 = vrot.slane %v1259, %v1272
        %v1274 = vcombine.high %v1258, 0.0
        %v1276 = vunpack.c.l.s4 1934713408
        %v1277 = vunpack.c.0.s8 %v1276
        %v1278 = vlaneseq
        %v1279 = vshrl.u32 %v1278, 7
        %v1280 = vsub.s32 %v1277, %v1279
        %v1281 = vrot.slane %v1258, %v1280
        %v1283 = vunpack.c.l.s4 1934713408
        %v1284 = vunpack.c.0.s8 %v1283
        %v1285 = vlaneseq
        %v1286 = vshrl.u32 %v1285, 7
        %v1287 = vsub.s32 %v1284, %v1286
        %v1288 = vrot.slane %v1274, %v1287
        %v1289 = vcombine.high %v1266, 0.0
        %v1290 = vcombine.high %v1273, 0.0
        %v1291 = vcombine.high %v1281, 0.0
        %v1292 = vcombine.high %v1288, 0.0
        %v1293 = vcombine.high %v1193, 0.0
        %v1295 = vunpack.c.l.s4 1983009808
        %v1296 = vunpack.c.0.s8 %v1295
        %v1297 = vlaneseq
        %v1298 = vshrl.u32 %v1297, 7
        %v1299 = vsub.s32 %v1296, %v1298
        %v1300 = vrot.slane %v1193, %v1299
        %v1302 = vunpack.c.l.s4 1983009808
        %v1303 = vunpack.c.0.s8 %v1302
        %v1304 = vlaneseq
        %v1305 = vshrl.u32 %v1304, 7
        %v1306 = vsub.s32 %v1303, %v1305
        %v1307 = vrot.slane %v1293, %v1306
        %v1308 = vcombine.high %v1300, 0.0
        %v1310 = vunpack.c.l.s4 1934713408
        %v1311 = vunpack.c.0.s8 %v1310
        %v1312 = vlaneseq
        %v1313 = vshrl.u32 %v1312, 7
        %v1314 = vsub.s32 %v1311, %v1313
        %v1315 = vrot.slane %v1300, %v1314
        %v1317 = vunpack.c.l.s4 1934713408
        %v1318 = vunpack.c.0.s8 %v1317
        %v1319 = vlaneseq
        %v1320 = vshrl.u32 %v1319, 7
        %v1321 = vsub.s32 %v1318, %v1320
        %v1322 = vrot.slane %v1308, %v1321
        %v1323 = vcombine.high %v1307, 0.0
        %v1325 = vunpack.c.l.s4 1934713408
        %v1326 = vunpack.c.0.s8 %v1325
        %v1327 = vlaneseq
        %v1328 = vshrl.u32 %v1327, 7
        %v1329 = vsub.s32 %v1326, %v1328
        %v1330 = vrot.slane %v1307, %v1329
        %v1332 = vunpack.c.l.s4 1934713408
        %v1333 = vunpack.c.0.s8 %v1332
        %v1334 = vlaneseq
        %v1335 = vshrl.u32 %v1334, 7
        %v1336 = vsub.s32 %v1333, %v1335
        %v1337 = vrot.slane %v1323, %v1336
        %v1338 = vcombine.high %v1315, 0.0
        %v1339 = vcombine.high %v1322, 0.0
        %v1340 = vcombine.high %v1330, 0.0
        %v1341 = vcombine.high %v1337, 0.0
        %v1342 = vcombine.high %v1194, 0.0
        %v1344 = vunpack.c.l.s4 1983009808
        %v1345 = vunpack.c.0.s8 %v1344
        %v1346 = vlaneseq
        %v1347 = vshrl.u32 %v1346, 7
        %v1348 = vsub.s32 %v1345, %v1347
        %v1349 = vrot.slane %v1194, %v1348
        %v1351 = vunpack.c.l.s4 1983009808
        %v1352 = vunpack.c.0.s8 %v1351
        %v1353 = vlaneseq
        %v1354 = vshrl.u32 %v1353, 7
        %v1355 = vsub.s32 %v1352, %v1354
        %v1356 = vrot.slane %v1342, %v1355
        %v1357 = vcombine.high %v1349, 0.0
        %v1359 = vunpack.c.l.s4 1934713408
        %v1360 = vunpack.c.0.s8 %v1359
        %v1361 = vlaneseq
        %v1362 = vshrl.u32 %v1361, 7
        %v1363 = vsub.s32 %v1360, %v1362
        %v1364 = vrot.slane %v1349, %v1363
        %v1366 = vunpack.c.l.s4 1934713408
        %v1367 = vunpack.c.0.s8 %v1366
        %v1368 = vlaneseq
        %v1369 = vshrl.u32 %v1368, 7
        %v1370 = vsub.s32 %v1367, %v1369
        %v1371 = vrot.slane %v1357, %v1370
        %v1372 = vcombine.high %v1356, 0.0
        %v1374 = vunpack.c.l.s4 1934713408
        %v1375 = vunpack.c.0.s8 %v1374
        %v1376 = vlaneseq
        %v1377 = vshrl.u32 %v1376, 7
        %v1378 = vsub.s32 %v1375, %v1377
        %v1379 = vrot.slane %v1356, %v1378
        %v1381 = vunpack.c.l.s4 1934713408
        %v1382 = vunpack.c.0.s8 %v1381
        %v1383 = vlaneseq
        %v1384 = vshrl.u32 %v1383, 7
        %v1385 = vsub.s32 %v1382, %v1384
        %v1386 = vrot.slane %v1372, %v1385
        %v1387 = vcombine.high %v1364, 0.0
        %v1388 = vcombine.high %v1371, 0.0
        %v1389 = vcombine.high %v1379, 0.0
        %v1390 = vcombine.high %v1386, 0.0
        %1393 = vrot.lane.b32.xlu0 %v1240, 16
        %v1394 = vpop.permute.xlu0 %1393
        %1395 = vrot.lane.b32.xlu0 %v1338, 16
        %v1396 = vpop.permute.xlu0 %1395
        %1401 = vrot.lane.b32.xlu0 %v1224, 32
        %v1402 = vpop.permute.xlu0 %1401
        %1403 = vrot.lane.b32.xlu0 %v1322, 32
        %v1404 = vpop.permute.xlu0 %1403
        %1409 = vrot.lane.b32.xlu0 %v1241, 48
        %v1410 = vpop.permute.xlu0 %1409
        %1411 = vrot.lane.b32.xlu0 %v1339, 48
        %v1412 = vpop.permute.xlu0 %1411
        %1417 = vrot.lane.b32.xlu0 %v1232, 64
        %v1418 = vpop.permute.xlu0 %1417
        %1419 = vrot.lane.b32.xlu0 %v1330, 64
        %v1420 = vpop.permute.xlu0 %1419
        %1425 = vrot.lane.b32.xlu0 %v1242, 80
        %v1426 = vpop.permute.xlu0 %1425
        %1427 = vrot.lane.b32.xlu0 %v1340, 80
        %v1428 = vpop.permute.xlu0 %1427
        %1433 = vrot.lane.b32.xlu0 %v1239, 96
        %v1434 = vpop.permute.xlu0 %1433
        %1435 = vrot.lane.b32.xlu0 %v1337, 96
        %v1436 = vpop.permute.xlu0 %1435
        %1441 = vrot.lane.b32.xlu0 %v1243, 112
        %v1442 = vpop.permute.xlu0 %1441
        %1443 = vrot.lane.b32.xlu0 %v1341, 112
        %v1444 = vpop.permute.xlu0 %1443
        %1449 = vrot.lane.b32.xlu0 %v1289, 16
        %v1450 = vpop.permute.xlu0 %1449
        %1451 = vrot.lane.b32.xlu0 %v1387, 16
        %v1452 = vpop.permute.xlu0 %1451
        %1457 = vrot.lane.b32.xlu0 %v1273, 32
        %v1458 = vpop.permute.xlu0 %1457
        %1459 = vrot.lane.b32.xlu0 %v1371, 32
        %v1460 = vpop.permute.xlu0 %1459
        %1465 = vrot.lane.b32.xlu0 %v1290, 48
        %v1466 = vpop.permute.xlu0 %1465
        %1467 = vrot.lane.b32.xlu0 %v1388, 48
        %v1468 = vpop.permute.xlu0 %1467
        %1473 = vrot.lane.b32.xlu0 %v1281, 64
        %v1474 = vpop.permute.xlu0 %1473
        %1475 = vrot.lane.b32.xlu0 %v1379, 64
        %v1476 = vpop.permute.xlu0 %1475
        %1481 = vrot.lane.b32.xlu0 %v1291, 80
        %v1482 = vpop.permute.xlu0 %1481
        %1483 = vrot.lane.b32.xlu0 %v1389, 80
        %v1484 = vpop.permute.xlu0 %1483
        %1489 = vrot.lane.b32.xlu0 %v1288, 96
        %v1490 = vpop.permute.xlu0 %1489
        %1491 = vrot.lane.b32.xlu0 %v1386, 96
        %v1492 = vpop.permute.xlu0 %1491
        %1497 = vrot.lane.b32.xlu0 %v1292, 112
        %v1498 = vpop.permute.xlu0 %1497
        %1499 = vrot.lane.b32.xlu0 %v1390, 112
        %v1500 = vpop.permute.xlu0 %1499
        %v1503 = vsel %vm522, %v1217, %v1394
        %v1504 = vsel %vm522, %v1315, %v1396
        %v1505 = vsel %vm363, %v1503, %v1402
        %v1506 = vsel %vm363, %v1504, %v1404
        %v1507 = vsel %vm879, %v1505, %v1410
        %v1508 = vsel %vm879, %v1506, %v1412
        %v1509 = vsel %vm882, %v1507, %v1418
        %v1510 = vsel %vm882, %v1508, %v1420
        %v1511 = vsel %vm885, %v1509, %v1426
        %v1512 = vsel %vm885, %v1510, %v1428
        %v1513 = vsel %vm888, %v1511, %v1434
        %v1514 = vsel %vm888, %v1512, %v1436
        %v1515 = vsel %vm891, %v1513, %v1442
        %v1516 = vsel %vm891, %v1514, %v1444
        %v1517 = vsel %vm522, %v1266, %v1450
        %v1518 = vsel %vm522, %v1364, %v1452
        %v1519 = vsel %vm363, %v1517, %v1458
        %v1520 = vsel %vm363, %v1518, %v1460
        %v1521 = vsel %vm879, %v1519, %v1466
        %v1522 = vsel %vm879, %v1520, %v1468
        %v1523 = vsel %vm882, %v1521, %v1474
        %v1524 = vsel %vm882, %v1522, %v1476
        %v1525 = vsel %vm885, %v1523, %v1482
        %v1526 = vsel %vm885, %v1524, %v1484
        %v1527 = vsel %vm888, %v1525, %v1490
        %v1528 = vsel %vm888, %v1526, %v1492
        %v1529 = vsel %vm891, %v1527, %v1498
        %v1530 = vsel %vm891, %v1528, %v1500
        %v1535 = vcombine.low %v1515, %v1529
        %v1537 = vunpack.c.l.s4 1966171168
        %v1538 = vunpack.c.0.s8 %v1537
        %v1539 = vlaneseq
        %v1540 = vshrl.u32 %v1539, 7
        %v1541 = vsub.s32 %v1538, %v1540
        %v1542 = vrot.slane %v1535, %v1541
        %v1544 = vunpack.c.l.s4 1966171168
        %v1545 = vunpack.c.0.s8 %v1544
        %v1546 = vlaneseq
        %v1547 = vshrl.u32 %v1546, 7
        %v1548 = vsub.s32 %v1545, %v1547
        %v1549 = vrot.slane %v1542, %v1548
        %v1550 = vcombine.low %v1516, %v1530
        %v1552 = vunpack.c.l.s4 1966171168
        %v1553 = vunpack.c.0.s8 %v1552
        %v1554 = vlaneseq
        %v1555 = vshrl.u32 %v1554, 7
        %v1556 = vsub.s32 %v1553, %v1555
        %v1557 = vrot.slane %v1550, %v1556
        %v1559 = vunpack.c.l.s4 1966171168
        %v1560 = vunpack.c.0.s8 %v1559
        %v1561 = vlaneseq
        %v1562 = vshrl.u32 %v1561, 7
        %v1563 = vsub.s32 %v1560, %v1562
        %v1564 = vrot.slane %v1557, %v1563
        %s1567 = scalar_lea.vmem %s325, 1
        %1568 = vst.msk [vmem:[%s1567] ss:$8 sm:$0x3] %vm947, %v1549
        %1569 = vst.msk [vmem:[%s1567] ss:$8 sm:$0x0] %vm947, %v1549
        %s1570 = scalar_lea.vmem %s325, 17
        %1571 = vst.msk [vmem:[%s1570] ss:$8 sm:$0x3] %vm947, %v1564
        %1572 = vst.msk [vmem:[%s1570] ss:$8 sm:$0x0] %vm947, %v1564
        %v1573 = vpack.c.bf16 %v1192, %v1191
        %v1574 = vpack.c.bf16 %v1194, %v1193
        %1575 = vrot.lane.b32.xlu0 %v419, 60
        %v1576 = vpop.permute.xlu0 %1575
        %v1579 = vsel %vm522, %v1573, 0
        %1581 = vmatprep.subr.bf16.mxu0 0
        %1582 = vmatpush1.bf16.msra.mxu0 %v1576
        %1583 = vmatprep.subr.bf16.mxu0 0
        %1584 = vmatpush1.bf16.msra.mxu0 0
        %1585 = vmatprep.subr.bf16.mxu0 0
        %1586 = vmatpush1.bf16.msra.mxu0 0
        %1587 = vmatprep.subr.bf16.mxu0 0
        %1588 = vmatpush1.bf16.msra.mxu0 0
        %1589 = vmatprep.subr.bf16.mxu0 0
        %1590 = vmatpush1.bf16.msra.mxu0 0
        %1591 = vmatprep.subr.bf16.mxu0 0
        %1592 = vmatpush1.bf16.msra.mxu0 0
        %1593 = vmatprep.subr.bf16.mxu0 0
        %1594 = vmatpush1.bf16.msra.mxu0 0
        %1595 = vmatprep.subr.bf16.mxu0 0
        %1596 = vmatpush1.bf16.msra.mxu0 0
        %1597 = vmatprep.subr.bf16.mxu0 0
        %1598 = vmatpush1.bf16.msra.mxu0 0
        %1599 = vmatprep.subr.bf16.mxu0 0
        %1600 = vmatpush1.bf16.msra.mxu0 0
        %1601 = vmatprep.subr.bf16.mxu0 0
        %1602 = vmatpush1.bf16.msra.mxu0 0
        %1603 = vmatprep.subr.bf16.mxu0 0
        %1604 = vmatpush1.bf16.msra.mxu0 0
        %1605 = vmatprep.subr.bf16.mxu0 0
        %1606 = vmatpush1.bf16.msra.mxu0 0
        %1607 = vmatprep.subr.bf16.mxu0 0
        %1608 = vmatpush1.bf16.msra.mxu0 0
        %1609 = vmatprep.subr.bf16.mxu0 0
        %1610 = vmatpush1.bf16.msra.mxu0 0
        %1611 = vmatprep.subr.bf16.mxu0 0
        %1612 = vmatpush1.bf16.msra.mxu0 0
        %1613 = vmatprep.mubr.bf16.mxu0 0
        %1614 = vmatmul.mubr.bf16.gmra.mrb[0].mxu0 %v1579
        %v1615 = vpop.f32.mrb[0].mxu0
        %v1616 = vadd.f32 0.0, %v1615
        %v1617 = vpop.f32.mrb[0].mxu0
        %v1618 = vpop.f32.mrb[0].mxu0
        %v1619 = vadd.f32 0.0, %v1618
        %v1620 = vpop.f32.mrb[0].mxu0
        %1621 = vdwg.mxu0
        %1622 = vrot.lane.b32.xlu0 %v420, 60
        %v1623 = vpop.permute.xlu0 %1622
        %v1626 = vsel %vm522, %v1574, 0
        %1628 = vmatprep.subr.bf16.mxu0 0
        %1629 = vmatpush1.bf16.msra.mxu0 %v1623
        %1630 = vmatprep.subr.bf16.mxu0 0
        %1631 = vmatpush1.bf16.msra.mxu0 0
        %1632 = vmatprep.subr.bf16.mxu0 0
        %1633 = vmatpush1.bf16.msra.mxu0 0
        %1634 = vmatprep.subr.bf16.mxu0 0
        %1635 = vmatpush1.bf16.msra.mxu0 0
        %1636 = vmatprep.subr.bf16.mxu0 0
        %1637 = vmatpush1.bf16.msra.mxu0 0
        %1638 = vmatprep.subr.bf16.mxu0 0
        %1639 = vmatpush1.bf16.msra.mxu0 0
        %1640 = vmatprep.subr.bf16.mxu0 0
        %1641 = vmatpush1.bf16.msra.mxu0 0
        %1642 = vmatprep.subr.bf16.mxu0 0
        %1643 = vmatpush1.bf16.msra.mxu0 0
        %1644 = vmatprep.subr.bf16.mxu0 0
        %1645 = vmatpush1.bf16.msra.mxu0 0
        %1646 = vmatprep.subr.bf16.mxu0 0
        %1647 = vmatpush1.bf16.msra.mxu0 0
        %1648 = vmatprep.subr.bf16.mxu0 0
        %1649 = vmatpush1.bf16.msra.mxu0 0
        %1650 = vmatprep.subr.bf16.mxu0 0
        %1651 = vmatpush1.bf16.msra.mxu0 0
        %1652 = vmatprep.subr.bf16.mxu0 0
        %1653 = vmatpush1.bf16.msra.mxu0 0
        %1654 = vmatprep.subr.bf16.mxu0 0
        %1655 = vmatpush1.bf16.msra.mxu0 0
        %1656 = vmatprep.subr.bf16.mxu0 0
        %1657 = vmatpush1.bf16.msra.mxu0 0
        %1658 = vmatprep.subr.bf16.mxu0 0
        %1659 = vmatpush1.bf16.msra.mxu0 0
        %1660 = vmatprep.mubr.bf16.mxu0 0
        %1661 = vmatmul.mubr.bf16.gmra.mrb[0].mxu0 %v1626
        %v1662 = vpop.f32.mrb[0].mxu0
        %v1663 = vadd.f32 0.0, %v1662
        %v1664 = vpop.f32.mrb[0].mxu0
        %v1665 = vpop.f32.mrb[0].mxu0
        %v1666 = vadd.f32 0.0, %v1665
        %v1667 = vpop.f32.mrb[0].mxu0
        %1668 = vdwg.mxu0
        %1669 = vrot.lane.b32.xlu0 %v419, 120
        %v1670 = vpop.permute.xlu0 %1669
        %1671 = vrot.lane.b32.xlu0 %v419, 88
        %v1672 = vpop.permute.xlu0 %1671
        %v1674 = vsel %vm424, %v1670, 0
        %v1677 = vsel %vm424, %v1672, 0
        %1679 = vmatprep.subr.bf16.mxu0 0
        %1680 = vmatpush1.bf16.xpose.msra.mxu0 %v1677
        %1681 = vmatprep.subr.bf16.mxu0 0
        %1682 = vmatpush1.bf16.xpose.msra.mxu0 0
        %1683 = vmatprep.subr.bf16.mxu0 0
        %1684 = vmatpush1.bf16.xpose.msra.mxu0 0
        %1685 = vmatprep.subr.bf16.mxu0 0
        %1686 = vmatpush1.bf16.xpose.msra.mxu0 0
        %1687 = vmatprep.subr.bf16.mxu0 0
        %1688 = vmatpush1.bf16.xpose.msra.mxu0 0
        %1689 = vmatprep.subr.bf16.mxu0 0
        %1690 = vmatpush1.bf16.xpose.msra.mxu0 0
        %1691 = vmatprep.subr.bf16.mxu0 0
        %1692 = vmatpush1.bf16.xpose.msra.mxu0 0
        %1693 = vmatprep.subr.bf16.mxu0 0
        %1694 = vmatpush1.bf16.xpose.msra.mxu0 0
        %1695 = vmatprep.subr.bf16.mxu0 0
        %1696 = vmatpush1.bf16.xpose.msra.mxu0 0
        %1697 = vmatprep.subr.bf16.mxu0 0
        %1698 = vmatpush1.bf16.xpose.msra.mxu0 0
        %1699 = vmatprep.subr.bf16.mxu0 0
        %1700 = vmatpush1.bf16.xpose.msra.mxu0 0
        %1701 = vmatprep.subr.bf16.mxu0 0
        %1702 = vmatpush1.bf16.xpose.msra.mxu0 0
        %1703 = vmatprep.subr.bf16.mxu0 0
        %1704 = vmatpush1.bf16.xpose.msra.mxu0 0
        %1705 = vmatprep.subr.bf16.mxu0 0
        %1706 = vmatpush1.bf16.xpose.msra.mxu0 0
        %1707 = vmatprep.subr.bf16.mxu0 0
        %1708 = vmatpush1.bf16.xpose.msra.mxu0 0
        %1709 = vmatprep.subr.bf16.mxu0 0
        %1710 = vmatpush1.bf16.xpose.msra.mxu0 0
        %1711 = vmatprep.mubr.bf16.mxu0 0
        %1712 = vmatmul.mubr.bf16.gmra.mrb[0].mxu0 %v1674
        %v1713 = vpop.f32.mrb[0].mxu0
        %v1714 = vadd.f32 0.0, %v1713
        %v1715 = vpop.f32.mrb[0].mxu0
        %v1716 = vpop.f32.mrb[0].mxu0
        %v1717 = vadd.f32 0.0, %v1716
        %v1718 = vpop.f32.mrb[0].mxu0
        %1719 = vdwg.mxu0
        %1720 = vrot.lane.b32.xlu0 %v420, 120
        %v1721 = vpop.permute.xlu0 %1720
        %1722 = vrot.lane.b32.xlu0 %v420, 88
        %v1723 = vpop.permute.xlu0 %1722
        %v1725 = vsel %vm424, %v1721, 0
        %v1728 = vsel %vm424, %v1723, 0
        %1730 = vmatprep.subr.bf16.mxu0 0
        %1731 = vmatpush1.bf16.xpose.msra.mxu0 %v1728
        %1732 = vmatprep.subr.bf16.mxu0 0
        %1733 = vmatpush1.bf16.xpose.msra.mxu0 0
        %1734 = vmatprep.subr.bf16.mxu0 0
        %1735 = vmatpush1.bf16.xpose.msra.mxu0 0
        %1736 = vmatprep.subr.bf16.mxu0 0
        %1737 = vmatpush1.bf16.xpose.msra.mxu0 0
        %1738 = vmatprep.subr.bf16.mxu0 0
        %1739 = vmatpush1.bf16.xpose.msra.mxu0 0
        %1740 = vmatprep.subr.bf16.mxu0 0
        %1741 = vmatpush1.bf16.xpose.msra.mxu0 0
        %1742 = vmatprep.subr.bf16.mxu0 0
        %1743 = vmatpush1.bf16.xpose.msra.mxu0 0
        %1744 = vmatprep.subr.bf16.mxu0 0
        %1745 = vmatpush1.bf16.xpose.msra.mxu0 0
        %1746 = vmatprep.subr.bf16.mxu0 0
        %1747 = vmatpush1.bf16.xpose.msra.mxu0 0
        %1748 = vmatprep.subr.bf16.mxu0 0
        %1749 = vmatpush1.bf16.xpose.msra.mxu0 0
        %1750 = vmatprep.subr.bf16.mxu0 0
        %1751 = vmatpush1.bf16.xpose.msra.mxu0 0
        %1752 = vmatprep.subr.bf16.mxu0 0
        %1753 = vmatpush1.bf16.xpose.msra.mxu0 0
        %1754 = vmatprep.subr.bf16.mxu0 0
        %1755 = vmatpush1.bf16.xpose.msra.mxu0 0
        %1756 = vmatprep.subr.bf16.mxu0 0
        %1757 = vmatpush1.bf16.xpose.msra.mxu0 0
        %1758 = vmatprep.subr.bf16.mxu0 0
        %1759 = vmatpush1.bf16.xpose.msra.mxu0 0
        %1760 = vmatprep.subr.bf16.mxu0 0
        %1761 = vmatpush1.bf16.xpose.msra.mxu0 0
        %1762 = vmatprep.mubr.bf16.mxu0 0
        %1763 = vmatmul.mubr.bf16.gmra.mrb[0].mxu0 %v1725
        %v1764 = vpop.f32.mrb[0].mxu0
        %v1765 = vadd.f32 0.0, %v1764
        %v1766 = vpop.f32.mrb[0].mxu0
        %v1767 = vpop.f32.mrb[0].mxu0
        %v1768 = vadd.f32 0.0, %v1767
        %v1769 = vpop.f32.mrb[0].mxu0
        %1770 = vdwg.mxu0
        %v1771 = vsel %vm522, %v1714, -inf
        %1772 = vmax.xlane.f32.xlu0 %v1771
        %v1773 = vpop.xlane.xlu0 %1772
        %v1774 = vsel %vm522, %v1717, -inf
        %1775 = vmax.xlane.f32.xlu0 %v1774
        %v1776 = vpop.xlane.xlu0 %1775
        %v1777 = vsel %vm522, %v1765, -inf
        %1778 = vmax.xlane.f32.xlu0 %v1777
        %v1779 = vpop.xlane.xlu0 %1778
        %v1780 = vsel %vm522, %v1768, -inf
        %1781 = vmax.xlane.f32.xlu0 %v1780
        %v1782 = vpop.xlane.xlu0 %1781
        %v1783 = vsub.f32 %v1714, %v1773
        %v1784 = vsub.f32 %v1717, %v1776
        %v1785 = vsub.f32 %v1765, %v1779
        %v1786 = vsub.f32 %v1768, %v1782
        %v1787 = vmul.f32 %v1783, 1.442695
        %v1788 = vpow.pop %v1787
        %v1789 = vmul.f32 %v1784, 1.442695
        %v1790 = vpow.pop %v1789
        %v1791 = vmul.f32 %v1785, 1.442695
        %v1792 = vpow.pop %v1791
        %v1793 = vmul.f32 %v1786, 1.442695
        %v1794 = vpow.pop %v1793
        %v1795 = vsel %vm522, %v1788, 0.0
        %1796 = vadd.xlane.f32.xlu0 %v1795
        %v1797 = vpop.xlane.xlu0 %1796
        %v1798 = vsel %vm522, %v1790, 0.0
        %1799 = vadd.xlane.f32.xlu0 %v1798
        %v1800 = vpop.xlane.xlu0 %1799
        %v1801 = vsel %vm522, %v1792, 0.0
        %1802 = vadd.xlane.f32.xlu0 %v1801
        %v1803 = vpop.xlane.xlu0 %1802
        %v1804 = vsel %vm522, %v1794, 0.0
        %1805 = vadd.xlane.f32.xlu0 %v1804
        %v1806 = vpop.xlane.xlu0 %1805
        %v1807 = vrcp.pop %v1797
        %v1808 = vrcp.pop %v1800
        %v1809 = vrcp.pop %v1803
        %v1810 = vrcp.pop %v1806
        %v1811 = vmul.f32 %v1788, %v1807
        %v1812 = vmul.f32 %v1790, %v1808
        %v1813 = vmul.f32 %v1792, %v1809
        %v1814 = vmul.f32 %v1794, %v1810
        %v1815 = vcombine.high %v1811, 0.0
        %v1817 = vunpack.c.l.s4 1983009808
        %v1818 = vunpack.c.0.s8 %v1817
        %v1819 = vlaneseq
        %v1820 = vshrl.u32 %v1819, 7
        %v1821 = vsub.s32 %v1818, %v1820
        %v1822 = vrot.slane %v1811, %v1821
        %v1824 = vunpack.c.l.s4 1983009808
        %v1825 = vunpack.c.0.s8 %v1824
        %v1826 = vlaneseq
        %v1827 = vshrl.u32 %v1826, 7
        %v1828 = vsub.s32 %v1825, %v1827
        %v1829 = vrot.slane %v1815, %v1828
        %v1830 = vcombine.high %v1822, 0.0
        %v1832 = vunpack.c.l.s4 1934713408
        %v1833 = vunpack.c.0.s8 %v1832
        %v1834 = vlaneseq
        %v1835 = vshrl.u32 %v1834, 7
        %v1836 = vsub.s32 %v1833, %v1835
        %v1837 = vrot.slane %v1822, %v1836
        %v1839 = vunpack.c.l.s4 1934713408
        %v1840 = vunpack.c.0.s8 %v1839
        %v1841 = vlaneseq
        %v1842 = vshrl.u32 %v1841, 7
        %v1843 = vsub.s32 %v1840, %v1842
        %v1844 = vrot.slane %v1830, %v1843
        %v1845 = vcombine.high %v1829, 0.0
        %v1847 = vunpack.c.l.s4 1934713408
        %v1848 = vunpack.c.0.s8 %v1847
        %v1849 = vlaneseq
        %v1850 = vshrl.u32 %v1849, 7
        %v1851 = vsub.s32 %v1848, %v1850
        %v1852 = vrot.slane %v1829, %v1851
        %v1854 = vunpack.c.l.s4 1934713408
        %v1855 = vunpack.c.0.s8 %v1854
        %v1856 = vlaneseq
        %v1857 = vshrl.u32 %v1856, 7
        %v1858 = vsub.s32 %v1855, %v1857
        %v1859 = vrot.slane %v1845, %v1858
        %v1860 = vcombine.high %v1837, 0.0
        %v1861 = vcombine.high %v1844, 0.0
        %v1862 = vcombine.high %v1852, 0.0
        %v1863 = vcombine.high %v1859, 0.0
        %v1864 = vcombine.high %v1812, 0.0
        %v1866 = vunpack.c.l.s4 1983009808
        %v1867 = vunpack.c.0.s8 %v1866
        %v1868 = vlaneseq
        %v1869 = vshrl.u32 %v1868, 7
        %v1870 = vsub.s32 %v1867, %v1869
        %v1871 = vrot.slane %v1812, %v1870
        %v1873 = vunpack.c.l.s4 1983009808
        %v1874 = vunpack.c.0.s8 %v1873
        %v1875 = vlaneseq
        %v1876 = vshrl.u32 %v1875, 7
        %v1877 = vsub.s32 %v1874, %v1876
        %v1878 = vrot.slane %v1864, %v1877
        %v1879 = vcombine.high %v1871, 0.0
        %v1881 = vunpack.c.l.s4 1934713408
        %v1882 = vunpack.c.0.s8 %v1881
        %v1883 = vlaneseq
        %v1884 = vshrl.u32 %v1883, 7
        %v1885 = vsub.s32 %v1882, %v1884
        %v1886 = vrot.slane %v1871, %v1885
        %v1888 = vunpack.c.l.s4 1934713408
        %v1889 = vunpack.c.0.s8 %v1888
        %v1890 = vlaneseq
        %v1891 = vshrl.u32 %v1890, 7
        %v1892 = vsub.s32 %v1889, %v1891
        %v1893 = vrot.slane %v1879, %v1892
        %v1894 = vcombine.high %v1878, 0.0
        %v1896 = vunpack.c.l.s4 1934713408
        %v1897 = vunpack.c.0.s8 %v1896
        %v1898 = vlaneseq
        %v1899 = vshrl.u32 %v1898, 7
        %v1900 = vsub.s32 %v1897, %v1899
        %v1901 = vrot.slane %v1878, %v1900
        %v1903 = vunpack.c.l.s4 1934713408
        %v1904 = vunpack.c.0.s8 %v1903
        %v1905 = vlaneseq
        %v1906 = vshrl.u32 %v1905, 7
        %v1907 = vsub.s32 %v1904, %v1906
        %v1908 = vrot.slane %v1894, %v1907
        %v1909 = vcombine.high %v1886, 0.0
        %v1910 = vcombine.high %v1893, 0.0
        %v1911 = vcombine.high %v1901, 0.0
        %v1912 = vcombine.high %v1908, 0.0
        %v1913 = vcombine.high %v1813, 0.0
        %v1915 = vunpack.c.l.s4 1983009808
        %v1916 = vunpack.c.0.s8 %v1915
        %v1917 = vlaneseq
        %v1918 = vshrl.u32 %v1917, 7
        %v1919 = vsub.s32 %v1916, %v1918
        %v1920 = vrot.slane %v1813, %v1919
        %v1922 = vunpack.c.l.s4 1983009808
        %v1923 = vunpack.c.0.s8 %v1922
        %v1924 = vlaneseq
        %v1925 = vshrl.u32 %v1924, 7
        %v1926 = vsub.s32 %v1923, %v1925
        %v1927 = vrot.slane %v1913, %v1926
        %v1928 = vcombine.high %v1920, 0.0
        %v1930 = vunpack.c.l.s4 1934713408
        %v1931 = vunpack.c.0.s8 %v1930
        %v1932 = vlaneseq
        %v1933 = vshrl.u32 %v1932, 7
        %v1934 = vsub.s32 %v1931, %v1933
        %v1935 = vrot.slane %v1920, %v1934
        %v1937 = vunpack.c.l.s4 1934713408
        %v1938 = vunpack.c.0.s8 %v1937
        %v1939 = vlaneseq
        %v1940 = vshrl.u32 %v1939, 7
        %v1941 = vsub.s32 %v1938, %v1940
        %v1942 = vrot.slane %v1928, %v1941
        %v1943 = vcombine.high %v1927, 0.0
        %v1945 = vunpack.c.l.s4 1934713408
        %v1946 = vunpack.c.0.s8 %v1945
        %v1947 = vlaneseq
        %v1948 = vshrl.u32 %v1947, 7
        %v1949 = vsub.s32 %v1946, %v1948
        %v1950 = vrot.slane %v1927, %v1949
        %v1952 = vunpack.c.l.s4 1934713408
        %v1953 = vunpack.c.0.s8 %v1952
        %v1954 = vlaneseq
        %v1955 = vshrl.u32 %v1954, 7
        %v1956 = vsub.s32 %v1953, %v1955
        %v1957 = vrot.slane %v1943, %v1956
        %v1958 = vcombine.high %v1935, 0.0
        %v1959 = vcombine.high %v1942, 0.0
        %v1960 = vcombine.high %v1950, 0.0
        %v1961 = vcombine.high %v1957, 0.0
        %v1962 = vcombine.high %v1814, 0.0
        %v1964 = vunpack.c.l.s4 1983009808
        %v1965 = vunpack.c.0.s8 %v1964
        %v1966 = vlaneseq
        %v1967 = vshrl.u32 %v1966, 7
        %v1968 = vsub.s32 %v1965, %v1967
        %v1969 = vrot.slane %v1814, %v1968
        %v1971 = vunpack.c.l.s4 1983009808
        %v1972 = vunpack.c.0.s8 %v1971
        %v1973 = vlaneseq
        %v1974 = vshrl.u32 %v1973, 7
        %v1975 = vsub.s32 %v1972, %v1974
        %v1976 = vrot.slane %v1962, %v1975
        %v1977 = vcombine.high %v1969, 0.0
        %v1979 = vunpack.c.l.s4 1934713408
        %v1980 = vunpack.c.0.s8 %v1979
        %v1981 = vlaneseq
        %v1982 = vshrl.u32 %v1981, 7
        %v1983 = vsub.s32 %v1980, %v1982
        %v1984 = vrot.slane %v1969, %v1983
        %v1986 = vunpack.c.l.s4 1934713408
        %v1987 = vunpack.c.0.s8 %v1986
        %v1988 = vlaneseq
        %v1989 = vshrl.u32 %v1988, 7
        %v1990 = vsub.s32 %v1987, %v1989
        %v1991 = vrot.slane %v1977, %v1990
        %v1992 = vcombine.high %v1976, 0.0
        %v1994 = vunpack.c.l.s4 1934713408
        %v1995 = vunpack.c.0.s8 %v1994
        %v1996 = vlaneseq
        %v1997 = vshrl.u32 %v1996, 7
        %v1998 = vsub.s32 %v1995, %v1997
        %v1999 = vrot.slane %v1976, %v1998
        %v2001 = vunpack.c.l.s4 1934713408
        %v2002 = vunpack.c.0.s8 %v2001
        %v2003 = vlaneseq
        %v2004 = vshrl.u32 %v2003, 7
        %v2005 = vsub.s32 %v2002, %v2004
        %v2006 = vrot.slane %v1992, %v2005
        %v2007 = vcombine.high %v1984, 0.0
        %v2008 = vcombine.high %v1991, 0.0
        %v2009 = vcombine.high %v1999, 0.0
        %v2010 = vcombine.high %v2006, 0.0
        %2013 = vrot.lane.b32.xlu0 %v1860, 16
        %v2014 = vpop.permute.xlu0 %2013
        %2015 = vrot.lane.b32.xlu0 %v1958, 16
        %v2016 = vpop.permute.xlu0 %2015
        %2021 = vrot.lane.b32.xlu0 %v1844, 32
        %v2022 = vpop.permute.xlu0 %2021
        %2023 = vrot.lane.b32.xlu0 %v1942, 32
        %v2024 = vpop.permute.xlu0 %2023
        %2029 = vrot.lane.b32.xlu0 %v1861, 48
        %v2030 = vpop.permute.xlu0 %2029
        %2031 = vrot.lane.b32.xlu0 %v1959, 48
        %v2032 = vpop.permute.xlu0 %2031
        %2037 = vrot.lane.b32.xlu0 %v1852, 64
        %v2038 = vpop.permute.xlu0 %2037
        %2039 = vrot.lane.b32.xlu0 %v1950, 64
        %v2040 = vpop.permute.xlu0 %2039
        %2045 = vrot.lane.b32.xlu0 %v1862, 80
        %v2046 = vpop.permute.xlu0 %2045
        %2047 = vrot.lane.b32.xlu0 %v1960, 80
        %v2048 = vpop.permute.xlu0 %2047
        %2053 = vrot.lane.b32.xlu0 %v1859, 96
        %v2054 = vpop.permute.xlu0 %2053
        %2055 = vrot.lane.b32.xlu0 %v1957, 96
        %v2056 = vpop.permute.xlu0 %2055
        %2061 = vrot.lane.b32.xlu0 %v1863, 112
        %v2062 = vpop.permute.xlu0 %2061
        %2063 = vrot.lane.b32.xlu0 %v1961, 112
        %v2064 = vpop.permute.xlu0 %2063
        %2069 = vrot.lane.b32.xlu0 %v1909, 16
        %v2070 = vpop.permute.xlu0 %2069
        %2071 = vrot.lane.b32.xlu0 %v2007, 16
        %v2072 = vpop.permute.xlu0 %2071
        %2077 = vrot.lane.b32.xlu0 %v1893, 32
        %v2078 = vpop.permute.xlu0 %2077
        %2079 = vrot.lane.b32.xlu0 %v1991, 32
        %v2080 = vpop.permute.xlu0 %2079
        %2085 = vrot.lane.b32.xlu0 %v1910, 48
        %v2086 = vpop.permute.xlu0 %2085
        %2087 = vrot.lane.b32.xlu0 %v2008, 48
        %v2088 = vpop.permute.xlu0 %2087
        %2093 = vrot.lane.b32.xlu0 %v1901, 64
        %v2094 = vpop.permute.xlu0 %2093
        %2095 = vrot.lane.b32.xlu0 %v1999, 64
        %v2096 = vpop.permute.xlu0 %2095
        %2101 = vrot.lane.b32.xlu0 %v1911, 80
        %v2102 = vpop.permute.xlu0 %2101
        %2103 = vrot.lane.b32.xlu0 %v2009, 80
        %v2104 = vpop.permute.xlu0 %2103
        %2109 = vrot.lane.b32.xlu0 %v1908, 96
        %v2110 = vpop.permute.xlu0 %2109
        %2111 = vrot.lane.b32.xlu0 %v2006, 96
        %v2112 = vpop.permute.xlu0 %2111
        %2117 = vrot.lane.b32.xlu0 %v1912, 112
        %v2118 = vpop.permute.xlu0 %2117
        %2119 = vrot.lane.b32.xlu0 %v2010, 112
        %v2120 = vpop.permute.xlu0 %2119
        %v2123 = vsel %vm522, %v1837, %v2014
        %v2124 = vsel %vm522, %v1935, %v2016
        %v2125 = vsel %vm363, %v2123, %v2022
        %v2126 = vsel %vm363, %v2124, %v2024
        %v2127 = vsel %vm879, %v2125, %v2030
        %v2128 = vsel %vm879, %v2126, %v2032
        %v2129 = vsel %vm882, %v2127, %v2038
        %v2130 = vsel %vm882, %v2128, %v2040
        %v2131 = vsel %vm885, %v2129, %v2046
        %v2132 = vsel %vm885, %v2130, %v2048
        %v2133 = vsel %vm888, %v2131, %v2054
        %v2134 = vsel %vm888, %v2132, %v2056
        %v2135 = vsel %vm891, %v2133, %v2062
        %v2136 = vsel %vm891, %v2134, %v2064
        %v2137 = vsel %vm522, %v1886, %v2070
        %v2138 = vsel %vm522, %v1984, %v2072
        %v2139 = vsel %vm363, %v2137, %v2078
        %v2140 = vsel %vm363, %v2138, %v2080
        %v2141 = vsel %vm879, %v2139, %v2086
        %v2142 = vsel %vm879, %v2140, %v2088
        %v2143 = vsel %vm882, %v2141, %v2094
        %v2144 = vsel %vm882, %v2142, %v2096
        %v2145 = vsel %vm885, %v2143, %v2102
        %v2146 = vsel %vm885, %v2144, %v2104
        %v2147 = vsel %vm888, %v2145, %v2110
        %v2148 = vsel %vm888, %v2146, %v2112
        %v2149 = vsel %vm891, %v2147, %v2118
        %v2150 = vsel %vm891, %v2148, %v2120
        %v2155 = vcombine.low %v2135, %v2149
        %v2157 = vunpack.c.l.s4 1966171168
        %v2158 = vunpack.c.0.s8 %v2157
        %v2159 = vlaneseq
        %v2160 = vshrl.u32 %v2159, 7
        %v2161 = vsub.s32 %v2158, %v2160
        %v2162 = vrot.slane %v2155, %v2161
        %v2164 = vunpack.c.l.s4 1966171168
        %v2165 = vunpack.c.0.s8 %v2164
        %v2166 = vlaneseq
        %v2167 = vshrl.u32 %v2166, 7
        %v2168 = vsub.s32 %v2165, %v2167
        %v2169 = vrot.slane %v2162, %v2168
        %v2170 = vcombine.low %v2136, %v2150
        %v2172 = vunpack.c.l.s4 1966171168
        %v2173 = vunpack.c.0.s8 %v2172
        %v2174 = vlaneseq
        %v2175 = vshrl.u32 %v2174, 7
        %v2176 = vsub.s32 %v2173, %v2175
        %v2177 = vrot.slane %v2170, %v2176
        %v2179 = vunpack.c.l.s4 1966171168
        %v2180 = vunpack.c.0.s8 %v2179
        %v2181 = vlaneseq
        %v2182 = vshrl.u32 %v2181, 7
        %v2183 = vsub.s32 %v2180, %v2182
        %v2184 = vrot.slane %v2177, %v2183
        %s2187 = scalar_lea.vmem %s325, 2
        %2188 = vst.msk [vmem:[%s2187] ss:$8 sm:$0x3] %vm947, %v2169
        %2189 = vst.msk [vmem:[%s2187] ss:$8 sm:$0x0] %vm947, %v2169
        %s2190 = scalar_lea.vmem %s325, 18
        %2191 = vst.msk [vmem:[%s2190] ss:$8 sm:$0x3] %vm947, %v2184
        %2192 = vst.msk [vmem:[%s2190] ss:$8 sm:$0x0] %vm947, %v2184
        %v2193 = vpack.c.bf16 %v1812, %v1811
        %v2194 = vpack.c.bf16 %v1814, %v1813
        %2195 = vrot.lane.b32.xlu0 %v419, 56
        %v2196 = vpop.permute.xlu0 %2195
        %v2199 = vsel %vm522, %v2193, 0
        %2201 = vmatprep.subr.bf16.mxu0 0
        %2202 = vmatpush1.bf16.msra.mxu0 %v2196
        %2203 = vmatprep.subr.bf16.mxu0 0
        %2204 = vmatpush1.bf16.msra.mxu0 0
        %2205 = vmatprep.subr.bf16.mxu0 0
        %2206 = vmatpush1.bf16.msra.mxu0 0
        %2207 = vmatprep.subr.bf16.mxu0 0
        %2208 = vmatpush1.bf16.msra.mxu0 0
        %2209 = vmatprep.subr.bf16.mxu0 0
        %2210 = vmatpush1.bf16.msra.mxu0 0
        %2211 = vmatprep.subr.bf16.mxu0 0
        %2212 = vmatpush1.bf16.msra.mxu0 0
        %2213 = vmatprep.subr.bf16.mxu0 0
        %2214 = vmatpush1.bf16.msra.mxu0 0
        %2215 = vmatprep.subr.bf16.mxu0 0
        %2216 = vmatpush1.bf16.msra.mxu0 0
        %2217 = vmatprep.subr.bf16.mxu0 0
        %2218 = vmatpush1.bf16.msra.mxu0 0
        %2219 = vmatprep.subr.bf16.mxu0 0
        %2220 = vmatpush1.bf16.msra.mxu0 0
        %2221 = vmatprep.subr.bf16.mxu0 0
        %2222 = vmatpush1.bf16.msra.mxu0 0
        %2223 = vmatprep.subr.bf16.mxu0 0
        %2224 = vmatpush1.bf16.msra.mxu0 0
        %2225 = vmatprep.subr.bf16.mxu0 0
        %2226 = vmatpush1.bf16.msra.mxu0 0
        %2227 = vmatprep.subr.bf16.mxu0 0
        %2228 = vmatpush1.bf16.msra.mxu0 0
        %2229 = vmatprep.subr.bf16.mxu0 0
        %2230 = vmatpush1.bf16.msra.mxu0 0
        %2231 = vmatprep.subr.bf16.mxu0 0
        %2232 = vmatpush1.bf16.msra.mxu0 0
        %2233 = vmatprep.mubr.bf16.mxu0 0
        %2234 = vmatmul.mubr.bf16.gmra.mrb[0].mxu0 %v2199
        %v2235 = vpop.f32.mrb[0].mxu0
        %v2236 = vadd.f32 0.0, %v2235
        %v2237 = vpop.f32.mrb[0].mxu0
        %v2238 = vpop.f32.mrb[0].mxu0
        %v2239 = vadd.f32 0.0, %v2238
        %v2240 = vpop.f32.mrb[0].mxu0
        %2241 = vdwg.mxu0
        %2242 = vrot.lane.b32.xlu0 %v420, 56
        %v2243 = vpop.permute.xlu0 %2242
        %v2246 = vsel %vm522, %v2194, 0
        %2248 = vmatprep.subr.bf16.mxu0 0
        %2249 = vmatpush1.bf16.msra.mxu0 %v2243
        %2250 = vmatprep.subr.bf16.mxu0 0
        %2251 = vmatpush1.bf16.msra.mxu0 0
        %2252 = vmatprep.subr.bf16.mxu0 0
        %2253 = vmatpush1.bf16.msra.mxu0 0
        %2254 = vmatprep.subr.bf16.mxu0 0
        %2255 = vmatpush1.bf16.msra.mxu0 0
        %2256 = vmatprep.subr.bf16.mxu0 0
        %2257 = vmatpush1.bf16.msra.mxu0 0
        %2258 = vmatprep.subr.bf16.mxu0 0
        %2259 = vmatpush1.bf16.msra.mxu0 0
        %2260 = vmatprep.subr.bf16.mxu0 0
        %2261 = vmatpush1.bf16.msra.mxu0 0
        %2262 = vmatprep.subr.bf16.mxu0 0
        %2263 = vmatpush1.bf16.msra.mxu0 0
        %2264 = vmatprep.subr.bf16.mxu0 0
        %2265 = vmatpush1.bf16.msra.mxu0 0
        %2266 = vmatprep.subr.bf16.mxu0 0
        %2267 = vmatpush1.bf16.msra.mxu0 0
        %2268 = vmatprep.subr.bf16.mxu0 0
        %2269 = vmatpush1.bf16.msra.mxu0 0
        %2270 = vmatprep.subr.bf16.mxu0 0
        %2271 = vmatpush1.bf16.msra.mxu0 0
        %2272 = vmatprep.subr.bf16.mxu0 0
        %2273 = vmatpush1.bf16.msra.mxu0 0
        %2274 = vmatprep.subr.bf16.mxu0 0
        %2275 = vmatpush1.bf16.msra.mxu0 0
        %2276 = vmatprep.subr.bf16.mxu0 0
        %2277 = vmatpush1.bf16.msra.mxu0 0
        %2278 = vmatprep.subr.bf16.mxu0 0
        %2279 = vmatpush1.bf16.msra.mxu0 0
        %2280 = vmatprep.mubr.bf16.mxu0 0
        %2281 = vmatmul.mubr.bf16.gmra.mrb[0].mxu0 %v2246
        %v2282 = vpop.f32.mrb[0].mxu0
        %v2283 = vadd.f32 0.0, %v2282
        %v2284 = vpop.f32.mrb[0].mxu0
        %v2285 = vpop.f32.mrb[0].mxu0
        %v2286 = vadd.f32 0.0, %v2285
        %v2287 = vpop.f32.mrb[0].mxu0
        %2288 = vdwg.mxu0
        %2289 = vrot.lane.b32.xlu0 %v419, 116
        %v2290 = vpop.permute.xlu0 %2289
        %2291 = vrot.lane.b32.xlu0 %v419, 84
        %v2292 = vpop.permute.xlu0 %2291
        %v2294 = vsel %vm424, %v2290, 0
        %v2297 = vsel %vm424, %v2292, 0
        %2299 = vmatprep.subr.bf16.mxu0 0
        %2300 = vmatpush1.bf16.xpose.msra.mxu0 %v2297
        %2301 = vmatprep.subr.bf16.mxu0 0
        %2302 = vmatpush1.bf16.xpose.msra.mxu0 0
        %2303 = vmatprep.subr.bf16.mxu0 0
        %2304 = vmatpush1.bf16.xpose.msra.mxu0 0
        %2305 = vmatprep.subr.bf16.mxu0 0
        %2306 = vmatpush1.bf16.xpose.msra.mxu0 0
        %2307 = vmatprep.subr.bf16.mxu0 0
        %2308 = vmatpush1.bf16.xpose.msra.mxu0 0
        %2309 = vmatprep.subr.bf16.mxu0 0
        %2310 = vmatpush1.bf16.xpose.msra.mxu0 0
        %2311 = vmatprep.subr.bf16.mxu0 0
        %2312 = vmatpush1.bf16.xpose.msra.mxu0 0
        %2313 = vmatprep.subr.bf16.mxu0 0
        %2314 = vmatpush1.bf16.xpose.msra.mxu0 0
        %2315 = vmatprep.subr.bf16.mxu0 0
        %2316 = vmatpush1.bf16.xpose.msra.mxu0 0
        %2317 = vmatprep.subr.bf16.mxu0 0
        %2318 = vmatpush1.bf16.xpose.msra.mxu0 0
        %2319 = vmatprep.subr.bf16.mxu0 0
        %2320 = vmatpush1.bf16.xpose.msra.mxu0 0
        %2321 = vmatprep.subr.bf16.mxu0 0
        %2322 = vmatpush1.bf16.xpose.msra.mxu0 0
        %2323 = vmatprep.subr.bf16.mxu0 0
        %2324 = vmatpush1.bf16.xpose.msra.mxu0 0
        %2325 = vmatprep.subr.bf16.mxu0 0
        %2326 = vmatpush1.bf16.xpose.msra.mxu0 0
        %2327 = vmatprep.subr.bf16.mxu0 0
        %2328 = vmatpush1.bf16.xpose.msra.mxu0 0
        %2329 = vmatprep.subr.bf16.mxu0 0
        %2330 = vmatpush1.bf16.xpose.msra.mxu0 0
        %2331 = vmatprep.mubr.bf16.mxu0 0
        %2332 = vmatmul.mubr.bf16.gmra.mrb[0].mxu0 %v2294
        %v2333 = vpop.f32.mrb[0].mxu0
        %v2334 = vadd.f32 0.0, %v2333
        %v2335 = vpop.f32.mrb[0].mxu0
        %v2336 = vpop.f32.mrb[0].mxu0
        %v2337 = vadd.f32 0.0, %v2336
        %v2338 = vpop.f32.mrb[0].mxu0
        %2339 = vdwg.mxu0
        %2340 = vrot.lane.b32.xlu0 %v420, 116
        %v2341 = vpop.permute.xlu0 %2340
        %2342 = vrot.lane.b32.xlu0 %v420, 84
        %v2343 = vpop.permute.xlu0 %2342
        %v2345 = vsel %vm424, %v2341, 0
        %v2348 = vsel %vm424, %v2343, 0
        %2350 = vmatprep.subr.bf16.mxu0 0
        %2351 = vmatpush1.bf16.xpose.msra.mxu0 %v2348
        %2352 = vmatprep.subr.bf16.mxu0 0
        %2353 = vmatpush1.bf16.xpose.msra.mxu0 0
        %2354 = vmatprep.subr.bf16.mxu0 0
        %2355 = vmatpush1.bf16.xpose.msra.mxu0 0
        %2356 = vmatprep.subr.bf16.mxu0 0
        %2357 = vmatpush1.bf16.xpose.msra.mxu0 0
        %2358 = vmatprep.subr.bf16.mxu0 0
        %2359 = vmatpush1.bf16.xpose.msra.mxu0 0
        %2360 = vmatprep.subr.bf16.mxu0 0
        %2361 = vmatpush1.bf16.xpose.msra.mxu0 0
        %2362 = vmatprep.subr.bf16.mxu0 0
        %2363 = vmatpush1.bf16.xpose.msra.mxu0 0
        %2364 = vmatprep.subr.bf16.mxu0 0
        %2365 = vmatpush1.bf16.xpose.msra.mxu0 0
        %2366 = vmatprep.subr.bf16.mxu0 0
        %2367 = vmatpush1.bf16.xpose.msra.mxu0 0
        %2368 = vmatprep.subr.bf16.mxu0 0
        %2369 = vmatpush1.bf16.xpose.msra.mxu0 0
        %2370 = vmatprep.subr.bf16.mxu0 0
        %2371 = vmatpush1.bf16.xpose.msra.mxu0 0
        %2372 = vmatprep.subr.bf16.mxu0 0
        %2373 = vmatpush1.bf16.xpose.msra.mxu0 0
        %2374 = vmatprep.subr.bf16.mxu0 0
        %2375 = vmatpush1.bf16.xpose.msra.mxu0 0
        %2376 = vmatprep.subr.bf16.mxu0 0
        %2377 = vmatpush1.bf16.xpose.msra.mxu0 0
        %2378 = vmatprep.subr.bf16.mxu0 0
        %2379 = vmatpush1.bf16.xpose.msra.mxu0 0
        %2380 = vmatprep.subr.bf16.mxu0 0
        %2381 = vmatpush1.bf16.xpose.msra.mxu0 0
        %2382 = vmatprep.mubr.bf16.mxu0 0
        %2383 = vmatmul.mubr.bf16.gmra.mrb[0].mxu0 %v2345
        %v2384 = vpop.f32.mrb[0].mxu0
        %v2385 = vadd.f32 0.0, %v2384
        %v2386 = vpop.f32.mrb[0].mxu0
        %v2387 = vpop.f32.mrb[0].mxu0
        %v2388 = vadd.f32 0.0, %v2387
        %v2389 = vpop.f32.mrb[0].mxu0
        %2390 = vdwg.mxu0
        %v2391 = vsel %vm522, %v2334, -inf
        %2392 = vmax.xlane.f32.xlu0 %v2391
        %v2393 = vpop.xlane.xlu0 %2392
        %v2394 = vsel %vm522, %v2337, -inf
        %2395 = vmax.xlane.f32.xlu0 %v2394
        %v2396 = vpop.xlane.xlu0 %2395
        %v2397 = vsel %vm522, %v2385, -inf
        %2398 = vmax.xlane.f32.xlu0 %v2397
        %v2399 = vpop.xlane.xlu0 %2398
        %v2400 = vsel %vm522, %v2388, -inf
        %2401 = vmax.xlane.f32.xlu0 %v2400
        %v2402 = vpop.xlane.xlu0 %2401
        %v2403 = vsub.f32 %v2334, %v2393
        %v2404 = vsub.f32 %v2337, %v2396
        %v2405 = vsub.f32 %v2385, %v2399
        %v2406 = vsub.f32 %v2388, %v2402
        %v2407 = vmul.f32 %v2403, 1.442695
        %v2408 = vpow.pop %v2407
        %v2409 = vmul.f32 %v2404, 1.442695
        %v2410 = vpow.pop %v2409
        %v2411 = vmul.f32 %v2405, 1.442695
        %v2412 = vpow.pop %v2411
        %v2413 = vmul.f32 %v2406, 1.442695
        %v2414 = vpow.pop %v2413
        %v2415 = vsel %vm522, %v2408, 0.0
        %2416 = vadd.xlane.f32.xlu0 %v2415
        %v2417 = vpop.xlane.xlu0 %2416
        %v2418 = vsel %vm522, %v2410, 0.0
        %2419 = vadd.xlane.f32.xlu0 %v2418
        %v2420 = vpop.xlane.xlu0 %2419
        %v2421 = vsel %vm522, %v2412, 0.0
        %2422 = vadd.xlane.f32.xlu0 %v2421
        %v2423 = vpop.xlane.xlu0 %2422
        %v2424 = vsel %vm522, %v2414, 0.0
        %2425 = vadd.xlane.f32.xlu0 %v2424
        %v2426 = vpop.xlane.xlu0 %2425
        %v2427 = vrcp.pop %v2417
        %v2428 = vrcp.pop %v2420
        %v2429 = vrcp.pop %v2423
        %v2430 = vrcp.pop %v2426
        %v2431 = vmul.f32 %v2408, %v2427
        %v2432 = vmul.f32 %v2410, %v2428
        %v2433 = vmul.f32 %v2412, %v2429
        %v2434 = vmul.f32 %v2414, %v2430
        %v2435 = vcombine.high %v2431, 0.0
        %v2437 = vunpack.c.l.s4 1983009808
        %v2438 = vunpack.c.0.s8 %v2437
        %v2439 = vlaneseq
        %v2440 = vshrl.u32 %v2439, 7
        %v2441 = vsub.s32 %v2438, %v2440
        %v2442 = vrot.slane %v2431, %v2441
        %v2444 = vunpack.c.l.s4 1983009808
        %v2445 = vunpack.c.0.s8 %v2444
        %v2446 = vlaneseq
        %v2447 = vshrl.u32 %v2446, 7
        %v2448 = vsub.s32 %v2445, %v2447
        %v2449 = vrot.slane %v2435, %v2448
        %v2450 = vcombine.high %v2442, 0.0
        %v2452 = vunpack.c.l.s4 1934713408
        %v2453 = vunpack.c.0.s8 %v2452
        %v2454 = vlaneseq
        %v2455 = vshrl.u32 %v2454, 7
        %v2456 = vsub.s32 %v2453, %v2455
        %v2457 = vrot.slane %v2442, %v2456
        %v2459 = vunpack.c.l.s4 1934713408
        %v2460 = vunpack.c.0.s8 %v2459
        %v2461 = vlaneseq
        %v2462 = vshrl.u32 %v2461, 7
        %v2463 = vsub.s32 %v2460, %v2462
        %v2464 = vrot.slane %v2450, %v2463
        %v2465 = vcombine.high %v2449, 0.0
        %v2467 = vunpack.c.l.s4 1934713408
        %v2468 = vunpack.c.0.s8 %v2467
        %v2469 = vlaneseq
        %v2470 = vshrl.u32 %v2469, 7
        %v2471 = vsub.s32 %v2468, %v2470
        %v2472 = vrot.slane %v2449, %v2471
        %v2474 = vunpack.c.l.s4 1934713408
        %v2475 = vunpack.c.0.s8 %v2474
        %v2476 = vlaneseq
        %v2477 = vshrl.u32 %v2476, 7
        %v2478 = vsub.s32 %v2475, %v2477
        %v2479 = vrot.slane %v2465, %v2478
        %v2480 = vcombine.high %v2457, 0.0
        %v2481 = vcombine.high %v2464, 0.0
        %v2482 = vcombine.high %v2472, 0.0
        %v2483 = vcombine.high %v2479, 0.0
        %v2484 = vcombine.high %v2432, 0.0
        %v2486 = vunpack.c.l.s4 1983009808
        %v2487 = vunpack.c.0.s8 %v2486
        %v2488 = vlaneseq
        %v2489 = vshrl.u32 %v2488, 7
        %v2490 = vsub.s32 %v2487, %v2489
        %v2491 = vrot.slane %v2432, %v2490
        %v2493 = vunpack.c.l.s4 1983009808
        %v2494 = vunpack.c.0.s8 %v2493
        %v2495 = vlaneseq
        %v2496 = vshrl.u32 %v2495, 7
        %v2497 = vsub.s32 %v2494, %v2496
        %v2498 = vrot.slane %v2484, %v2497
        %v2499 = vcombine.high %v2491, 0.0
        %v2501 = vunpack.c.l.s4 1934713408
        %v2502 = vunpack.c.0.s8 %v2501
        %v2503 = vlaneseq
        %v2504 = vshrl.u32 %v2503, 7
        %v2505 = vsub.s32 %v2502, %v2504
        %v2506 = vrot.slane %v2491, %v2505
        %v2508 = vunpack.c.l.s4 1934713408
        %v2509 = vunpack.c.0.s8 %v2508
        %v2510 = vlaneseq
        %v2511 = vshrl.u32 %v2510, 7
        %v2512 = vsub.s32 %v2509, %v2511
        %v2513 = vrot.slane %v2499, %v2512
        %v2514 = vcombine.high %v2498, 0.0
        %v2516 = vunpack.c.l.s4 1934713408
        %v2517 = vunpack.c.0.s8 %v2516
        %v2518 = vlaneseq
        %v2519 = vshrl.u32 %v2518, 7
        %v2520 = vsub.s32 %v2517, %v2519
        %v2521 = vrot.slane %v2498, %v2520
        %v2523 = vunpack.c.l.s4 1934713408
        %v2524 = vunpack.c.0.s8 %v2523
        %v2525 = vlaneseq
        %v2526 = vshrl.u32 %v2525, 7
        %v2527 = vsub.s32 %v2524, %v2526
        %v2528 = vrot.slane %v2514, %v2527
        %v2529 = vcombine.high %v2506, 0.0
        %v2530 = vcombine.high %v2513, 0.0
        %v2531 = vcombine.high %v2521, 0.0
        %v2532 = vcombine.high %v2528, 0.0
        %v2533 = vcombine.high %v2433, 0.0
        %v2535 = vunpack.c.l.s4 1983009808
        %v2536 = vunpack.c.0.s8 %v2535
        %v2537 = vlaneseq
        %v2538 = vshrl.u32 %v2537, 7
        %v2539 = vsub.s32 %v2536, %v2538
        %v2540 = vrot.slane %v2433, %v2539
        %v2542 = vunpack.c.l.s4 1983009808
        %v2543 = vunpack.c.0.s8 %v2542
        %v2544 = vlaneseq
        %v2545 = vshrl.u32 %v2544, 7
        %v2546 = vsub.s32 %v2543, %v2545
        %v2547 = vrot.slane %v2533, %v2546
        %v2548 = vcombine.high %v2540, 0.0
        %v2550 = vunpack.c.l.s4 1934713408
        %v2551 = vunpack.c.0.s8 %v2550
        %v2552 = vlaneseq
        %v2553 = vshrl.u32 %v2552, 7
        %v2554 = vsub.s32 %v2551, %v2553
        %v2555 = vrot.slane %v2540, %v2554
        %v2557 = vunpack.c.l.s4 1934713408
        %v2558 = vunpack.c.0.s8 %v2557
        %v2559 = vlaneseq
        %v2560 = vshrl.u32 %v2559, 7
        %v2561 = vsub.s32 %v2558, %v2560
        %v2562 = vrot.slane %v2548, %v2561
        %v2563 = vcombine.high %v2547, 0.0
        %v2565 = vunpack.c.l.s4 1934713408
        %v2566 = vunpack.c.0.s8 %v2565
        %v2567 = vlaneseq
        %v2568 = vshrl.u32 %v2567, 7
        %v2569 = vsub.s32 %v2566, %v2568
        %v2570 = vrot.slane %v2547, %v2569
        %v2572 = vunpack.c.l.s4 1934713408
        %v2573 = vunpack.c.0.s8 %v2572
        %v2574 = vlaneseq
        %v2575 = vshrl.u32 %v2574, 7
        %v2576 = vsub.s32 %v2573, %v2575
        %v2577 = vrot.slane %v2563, %v2576
        %v2578 = vcombine.high %v2555, 0.0
        %v2579 = vcombine.high %v2562, 0.0
        %v2580 = vcombine.high %v2570, 0.0
        %v2581 = vcombine.high %v2577, 0.0
        %v2582 = vcombine.high %v2434, 0.0
        %v2584 = vunpack.c.l.s4 1983009808
        %v2585 = vunpack.c.0.s8 %v2584
        %v2586 = vlaneseq
        %v2587 = vshrl.u32 %v2586, 7
        %v2588 = vsub.s32 %v2585, %v2587
        %v2589 = vrot.slane %v2434, %v2588
        %v2591 = vunpack.c.l.s4 1983009808
        %v2592 = vunpack.c.0.s8 %v2591
        %v2593 = vlaneseq
        %v2594 = vshrl.u32 %v2593, 7
        %v2595 = vsub.s32 %v2592, %v2594
        %v2596 = vrot.slane %v2582, %v2595
        %v2597 = vcombine.high %v2589, 0.0
        %v2599 = vunpack.c.l.s4 1934713408
        %v2600 = vunpack.c.0.s8 %v2599
        %v2601 = vlaneseq
        %v2602 = vshrl.u32 %v2601, 7
        %v2603 = vsub.s32 %v2600, %v2602
        %v2604 = vrot.slane %v2589, %v2603
        %v2606 = vunpack.c.l.s4 1934713408
        %v2607 = vunpack.c.0.s8 %v2606
        %v2608 = vlaneseq
        %v2609 = vshrl.u32 %v2608, 7
        %v2610 = vsub.s32 %v2607, %v2609
        %v2611 = vrot.slane %v2597, %v2610
        %v2612 = vcombine.high %v2596, 0.0
        %v2614 = vunpack.c.l.s4 1934713408
        %v2615 = vunpack.c.0.s8 %v2614
        %v2616 = vlaneseq
        %v2617 = vshrl.u32 %v2616, 7
        %v2618 = vsub.s32 %v2615, %v2617
        %v2619 = vrot.slane %v2596, %v2618
        %v2621 = vunpack.c.l.s4 1934713408
        %v2622 = vunpack.c.0.s8 %v2621
        %v2623 = vlaneseq
        %v2624 = vshrl.u32 %v2623, 7
        %v2625 = vsub.s32 %v2622, %v2624
        %v2626 = vrot.slane %v2612, %v2625
        %v2627 = vcombine.high %v2604, 0.0
        %v2628 = vcombine.high %v2611, 0.0
        %v2629 = vcombine.high %v2619, 0.0
        %v2630 = vcombine.high %v2626, 0.0
        %2633 = vrot.lane.b32.xlu0 %v2480, 16
        %v2634 = vpop.permute.xlu0 %2633
        %2635 = vrot.lane.b32.xlu0 %v2578, 16
        %v2636 = vpop.permute.xlu0 %2635
        %2641 = vrot.lane.b32.xlu0 %v2464, 32
        %v2642 = vpop.permute.xlu0 %2641
        %2643 = vrot.lane.b32.xlu0 %v2562, 32
        %v2644 = vpop.permute.xlu0 %2643
        %2649 = vrot.lane.b32.xlu0 %v2481, 48
        %v2650 = vpop.permute.xlu0 %2649
        %2651 = vrot.lane.b32.xlu0 %v2579, 48
        %v2652 = vpop.permute.xlu0 %2651
        %2657 = vrot.lane.b32.xlu0 %v2472, 64
        %v2658 = vpop.permute.xlu0 %2657
        %2659 = vrot.lane.b32.xlu0 %v2570, 64
        %v2660 = vpop.permute.xlu0 %2659
        %2665 = vrot.lane.b32.xlu0 %v2482, 80
        %v2666 = vpop.permute.xlu0 %2665
        %2667 = vrot.lane.b32.xlu0 %v2580, 80
        %v2668 = vpop.permute.xlu0 %2667
        %2673 = vrot.lane.b32.xlu0 %v2479, 96
        %v2674 = vpop.permute.xlu0 %2673
        %2675 = vrot.lane.b32.xlu0 %v2577, 96
        %v2676 = vpop.permute.xlu0 %2675
        %2681 = vrot.lane.b32.xlu0 %v2483, 112
        %v2682 = vpop.permute.xlu0 %2681
        %2683 = vrot.lane.b32.xlu0 %v2581, 112
        %v2684 = vpop.permute.xlu0 %2683
        %2689 = vrot.lane.b32.xlu0 %v2529, 16
        %v2690 = vpop.permute.xlu0 %2689
        %2691 = vrot.lane.b32.xlu0 %v2627, 16
        %v2692 = vpop.permute.xlu0 %2691
        %2697 = vrot.lane.b32.xlu0 %v2513, 32
        %v2698 = vpop.permute.xlu0 %2697
        %2699 = vrot.lane.b32.xlu0 %v2611, 32
        %v2700 = vpop.permute.xlu0 %2699
        %2705 = vrot.lane.b32.xlu0 %v2530, 48
        %v2706 = vpop.permute.xlu0 %2705
        %2707 = vrot.lane.b32.xlu0 %v2628, 48
        %v2708 = vpop.permute.xlu0 %2707
        %2713 = vrot.lane.b32.xlu0 %v2521, 64
        %v2714 = vpop.permute.xlu0 %2713
        %2715 = vrot.lane.b32.xlu0 %v2619, 64
        %v2716 = vpop.permute.xlu0 %2715
        %2721 = vrot.lane.b32.xlu0 %v2531, 80
        %v2722 = vpop.permute.xlu0 %2721
        %2723 = vrot.lane.b32.xlu0 %v2629, 80
        %v2724 = vpop.permute.xlu0 %2723
        %2729 = vrot.lane.b32.xlu0 %v2528, 96
        %v2730 = vpop.permute.xlu0 %2729
        %2731 = vrot.lane.b32.xlu0 %v2626, 96
        %v2732 = vpop.permute.xlu0 %2731
        %2737 = vrot.lane.b32.xlu0 %v2532, 112
        %v2738 = vpop.permute.xlu0 %2737
        %2739 = vrot.lane.b32.xlu0 %v2630, 112
        %v2740 = vpop.permute.xlu0 %2739
        %v2743 = vsel %vm522, %v2457, %v2634
        %v2744 = vsel %vm522, %v2555, %v2636
        %v2745 = vsel %vm363, %v2743, %v2642
        %v2746 = vsel %vm363, %v2744, %v2644
        %v2747 = vsel %vm879, %v2745, %v2650
        %v2748 = vsel %vm879, %v2746, %v2652
        %v2749 = vsel %vm882, %v2747, %v2658
        %v2750 = vsel %vm882, %v2748, %v2660
        %v2751 = vsel %vm885, %v2749, %v2666
        %v2752 = vsel %vm885, %v2750, %v2668
        %v2753 = vsel %vm888, %v2751, %v2674
        %v2754 = vsel %vm888, %v2752, %v2676
        %v2755 = vsel %vm891, %v2753, %v2682
        %v2756 = vsel %vm891, %v2754, %v2684
        %v2757 = vsel %vm522, %v2506, %v2690
        %v2758 = vsel %vm522, %v2604, %v2692
        %v2759 = vsel %vm363, %v2757, %v2698
        %v2760 = vsel %vm363, %v2758, %v2700
        %v2761 = vsel %vm879, %v2759, %v2706
        %v2762 = vsel %vm879, %v2760, %v2708
        %v2763 = vsel %vm882, %v2761, %v2714
        %v2764 = vsel %vm882, %v2762, %v2716
        %v2765 = vsel %vm885, %v2763, %v2722
        %v2766 = vsel %vm885, %v2764, %v2724
        %v2767 = vsel %vm888, %v2765, %v2730
        %v2768 = vsel %vm888, %v2766, %v2732
        %v2769 = vsel %vm891, %v2767, %v2738
        %v2770 = vsel %vm891, %v2768, %v2740
        %v2775 = vcombine.low %v2755, %v2769
        %v2777 = vunpack.c.l.s4 1966171168
        %v2778 = vunpack.c.0.s8 %v2777
        %v2779 = vlaneseq
        %v2780 = vshrl.u32 %v2779, 7
        %v2781 = vsub.s32 %v2778, %v2780
        %v2782 = vrot.slane %v2775, %v2781
        %v2784 = vunpack.c.l.s4 1966171168
        %v2785 = vunpack.c.0.s8 %v2784
        %v2786 = vlaneseq
        %v2787 = vshrl.u32 %v2786, 7
        %v2788 = vsub.s32 %v2785, %v2787
        %v2789 = vrot.slane %v2782, %v2788
        %v2790 = vcombine.low %v2756, %v2770
        %v2792 = vunpack.c.l.s4 1966171168
        %v2793 = vunpack.c.0.s8 %v2792
        %v2794 = vlaneseq
        %v2795 = vshrl.u32 %v2794, 7
        %v2796 = vsub.s32 %v2793, %v2795
        %v2797 = vrot.slane %v2790, %v2796
        %v2799 = vunpack.c.l.s4 1966171168
        %v2800 = vunpack.c.0.s8 %v2799
        %v2801 = vlaneseq
        %v2802 = vshrl.u32 %v2801, 7
        %v2803 = vsub.s32 %v2800, %v2802
        %v2804 = vrot.slane %v2797, %v2803
        %s2807 = scalar_lea.vmem %s325, 3
        %2808 = vst.msk [vmem:[%s2807] ss:$8 sm:$0x3] %vm947, %v2789
        %2809 = vst.msk [vmem:[%s2807] ss:$8 sm:$0x0] %vm947, %v2789
        %s2810 = scalar_lea.vmem %s325, 19
        %2811 = vst.msk [vmem:[%s2810] ss:$8 sm:$0x3] %vm947, %v2804
        %2812 = vst.msk [vmem:[%s2810] ss:$8 sm:$0x0] %vm947, %v2804
        %v2813 = vpack.c.bf16 %v2432, %v2431
        %v2814 = vpack.c.bf16 %v2434, %v2433
        %2815 = vrot.lane.b32.xlu0 %v419, 52
        %v2816 = vpop.permute.xlu0 %2815
        %v2819 = vsel %vm522, %v2813, 0
        %2821 = vmatprep.subr.bf16.mxu0 0
        %2822 = vmatpush1.bf16.msra.mxu0 %v2816
        %2823 = vmatprep.subr.bf16.mxu0 0
        %2824 = vmatpush1.bf16.msra.mxu0 0
        %2825 = vmatprep.subr.bf16.mxu0 0
        %2826 = vmatpush1.bf16.msra.mxu0 0
        %2827 = vmatprep.subr.bf16.mxu0 0
        %2828 = vmatpush1.bf16.msra.mxu0 0
        %2829 = vmatprep.subr.bf16.mxu0 0
        %2830 = vmatpush1.bf16.msra.mxu0 0
        %2831 = vmatprep.subr.bf16.mxu0 0
        %2832 = vmatpush1.bf16.msra.mxu0 0
        %2833 = vmatprep.subr.bf16.mxu0 0
        %2834 = vmatpush1.bf16.msra.mxu0 0
        %2835 = vmatprep.subr.bf16.mxu0 0
        %2836 = vmatpush1.bf16.msra.mxu0 0
        %2837 = vmatprep.subr.bf16.mxu0 0
        %2838 = vmatpush1.bf16.msra.mxu0 0
        %2839 = vmatprep.subr.bf16.mxu0 0
        %2840 = vmatpush1.bf16.msra.mxu0 0
        %2841 = vmatprep.subr.bf16.mxu0 0
        %2842 = vmatpush1.bf16.msra.mxu0 0
        %2843 = vmatprep.subr.bf16.mxu0 0
        %2844 = vmatpush1.bf16.msra.mxu0 0
        %2845 = vmatprep.subr.bf16.mxu0 0
        %2846 = vmatpush1.bf16.msra.mxu0 0
        %2847 = vmatprep.subr.bf16.mxu0 0
        %2848 = vmatpush1.bf16.msra.mxu0 0
        %2849 = vmatprep.subr.bf16.mxu0 0
        %2850 = vmatpush1.bf16.msra.mxu0 0
        %2851 = vmatprep.subr.bf16.mxu0 0
        %2852 = vmatpush1.bf16.msra.mxu0 0
        %2853 = vmatprep.mubr.bf16.mxu0 0
        %2854 = vmatmul.mubr.bf16.gmra.mrb[0].mxu0 %v2819
        %v2855 = vpop.f32.mrb[0].mxu0
        %v2856 = vadd.f32 0.0, %v2855
        %v2857 = vpop.f32.mrb[0].mxu0
        %v2858 = vpop.f32.mrb[0].mxu0
        %v2859 = vadd.f32 0.0, %v2858
        %v2860 = vpop.f32.mrb[0].mxu0
        %2861 = vdwg.mxu0
        %2862 = vrot.lane.b32.xlu0 %v420, 52
        %v2863 = vpop.permute.xlu0 %2862
        %v2866 = vsel %vm522, %v2814, 0
        %2868 = vmatprep.subr.bf16.mxu0 0
        %2869 = vmatpush1.bf16.msra.mxu0 %v2863
        %2870 = vmatprep.subr.bf16.mxu0 0
        %2871 = vmatpush1.bf16.msra.mxu0 0
        %2872 = vmatprep.subr.bf16.mxu0 0
        %2873 = vmatpush1.bf16.msra.mxu0 0
        %2874 = vmatprep.subr.bf16.mxu0 0
        %2875 = vmatpush1.bf16.msra.mxu0 0
        %2876 = vmatprep.subr.bf16.mxu0 0
        %2877 = vmatpush1.bf16.msra.mxu0 0
        %2878 = vmatprep.subr.bf16.mxu0 0
        %2879 = vmatpush1.bf16.msra.mxu0 0
        %2880 = vmatprep.subr.bf16.mxu0 0
        %2881 = vmatpush1.bf16.msra.mxu0 0
        %2882 = vmatprep.subr.bf16.mxu0 0
        %2883 = vmatpush1.bf16.msra.mxu0 0
        %2884 = vmatprep.subr.bf16.mxu0 0
        %2885 = vmatpush1.bf16.msra.mxu0 0
        %2886 = vmatprep.subr.bf16.mxu0 0
        %2887 = vmatpush1.bf16.msra.mxu0 0
        %2888 = vmatprep.subr.bf16.mxu0 0
        %2889 = vmatpush1.bf16.msra.mxu0 0
        %2890 = vmatprep.subr.bf16.mxu0 0
        %2891 = vmatpush1.bf16.msra.mxu0 0
        %2892 = vmatprep.subr.bf16.mxu0 0
        %2893 = vmatpush1.bf16.msra.mxu0 0
        %2894 = vmatprep.subr.bf16.mxu0 0
        %2895 = vmatpush1.bf16.msra.mxu0 0
        %2896 = vmatprep.subr.bf16.mxu0 0
        %2897 = vmatpush1.bf16.msra.mxu0 0
        %2898 = vmatprep.subr.bf16.mxu0 0
        %2899 = vmatpush1.bf16.msra.mxu0 0
        %2900 = vmatprep.mubr.bf16.mxu0 0
        %2901 = vmatmul.mubr.bf16.gmra.mrb[0].mxu0 %v2866
        %v2902 = vpop.f32.mrb[0].mxu0
        %v2903 = vadd.f32 0.0, %v2902
        %v2904 = vpop.f32.mrb[0].mxu0
        %v2905 = vpop.f32.mrb[0].mxu0
        %v2906 = vadd.f32 0.0, %v2905
        %v2907 = vpop.f32.mrb[0].mxu0
        %2908 = vdwg.mxu0
        %2909 = vrot.lane.b32.xlu0 %v419, 112
        %v2910 = vpop.permute.xlu0 %2909
        %2911 = vrot.lane.b32.xlu0 %v419, 80
        %v2912 = vpop.permute.xlu0 %2911
        %v2914 = vsel %vm424, %v2910, 0
        %v2917 = vsel %vm424, %v2912, 0
        %2919 = vmatprep.subr.bf16.mxu0 0
        %2920 = vmatpush1.bf16.xpose.msra.mxu0 %v2917
        %2921 = vmatprep.subr.bf16.mxu0 0
        %2922 = vmatpush1.bf16.xpose.msra.mxu0 0
        %2923 = vmatprep.subr.bf16.mxu0 0
        %2924 = vmatpush1.bf16.xpose.msra.mxu0 0
        %2925 = vmatprep.subr.bf16.mxu0 0
        %2926 = vmatpush1.bf16.xpose.msra.mxu0 0
        %2927 = vmatprep.subr.bf16.mxu0 0
        %2928 = vmatpush1.bf16.xpose.msra.mxu0 0
        %2929 = vmatprep.subr.bf16.mxu0 0
        %2930 = vmatpush1.bf16.xpose.msra.mxu0 0
        %2931 = vmatprep.subr.bf16.mxu0 0
        %2932 = vmatpush1.bf16.xpose.msra.mxu0 0
        %2933 = vmatprep.subr.bf16.mxu0 0
        %2934 = vmatpush1.bf16.xpose.msra.mxu0 0
        %2935 = vmatprep.subr.bf16.mxu0 0
        %2936 = vmatpush1.bf16.xpose.msra.mxu0 0
        %2937 = vmatprep.subr.bf16.mxu0 0
        %2938 = vmatpush1.bf16.xpose.msra.mxu0 0
        %2939 = vmatprep.subr.bf16.mxu0 0
        %2940 = vmatpush1.bf16.xpose.msra.mxu0 0
        %2941 = vmatprep.subr.bf16.mxu0 0
        %2942 = vmatpush1.bf16.xpose.msra.mxu0 0
        %2943 = vmatprep.subr.bf16.mxu0 0
        %2944 = vmatpush1.bf16.xpose.msra.mxu0 0
        %2945 = vmatprep.subr.bf16.mxu0 0
        %2946 = vmatpush1.bf16.xpose.msra.mxu0 0
        %2947 = vmatprep.subr.bf16.mxu0 0
        %2948 = vmatpush1.bf16.xpose.msra.mxu0 0
        %2949 = vmatprep.subr.bf16.mxu0 0
        %2950 = vmatpush1.bf16.xpose.msra.mxu0 0
        %2951 = vmatprep.mubr.bf16.mxu0 0
        %2952 = vmatmul.mubr.bf16.gmra.mrb[0].mxu0 %v2914
        %v2953 = vpop.f32.mrb[0].mxu0
        %v2954 = vadd.f32 0.0, %v2953
        %v2955 = vpop.f32.mrb[0].mxu0
        %v2956 = vpop.f32.mrb[0].mxu0
        %v2957 = vadd.f32 0.0, %v2956
        %v2958 = vpop.f32.mrb[0].mxu0
        %2959 = vdwg.mxu0
        %2960 = vrot.lane.b32.xlu0 %v420, 112
        %v2961 = vpop.permute.xlu0 %2960
        %2962 = vrot.lane.b32.xlu0 %v420, 80
        %v2963 = vpop.permute.xlu0 %2962
        %v2965 = vsel %vm424, %v2961, 0
        %v2968 = vsel %vm424, %v2963, 0
        %2970 = vmatprep.subr.bf16.mxu0 0
        %2971 = vmatpush1.bf16.xpose.msra.mxu0 %v2968
        %2972 = vmatprep.subr.bf16.mxu0 0
        %2973 = vmatpush1.bf16.xpose.msra.mxu0 0
        %2974 = vmatprep.subr.bf16.mxu0 0
        %2975 = vmatpush1.bf16.xpose.msra.mxu0 0
        %2976 = vmatprep.subr.bf16.mxu0 0
        %2977 = vmatpush1.bf16.xpose.msra.mxu0 0
        %2978 = vmatprep.subr.bf16.mxu0 0
        %2979 = vmatpush1.bf16.xpose.msra.mxu0 0
        %2980 = vmatprep.subr.bf16.mxu0 0
        %2981 = vmatpush1.bf16.xpose.msra.mxu0 0
        %2982 = vmatprep.subr.bf16.mxu0 0
        %2983 = vmatpush1.bf16.xpose.msra.mxu0 0
        %2984 = vmatprep.subr.bf16.mxu0 0
        %2985 = vmatpush1.bf16.xpose.msra.mxu0 0
        %2986 = vmatprep.subr.bf16.mxu0 0
        %2987 = vmatpush1.bf16.xpose.msra.mxu0 0
        %2988 = vmatprep.subr.bf16.mxu0 0
        %2989 = vmatpush1.bf16.xpose.msra.mxu0 0
        %2990 = vmatprep.subr.bf16.mxu0 0
        %2991 = vmatpush1.bf16.xpose.msra.mxu0 0
        %2992 = vmatprep.subr.bf16.mxu0 0
        %2993 = vmatpush1.bf16.xpose.msra.mxu0 0
        %2994 = vmatprep.subr.bf16.mxu0 0
        %2995 = vmatpush1.bf16.xpose.msra.mxu0 0
        %2996 = vmatprep.subr.bf16.mxu0 0
        %2997 = vmatpush1.bf16.xpose.msra.mxu0 0
        %2998 = vmatprep.subr.bf16.mxu0 0
        %2999 = vmatpush1.bf16.xpose.msra.mxu0 0
        %3000 = vmatprep.subr.bf16.mxu0 0
        %3001 = vmatpush1.bf16.xpose.msra.mxu0 0
        %3002 = vmatprep.mubr.bf16.mxu0 0
        %3003 = vmatmul.mubr.bf16.gmra.mrb[0].mxu0 %v2965
        %v3004 = vpop.f32.mrb[0].mxu0
        %v3005 = vadd.f32 0.0, %v3004
        %v3006 = vpop.f32.mrb[0].mxu0
        %v3007 = vpop.f32.mrb[0].mxu0
        %v3008 = vadd.f32 0.0, %v3007
        %v3009 = vpop.f32.mrb[0].mxu0
        %3010 = vdwg.mxu0
        %v3011 = vsel %vm522, %v2954, -inf
        %3012 = vmax.xlane.f32.xlu0 %v3011
        %v3013 = vpop.xlane.xlu0 %3012
        %v3014 = vsel %vm522, %v2957, -inf
        %3015 = vmax.xlane.f32.xlu0 %v3014
        %v3016 = vpop.xlane.xlu0 %3015
        %v3017 = vsel %vm522, %v3005, -inf
        %3018 = vmax.xlane.f32.xlu0 %v3017
        %v3019 = vpop.xlane.xlu0 %3018
        %v3020 = vsel %vm522, %v3008, -inf
        %3021 = vmax.xlane.f32.xlu0 %v3020
        %v3022 = vpop.xlane.xlu0 %3021
        %v3023 = vsub.f32 %v2954, %v3013
        %v3024 = vsub.f32 %v2957, %v3016
        %v3025 = vsub.f32 %v3005, %v3019
        %v3026 = vsub.f32 %v3008, %v3022
        %v3027 = vmul.f32 %v3023, 1.442695
        %v3028 = vpow.pop %v3027
        %v3029 = vmul.f32 %v3024, 1.442695
        %v3030 = vpow.pop %v3029
        %v3031 = vmul.f32 %v3025, 1.442695
        %v3032 = vpow.pop %v3031
        %v3033 = vmul.f32 %v3026, 1.442695
        %v3034 = vpow.pop %v3033
        %v3035 = vsel %vm522, %v3028, 0.0
        %3036 = vadd.xlane.f32.xlu0 %v3035
        %v3037 = vpop.xlane.xlu0 %3036
        %v3038 = vsel %vm522, %v3030, 0.0
        %3039 = vadd.xlane.f32.xlu0 %v3038
        %v3040 = vpop.xlane.xlu0 %3039
        %v3041 = vsel %vm522, %v3032, 0.0
        %3042 = vadd.xlane.f32.xlu0 %v3041
        %v3043 = vpop.xlane.xlu0 %3042
        %v3044 = vsel %vm522, %v3034, 0.0
        %3045 = vadd.xlane.f32.xlu0 %v3044
        %v3046 = vpop.xlane.xlu0 %3045
        %v3047 = vrcp.pop %v3037
        %v3048 = vrcp.pop %v3040
        %v3049 = vrcp.pop %v3043
        %v3050 = vrcp.pop %v3046
        %v3051 = vmul.f32 %v3028, %v3047
        %v3052 = vmul.f32 %v3030, %v3048
        %v3053 = vmul.f32 %v3032, %v3049
        %v3054 = vmul.f32 %v3034, %v3050
        %v3055 = vcombine.high %v3051, 0.0
        %v3057 = vunpack.c.l.s4 1983009808
        %v3058 = vunpack.c.0.s8 %v3057
        %v3059 = vlaneseq
        %v3060 = vshrl.u32 %v3059, 7
        %v3061 = vsub.s32 %v3058, %v3060
        %v3062 = vrot.slane %v3051, %v3061
        %v3064 = vunpack.c.l.s4 1983009808
        %v3065 = vunpack.c.0.s8 %v3064
        %v3066 = vlaneseq
        %v3067 = vshrl.u32 %v3066, 7
        %v3068 = vsub.s32 %v3065, %v3067
        %v3069 = vrot.slane %v3055, %v3068
        %v3070 = vcombine.high %v3062, 0.0
        %v3072 = vunpack.c.l.s4 1934713408
        %v3073 = vunpack.c.0.s8 %v3072
        %v3074 = vlaneseq
        %v3075 = vshrl.u32 %v3074, 7
        %v3076 = vsub.s32 %v3073, %v3075
        %v3077 = vrot.slane %v3062, %v3076
        %v3079 = vunpack.c.l.s4 1934713408
        %v3080 = vunpack.c.0.s8 %v3079
        %v3081 = vlaneseq
        %v3082 = vshrl.u32 %v3081, 7
        %v3083 = vsub.s32 %v3080, %v3082
        %v3084 = vrot.slane %v3070, %v3083
        %v3085 = vcombine.high %v3069, 0.0
        %v3087 = vunpack.c.l.s4 1934713408
        %v3088 = vunpack.c.0.s8 %v3087
        %v3089 = vlaneseq
        %v3090 = vshrl.u32 %v3089, 7
        %v3091 = vsub.s32 %v3088, %v3090
        %v3092 = vrot.slane %v3069, %v3091
        %v3094 = vunpack.c.l.s4 1934713408
        %v3095 = vunpack.c.0.s8 %v3094
        %v3096 = vlaneseq
        %v3097 = vshrl.u32 %v3096, 7
        %v3098 = vsub.s32 %v3095, %v3097
        %v3099 = vrot.slane %v3085, %v3098
        %v3100 = vcombine.high %v3077, 0.0
        %v3101 = vcombine.high %v3084, 0.0
        %v3102 = vcombine.high %v3092, 0.0
        %v3103 = vcombine.high %v3099, 0.0
        %v3104 = vcombine.high %v3052, 0.0
        %v3106 = vunpack.c.l.s4 1983009808
        %v3107 = vunpack.c.0.s8 %v3106
        %v3108 = vlaneseq
        %v3109 = vshrl.u32 %v3108, 7
        %v3110 = vsub.s32 %v3107, %v3109
        %v3111 = vrot.slane %v3052, %v3110
        %v3113 = vunpack.c.l.s4 1983009808
        %v3114 = vunpack.c.0.s8 %v3113
        %v3115 = vlaneseq
        %v3116 = vshrl.u32 %v3115, 7
        %v3117 = vsub.s32 %v3114, %v3116
        %v3118 = vrot.slane %v3104, %v3117
        %v3119 = vcombine.high %v3111, 0.0
        %v3121 = vunpack.c.l.s4 1934713408
        %v3122 = vunpack.c.0.s8 %v3121
        %v3123 = vlaneseq
        %v3124 = vshrl.u32 %v3123, 7
        %v3125 = vsub.s32 %v3122, %v3124
        %v3126 = vrot.slane %v3111, %v3125
        %v3128 = vunpack.c.l.s4 1934713408
        %v3129 = vunpack.c.0.s8 %v3128
        %v3130 = vlaneseq
        %v3131 = vshrl.u32 %v3130, 7
        %v3132 = vsub.s32 %v3129, %v3131
        %v3133 = vrot.slane %v3119, %v3132
        %v3134 = vcombine.high %v3118, 0.0
        %v3136 = vunpack.c.l.s4 1934713408
        %v3137 = vunpack.c.0.s8 %v3136
        %v3138 = vlaneseq
        %v3139 = vshrl.u32 %v3138, 7
        %v3140 = vsub.s32 %v3137, %v3139
        %v3141 = vrot.slane %v3118, %v3140
        %v3143 = vunpack.c.l.s4 1934713408
        %v3144 = vunpack.c.0.s8 %v3143
        %v3145 = vlaneseq
        %v3146 = vshrl.u32 %v3145, 7
        %v3147 = vsub.s32 %v3144, %v3146
        %v3148 = vrot.slane %v3134, %v3147
        %v3149 = vcombine.high %v3126, 0.0
        %v3150 = vcombine.high %v3133, 0.0
        %v3151 = vcombine.high %v3141, 0.0
        %v3152 = vcombine.high %v3148, 0.0
        %v3153 = vcombine.high %v3053, 0.0
        %v3155 = vunpack.c.l.s4 1983009808
        %v3156 = vunpack.c.0.s8 %v3155
        %v3157 = vlaneseq
        %v3158 = vshrl.u32 %v3157, 7
        %v3159 = vsub.s32 %v3156, %v3158
        %v3160 = vrot.slane %v3053, %v3159
        %v3162 = vunpack.c.l.s4 1983009808
        %v3163 = vunpack.c.0.s8 %v3162
        %v3164 = vlaneseq
        %v3165 = vshrl.u32 %v3164, 7
        %v3166 = vsub.s32 %v3163, %v3165
        %v3167 = vrot.slane %v3153, %v3166
        %v3168 = vcombine.high %v3160, 0.0
        %v3170 = vunpack.c.l.s4 1934713408
        %v3171 = vunpack.c.0.s8 %v3170
        %v3172 = vlaneseq
        %v3173 = vshrl.u32 %v3172, 7
        %v3174 = vsub.s32 %v3171, %v3173
        %v3175 = vrot.slane %v3160, %v3174
        %v3177 = vunpack.c.l.s4 1934713408
        %v3178 = vunpack.c.0.s8 %v3177
        %v3179 = vlaneseq
        %v3180 = vshrl.u32 %v3179, 7
        %v3181 = vsub.s32 %v3178, %v3180
        %v3182 = vrot.slane %v3168, %v3181
        %v3183 = vcombine.high %v3167, 0.0
        %v3185 = vunpack.c.l.s4 1934713408
        %v3186 = vunpack.c.0.s8 %v3185
        %v3187 = vlaneseq
        %v3188 = vshrl.u32 %v3187, 7
        %v3189 = vsub.s32 %v3186, %v3188
        %v3190 = vrot.slane %v3167, %v3189
        %v3192 = vunpack.c.l.s4 1934713408
        %v3193 = vunpack.c.0.s8 %v3192
        %v3194 = vlaneseq
        %v3195 = vshrl.u32 %v3194, 7
        %v3196 = vsub.s32 %v3193, %v3195
        %v3197 = vrot.slane %v3183, %v3196
        %v3198 = vcombine.high %v3175, 0.0
        %v3199 = vcombine.high %v3182, 0.0
        %v3200 = vcombine.high %v3190, 0.0
        %v3201 = vcombine.high %v3197, 0.0
        %v3202 = vcombine.high %v3054, 0.0
        %v3204 = vunpack.c.l.s4 1983009808
        %v3205 = vunpack.c.0.s8 %v3204
        %v3206 = vlaneseq
        %v3207 = vshrl.u32 %v3206, 7
        %v3208 = vsub.s32 %v3205, %v3207
        %v3209 = vrot.slane %v3054, %v3208
        %v3211 = vunpack.c.l.s4 1983009808
        %v3212 = vunpack.c.0.s8 %v3211
        %v3213 = vlaneseq
        %v3214 = vshrl.u32 %v3213, 7
        %v3215 = vsub.s32 %v3212, %v3214
        %v3216 = vrot.slane %v3202, %v3215
        %v3217 = vcombine.high %v3209, 0.0
        %v3219 = vunpack.c.l.s4 1934713408
        %v3220 = vunpack.c.0.s8 %v3219
        %v3221 = vlaneseq
        %v3222 = vshrl.u32 %v3221, 7
        %v3223 = vsub.s32 %v3220, %v3222
        %v3224 = vrot.slane %v3209, %v3223
        %v3226 = vunpack.c.l.s4 1934713408
        %v3227 = vunpack.c.0.s8 %v3226
        %v3228 = vlaneseq
        %v3229 = vshrl.u32 %v3228, 7
        %v3230 = vsub.s32 %v3227, %v3229
        %v3231 = vrot.slane %v3217, %v3230
        %v3232 = vcombine.high %v3216, 0.0
        %v3234 = vunpack.c.l.s4 1934713408
        %v3235 = vunpack.c.0.s8 %v3234
        %v3236 = vlaneseq
        %v3237 = vshrl.u32 %v3236, 7
        %v3238 = vsub.s32 %v3235, %v3237
        %v3239 = vrot.slane %v3216, %v3238
        %v3241 = vunpack.c.l.s4 1934713408
        %v3242 = vunpack.c.0.s8 %v3241
        %v3243 = vlaneseq
        %v3244 = vshrl.u32 %v3243, 7
        %v3245 = vsub.s32 %v3242, %v3244
        %v3246 = vrot.slane %v3232, %v3245
        %v3247 = vcombine.high %v3224, 0.0
        %v3248 = vcombine.high %v3231, 0.0
        %v3249 = vcombine.high %v3239, 0.0
        %v3250 = vcombine.high %v3246, 0.0
        %3253 = vrot.lane.b32.xlu0 %v3100, 16
        %v3254 = vpop.permute.xlu0 %3253
        %3255 = vrot.lane.b32.xlu0 %v3198, 16
        %v3256 = vpop.permute.xlu0 %3255
        %3261 = vrot.lane.b32.xlu0 %v3084, 32
        %v3262 = vpop.permute.xlu0 %3261
        %3263 = vrot.lane.b32.xlu0 %v3182, 32
        %v3264 = vpop.permute.xlu0 %3263
        %3269 = vrot.lane.b32.xlu0 %v3101, 48
        %v3270 = vpop.permute.xlu0 %3269
        %3271 = vrot.lane.b32.xlu0 %v3199, 48
        %v3272 = vpop.permute.xlu0 %3271
        %3277 = vrot.lane.b32.xlu0 %v3092, 64
        %v3278 = vpop.permute.xlu0 %3277
        %3279 = vrot.lane.b32.xlu0 %v3190, 64
        %v3280 = vpop.permute.xlu0 %3279
        %3285 = vrot.lane.b32.xlu0 %v3102, 80
        %v3286 = vpop.permute.xlu0 %3285
        %3287 = vrot.lane.b32.xlu0 %v3200, 80
        %v3288 = vpop.permute.xlu0 %3287
        %3293 = vrot.lane.b32.xlu0 %v3099, 96
        %v3294 = vpop.permute.xlu0 %3293
        %3295 = vrot.lane.b32.xlu0 %v3197, 96
        %v3296 = vpop.permute.xlu0 %3295
        %3301 = vrot.lane.b32.xlu0 %v3103, 112
        %v3302 = vpop.permute.xlu0 %3301
        %3303 = vrot.lane.b32.xlu0 %v3201, 112
        %v3304 = vpop.permute.xlu0 %3303
        %3309 = vrot.lane.b32.xlu0 %v3149, 16
        %v3310 = vpop.permute.xlu0 %3309
        %3311 = vrot.lane.b32.xlu0 %v3247, 16
        %v3312 = vpop.permute.xlu0 %3311
        %3317 = vrot.lane.b32.xlu0 %v3133, 32
        %v3318 = vpop.permute.xlu0 %3317
        %3319 = vrot.lane.b32.xlu0 %v3231, 32
        %v3320 = vpop.permute.xlu0 %3319
        %3325 = vrot.lane.b32.xlu0 %v3150, 48
        %v3326 = vpop.permute.xlu0 %3325
        %3327 = vrot.lane.b32.xlu0 %v3248, 48
        %v3328 = vpop.permute.xlu0 %3327
        %3333 = vrot.lane.b32.xlu0 %v3141, 64
        %v3334 = vpop.permute.xlu0 %3333
        %3335 = vrot.lane.b32.xlu0 %v3239, 64
        %v3336 = vpop.permute.xlu0 %3335
        %3341 = vrot.lane.b32.xlu0 %v3151, 80
        %v3342 = vpop.permute.xlu0 %3341
        %3343 = vrot.lane.b32.xlu0 %v3249, 80
        %v3344 = vpop.permute.xlu0 %3343
        %3349 = vrot.lane.b32.xlu0 %v3148, 96
        %v3350 = vpop.permute.xlu0 %3349
        %3351 = vrot.lane.b32.xlu0 %v3246, 96
        %v3352 = vpop.permute.xlu0 %3351
        %3357 = vrot.lane.b32.xlu0 %v3152, 112
        %v3358 = vpop.permute.xlu0 %3357
        %3359 = vrot.lane.b32.xlu0 %v3250, 112
        %v3360 = vpop.permute.xlu0 %3359
        %v3363 = vsel %vm522, %v3077, %v3254
        %v3364 = vsel %vm522, %v3175, %v3256
        %v3365 = vsel %vm363, %v3363, %v3262
        %v3366 = vsel %vm363, %v3364, %v3264
        %v3367 = vsel %vm879, %v3365, %v3270
        %v3368 = vsel %vm879, %v3366, %v3272
        %v3369 = vsel %vm882, %v3367, %v3278
        %v3370 = vsel %vm882, %v3368, %v3280
        %v3371 = vsel %vm885, %v3369, %v3286
        %v3372 = vsel %vm885, %v3370, %v3288
        %v3373 = vsel %vm888, %v3371, %v3294
        %v3374 = vsel %vm888, %v3372, %v3296
        %v3375 = vsel %vm891, %v3373, %v3302
        %v3376 = vsel %vm891, %v3374, %v3304
        %v3377 = vsel %vm522, %v3126, %v3310
        %v3378 = vsel %vm522, %v3224, %v3312
        %v3379 = vsel %vm363, %v3377, %v3318
        %v3380 = vsel %vm363, %v3378, %v3320
        %v3381 = vsel %vm879, %v3379, %v3326
        %v3382 = vsel %vm879, %v3380, %v3328
        %v3383 = vsel %vm882, %v3381, %v3334
        %v3384 = vsel %vm882, %v3382, %v3336
        %v3385 = vsel %vm885, %v3383, %v3342
        %v3386 = vsel %vm885, %v3384, %v3344
        %v3387 = vsel %vm888, %v3385, %v3350
        %v3388 = vsel %vm888, %v3386, %v3352
        %v3389 = vsel %vm891, %v3387, %v3358
        %v3390 = vsel %vm891, %v3388, %v3360
        %v3395 = vcombine.low %v3375, %v3389
        %v3397 = vunpack.c.l.s4 1966171168
        %v3398 = vunpack.c.0.s8 %v3397
        %v3399 = vlaneseq
        %v3400 = vshrl.u32 %v3399, 7
        %v3401 = vsub.s32 %v3398, %v3400
        %v3402 = vrot.slane %v3395, %v3401
        %v3404 = vunpack.c.l.s4 1966171168
        %v3405 = vunpack.c.0.s8 %v3404
        %v3406 = vlaneseq
        %v3407 = vshrl.u32 %v3406, 7
        %v3408 = vsub.s32 %v3405, %v3407
        %v3409 = vrot.slane %v3402, %v3408
        %v3410 = vcombine.low %v3376, %v3390
        %v3412 = vunpack.c.l.s4 1966171168
        %v3413 = vunpack.c.0.s8 %v3412
        %v3414 = vlaneseq
        %v3415 = vshrl.u32 %v3414, 7
        %v3416 = vsub.s32 %v3413, %v3415
        %v3417 = vrot.slane %v3410, %v3416
        %v3419 = vunpack.c.l.s4 1966171168
        %v3420 = vunpack.c.0.s8 %v3419
        %v3421 = vlaneseq
        %v3422 = vshrl.u32 %v3421, 7
        %v3423 = vsub.s32 %v3420, %v3422
        %v3424 = vrot.slane %v3417, %v3423
        %s3427 = scalar_lea.vmem %s325, 4
        %3428 = vst.msk [vmem:[%s3427] ss:$8 sm:$0x3] %vm947, %v3409
        %3429 = vst.msk [vmem:[%s3427] ss:$8 sm:$0x0] %vm947, %v3409
        %s3430 = scalar_lea.vmem %s325, 20
        %3431 = vst.msk [vmem:[%s3430] ss:$8 sm:$0x3] %vm947, %v3424
        %3432 = vst.msk [vmem:[%s3430] ss:$8 sm:$0x0] %vm947, %v3424
        %v3433 = vpack.c.bf16 %v3052, %v3051
        %v3434 = vpack.c.bf16 %v3054, %v3053
        %3435 = vrot.lane.b32.xlu0 %v419, 48
        %v3436 = vpop.permute.xlu0 %3435
        %v3439 = vsel %vm522, %v3433, 0
        %3441 = vmatprep.subr.bf16.mxu0 0
        %3442 = vmatpush1.bf16.msra.mxu0 %v3436
        %3443 = vmatprep.subr.bf16.mxu0 0
        %3444 = vmatpush1.bf16.msra.mxu0 0
        %3445 = vmatprep.subr.bf16.mxu0 0
        %3446 = vmatpush1.bf16.msra.mxu0 0
        %3447 = vmatprep.subr.bf16.mxu0 0
        %3448 = vmatpush1.bf16.msra.mxu0 0
        %3449 = vmatprep.subr.bf16.mxu0 0
        %3450 = vmatpush1.bf16.msra.mxu0 0
        %3451 = vmatprep.subr.bf16.mxu0 0
        %3452 = vmatpush1.bf16.msra.mxu0 0
        %3453 = vmatprep.subr.bf16.mxu0 0
        %3454 = vmatpush1.bf16.msra.mxu0 0
        %3455 = vmatprep.subr.bf16.mxu0 0
        %3456 = vmatpush1.bf16.msra.mxu0 0
        %3457 = vmatprep.subr.bf16.mxu0 0
        %3458 = vmatpush1.bf16.msra.mxu0 0
        %3459 = vmatprep.subr.bf16.mxu0 0
        %3460 = vmatpush1.bf16.msra.mxu0 0
        %3461 = vmatprep.subr.bf16.mxu0 0
        %3462 = vmatpush1.bf16.msra.mxu0 0
        %3463 = vmatprep.subr.bf16.mxu0 0
        %3464 = vmatpush1.bf16.msra.mxu0 0
        %3465 = vmatprep.subr.bf16.mxu0 0
        %3466 = vmatpush1.bf16.msra.mxu0 0
        %3467 = vmatprep.subr.bf16.mxu0 0
        %3468 = vmatpush1.bf16.msra.mxu0 0
        %3469 = vmatprep.subr.bf16.mxu0 0
        %3470 = vmatpush1.bf16.msra.mxu0 0
        %3471 = vmatprep.subr.bf16.mxu0 0
        %3472 = vmatpush1.bf16.msra.mxu0 0
        %3473 = vmatprep.mubr.bf16.mxu0 0
        %3474 = vmatmul.mubr.bf16.gmra.mrb[0].mxu0 %v3439
        %v3475 = vpop.f32.mrb[0].mxu0
        %v3476 = vadd.f32 0.0, %v3475
        %v3477 = vpop.f32.mrb[0].mxu0
        %v3478 = vpop.f32.mrb[0].mxu0
        %v3479 = vadd.f32 0.0, %v3478
        %v3480 = vpop.f32.mrb[0].mxu0
        %3481 = vdwg.mxu0
        %3482 = vrot.lane.b32.xlu0 %v420, 48
        %v3483 = vpop.permute.xlu0 %3482
        %v3486 = vsel %vm522, %v3434, 0
        %3488 = vmatprep.subr.bf16.mxu0 0
        %3489 = vmatpush1.bf16.msra.mxu0 %v3483
        %3490 = vmatprep.subr.bf16.mxu0 0
        %3491 = vmatpush1.bf16.msra.mxu0 0
        %3492 = vmatprep.subr.bf16.mxu0 0
        %3493 = vmatpush1.bf16.msra.mxu0 0
        %3494 = vmatprep.subr.bf16.mxu0 0
        %3495 = vmatpush1.bf16.msra.mxu0 0
        %3496 = vmatprep.subr.bf16.mxu0 0
        %3497 = vmatpush1.bf16.msra.mxu0 0
        %3498 = vmatprep.subr.bf16.mxu0 0
        %3499 = vmatpush1.bf16.msra.mxu0 0
        %3500 = vmatprep.subr.bf16.mxu0 0
        %3501 = vmatpush1.bf16.msra.mxu0 0
        %3502 = vmatprep.subr.bf16.mxu0 0
        %3503 = vmatpush1.bf16.msra.mxu0 0
        %3504 = vmatprep.subr.bf16.mxu0 0
        %3505 = vmatpush1.bf16.msra.mxu0 0
        %3506 = vmatprep.subr.bf16.mxu0 0
        %3507 = vmatpush1.bf16.msra.mxu0 0
        %3508 = vmatprep.subr.bf16.mxu0 0
        %3509 = vmatpush1.bf16.msra.mxu0 0
        %3510 = vmatprep.subr.bf16.mxu0 0
        %3511 = vmatpush1.bf16.msra.mxu0 0
        %3512 = vmatprep.subr.bf16.mxu0 0
        %3513 = vmatpush1.bf16.msra.mxu0 0
        %3514 = vmatprep.subr.bf16.mxu0 0
        %3515 = vmatpush1.bf16.msra.mxu0 0
        %3516 = vmatprep.subr.bf16.mxu0 0
        %3517 = vmatpush1.bf16.msra.mxu0 0
        %3518 = vmatprep.subr.bf16.mxu0 0
        %3519 = vmatpush1.bf16.msra.mxu0 0
        %3520 = vmatprep.mubr.bf16.mxu0 0
        %3521 = vmatmul.mubr.bf16.gmra.mrb[0].mxu0 %v3486
        %v3522 = vpop.f32.mrb[0].mxu0
        %v3523 = vadd.f32 0.0, %v3522
        %v3524 = vpop.f32.mrb[0].mxu0
        %v3525 = vpop.f32.mrb[0].mxu0
        %v3526 = vadd.f32 0.0, %v3525
        %v3527 = vpop.f32.mrb[0].mxu0
        %3528 = vdwg.mxu0
        %3529 = vrot.lane.b32.xlu0 %v419, 108
        %v3530 = vpop.permute.xlu0 %3529
        %3531 = vrot.lane.b32.xlu0 %v419, 76
        %v3532 = vpop.permute.xlu0 %3531
        %v3534 = vsel %vm424, %v3530, 0
        %v3537 = vsel %vm424, %v3532, 0
        %3539 = vmatprep.subr.bf16.mxu0 0
        %3540 = vmatpush1.bf16.xpose.msra.mxu0 %v3537
        %3541 = vmatprep.subr.bf16.mxu0 0
        %3542 = vmatpush1.bf16.xpose.msra.mxu0 0
        %3543 = vmatprep.subr.bf16.mxu0 0
        %3544 = vmatpush1.bf16.xpose.msra.mxu0 0
        %3545 = vmatprep.subr.bf16.mxu0 0
        %3546 = vmatpush1.bf16.xpose.msra.mxu0 0
        %3547 = vmatprep.subr.bf16.mxu0 0
        %3548 = vmatpush1.bf16.xpose.msra.mxu0 0
        %3549 = vmatprep.subr.bf16.mxu0 0
        %3550 = vmatpush1.bf16.xpose.msra.mxu0 0
        %3551 = vmatprep.subr.bf16.mxu0 0
        %3552 = vmatpush1.bf16.xpose.msra.mxu0 0
        %3553 = vmatprep.subr.bf16.mxu0 0
        %3554 = vmatpush1.bf16.xpose.msra.mxu0 0
        %3555 = vmatprep.subr.bf16.mxu0 0
        %3556 = vmatpush1.bf16.xpose.msra.mxu0 0
        %3557 = vmatprep.subr.bf16.mxu0 0
        %3558 = vmatpush1.bf16.xpose.msra.mxu0 0
        %3559 = vmatprep.subr.bf16.mxu0 0
        %3560 = vmatpush1.bf16.xpose.msra.mxu0 0
        %3561 = vmatprep.subr.bf16.mxu0 0
        %3562 = vmatpush1.bf16.xpose.msra.mxu0 0
        %3563 = vmatprep.subr.bf16.mxu0 0
        %3564 = vmatpush1.bf16.xpose.msra.mxu0 0
        %3565 = vmatprep.subr.bf16.mxu0 0
        %3566 = vmatpush1.bf16.xpose.msra.mxu0 0
        %3567 = vmatprep.subr.bf16.mxu0 0
        %3568 = vmatpush1.bf16.xpose.msra.mxu0 0
        %3569 = vmatprep.subr.bf16.mxu0 0
        %3570 = vmatpush1.bf16.xpose.msra.mxu0 0
        %3571 = vmatprep.mubr.bf16.mxu0 0
        %3572 = vmatmul.mubr.bf16.gmra.mrb[0].mxu0 %v3534
        %v3573 = vpop.f32.mrb[0].mxu0
        %v3574 = vadd.f32 0.0, %v3573
        %v3575 = vpop.f32.mrb[0].mxu0
        %v3576 = vpop.f32.mrb[0].mxu0
        %v3577 = vadd.f32 0.0, %v3576
        %v3578 = vpop.f32.mrb[0].mxu0
        %3579 = vdwg.mxu0
        %3580 = vrot.lane.b32.xlu0 %v420, 108
        %v3581 = vpop.permute.xlu0 %3580
        %3582 = vrot.lane.b32.xlu0 %v420, 76
        %v3583 = vpop.permute.xlu0 %3582
        %v3585 = vsel %vm424, %v3581, 0
        %v3588 = vsel %vm424, %v3583, 0
        %3590 = vmatprep.subr.bf16.mxu0 0
        %3591 = vmatpush1.bf16.xpose.msra.mxu0 %v3588
        %3592 = vmatprep.subr.bf16.mxu0 0
        %3593 = vmatpush1.bf16.xpose.msra.mxu0 0
        %3594 = vmatprep.subr.bf16.mxu0 0
        %3595 = vmatpush1.bf16.xpose.msra.mxu0 0
        %3596 = vmatprep.subr.bf16.mxu0 0
        %3597 = vmatpush1.bf16.xpose.msra.mxu0 0
        %3598 = vmatprep.subr.bf16.mxu0 0
        %3599 = vmatpush1.bf16.xpose.msra.mxu0 0
        %3600 = vmatprep.subr.bf16.mxu0 0
        %3601 = vmatpush1.bf16.xpose.msra.mxu0 0
        %3602 = vmatprep.subr.bf16.mxu0 0
        %3603 = vmatpush1.bf16.xpose.msra.mxu0 0
        %3604 = vmatprep.subr.bf16.mxu0 0
        %3605 = vmatpush1.bf16.xpose.msra.mxu0 0
        %3606 = vmatprep.subr.bf16.mxu0 0
        %3607 = vmatpush1.bf16.xpose.msra.mxu0 0
        %3608 = vmatprep.subr.bf16.mxu0 0
        %3609 = vmatpush1.bf16.xpose.msra.mxu0 0
        %3610 = vmatprep.subr.bf16.mxu0 0
        %3611 = vmatpush1.bf16.xpose.msra.mxu0 0
        %3612 = vmatprep.subr.bf16.mxu0 0
        %3613 = vmatpush1.bf16.xpose.msra.mxu0 0
        %3614 = vmatprep.subr.bf16.mxu0 0
        %3615 = vmatpush1.bf16.xpose.msra.mxu0 0
        %3616 = vmatprep.subr.bf16.mxu0 0
        %3617 = vmatpush1.bf16.xpose.msra.mxu0 0
        %3618 = vmatprep.subr.bf16.mxu0 0
        %3619 = vmatpush1.bf16.xpose.msra.mxu0 0
        %3620 = vmatprep.subr.bf16.mxu0 0
        %3621 = vmatpush1.bf16.xpose.msra.mxu0 0
        %3622 = vmatprep.mubr.bf16.mxu0 0
        %3623 = vmatmul.mubr.bf16.gmra.mrb[0].mxu0 %v3585
        %v3624 = vpop.f32.mrb[0].mxu0
        %v3625 = vadd.f32 0.0, %v3624
        %v3626 = vpop.f32.mrb[0].mxu0
        %v3627 = vpop.f32.mrb[0].mxu0
        %v3628 = vadd.f32 0.0, %v3627
        %v3629 = vpop.f32.mrb[0].mxu0
        %3630 = vdwg.mxu0
        %v3631 = vsel %vm522, %v3574, -inf
        %3632 = vmax.xlane.f32.xlu0 %v3631
        %v3633 = vpop.xlane.xlu0 %3632
        %v3634 = vsel %vm522, %v3577, -inf
        %3635 = vmax.xlane.f32.xlu0 %v3634
        %v3636 = vpop.xlane.xlu0 %3635
        %v3637 = vsel %vm522, %v3625, -inf
        %3638 = vmax.xlane.f32.xlu0 %v3637
        %v3639 = vpop.xlane.xlu0 %3638
        %v3640 = vsel %vm522, %v3628, -inf
        %3641 = vmax.xlane.f32.xlu0 %v3640
        %v3642 = vpop.xlane.xlu0 %3641
        %v3643 = vsub.f32 %v3574, %v3633
        %v3644 = vsub.f32 %v3577, %v3636
        %v3645 = vsub.f32 %v3625, %v3639
        %v3646 = vsub.f32 %v3628, %v3642
        %v3647 = vmul.f32 %v3643, 1.442695
        %v3648 = vpow.pop %v3647
        %v3649 = vmul.f32 %v3644, 1.442695
        %v3650 = vpow.pop %v3649
        %v3651 = vmul.f32 %v3645, 1.442695
        %v3652 = vpow.pop %v3651
        %v3653 = vmul.f32 %v3646, 1.442695
        %v3654 = vpow.pop %v3653
        %v3655 = vsel %vm522, %v3648, 0.0
        %3656 = vadd.xlane.f32.xlu0 %v3655
        %v3657 = vpop.xlane.xlu0 %3656
        %v3658 = vsel %vm522, %v3650, 0.0
        %3659 = vadd.xlane.f32.xlu0 %v3658
        %v3660 = vpop.xlane.xlu0 %3659
        %v3661 = vsel %vm522, %v3652, 0.0
        %3662 = vadd.xlane.f32.xlu0 %v3661
        %v3663 = vpop.xlane.xlu0 %3662
        %v3664 = vsel %vm522, %v3654, 0.0
        %3665 = vadd.xlane.f32.xlu0 %v3664
        %v3666 = vpop.xlane.xlu0 %3665
        %v3667 = vrcp.pop %v3657
        %v3668 = vrcp.pop %v3660
        %v3669 = vrcp.pop %v3663
        %v3670 = vrcp.pop %v3666
        %v3671 = vmul.f32 %v3648, %v3667
        %v3672 = vmul.f32 %v3650, %v3668
        %v3673 = vmul.f32 %v3652, %v3669
        %v3674 = vmul.f32 %v3654, %v3670
        %v3675 = vcombine.high %v3671, 0.0
        %v3677 = vunpack.c.l.s4 1983009808
        %v3678 = vunpack.c.0.s8 %v3677
        %v3679 = vlaneseq
        %v3680 = vshrl.u32 %v3679, 7
        %v3681 = vsub.s32 %v3678, %v3680
        %v3682 = vrot.slane %v3671, %v3681
        %v3684 = vunpack.c.l.s4 1983009808
        %v3685 = vunpack.c.0.s8 %v3684
        %v3686 = vlaneseq
        %v3687 = vshrl.u32 %v3686, 7
        %v3688 = vsub.s32 %v3685, %v3687
        %v3689 = vrot.slane %v3675, %v3688
        %v3690 = vcombine.high %v3682, 0.0
        %v3692 = vunpack.c.l.s4 1934713408
        %v3693 = vunpack.c.0.s8 %v3692
        %v3694 = vlaneseq
        %v3695 = vshrl.u32 %v3694, 7
        %v3696 = vsub.s32 %v3693, %v3695
        %v3697 = vrot.slane %v3682, %v3696
        %v3699 = vunpack.c.l.s4 1934713408
        %v3700 = vunpack.c.0.s8 %v3699
        %v3701 = vlaneseq
        %v3702 = vshrl.u32 %v3701, 7
        %v3703 = vsub.s32 %v3700, %v3702
        %v3704 = vrot.slane %v3690, %v3703
        %v3705 = vcombine.high %v3689, 0.0
        %v3707 = vunpack.c.l.s4 1934713408
        %v3708 = vunpack.c.0.s8 %v3707
        %v3709 = vlaneseq
        %v3710 = vshrl.u32 %v3709, 7
        %v3711 = vsub.s32 %v3708, %v3710
        %v3712 = vrot.slane %v3689, %v3711
        %v3714 = vunpack.c.l.s4 1934713408
        %v3715 = vunpack.c.0.s8 %v3714
        %v3716 = vlaneseq
        %v3717 = vshrl.u32 %v3716, 7
        %v3718 = vsub.s32 %v3715, %v3717
        %v3719 = vrot.slane %v3705, %v3718
        %v3720 = vcombine.high %v3697, 0.0
        %v3721 = vcombine.high %v3704, 0.0
        %v3722 = vcombine.high %v3712, 0.0
        %v3723 = vcombine.high %v3719, 0.0
        %v3724 = vcombine.high %v3672, 0.0
        %v3726 = vunpack.c.l.s4 1983009808
        %v3727 = vunpack.c.0.s8 %v3726
        %v3728 = vlaneseq
        %v3729 = vshrl.u32 %v3728, 7
        %v3730 = vsub.s32 %v3727, %v3729
        %v3731 = vrot.slane %v3672, %v3730
        %v3733 = vunpack.c.l.s4 1983009808
        %v3734 = vunpack.c.0.s8 %v3733
        %v3735 = vlaneseq
        %v3736 = vshrl.u32 %v3735, 7
        %v3737 = vsub.s32 %v3734, %v3736
        %v3738 = vrot.slane %v3724, %v3737
        %v3739 = vcombine.high %v3731, 0.0
        %v3741 = vunpack.c.l.s4 1934713408
        %v3742 = vunpack.c.0.s8 %v3741
        %v3743 = vlaneseq
        %v3744 = vshrl.u32 %v3743, 7
        %v3745 = vsub.s32 %v3742, %v3744
        %v3746 = vrot.slane %v3731, %v3745
        %v3748 = vunpack.c.l.s4 1934713408
        %v3749 = vunpack.c.0.s8 %v3748
        %v3750 = vlaneseq
        %v3751 = vshrl.u32 %v3750, 7
        %v3752 = vsub.s32 %v3749, %v3751
        %v3753 = vrot.slane %v3739, %v3752
        %v3754 = vcombine.high %v3738, 0.0
        %v3756 = vunpack.c.l.s4 1934713408
        %v3757 = vunpack.c.0.s8 %v3756
        %v3758 = vlaneseq
        %v3759 = vshrl.u32 %v3758, 7
        %v3760 = vsub.s32 %v3757, %v3759
        %v3761 = vrot.slane %v3738, %v3760
        %v3763 = vunpack.c.l.s4 1934713408
        %v3764 = vunpack.c.0.s8 %v3763
        %v3765 = vlaneseq
        %v3766 = vshrl.u32 %v3765, 7
        %v3767 = vsub.s32 %v3764, %v3766
        %v3768 = vrot.slane %v3754, %v3767
        %v3769 = vcombine.high %v3746, 0.0
        %v3770 = vcombine.high %v3753, 0.0
        %v3771 = vcombine.high %v3761, 0.0
        %v3772 = vcombine.high %v3768, 0.0
        %v3773 = vcombine.high %v3673, 0.0
        %v3775 = vunpack.c.l.s4 1983009808
        %v3776 = vunpack.c.0.s8 %v3775
        %v3777 = vlaneseq
        %v3778 = vshrl.u32 %v3777, 7
        %v3779 = vsub.s32 %v3776, %v3778
        %v3780 = vrot.slane %v3673, %v3779
        %v3782 = vunpack.c.l.s4 1983009808
        %v3783 = vunpack.c.0.s8 %v3782
        %v3784 = vlaneseq
        %v3785 = vshrl.u32 %v3784, 7
        %v3786 = vsub.s32 %v3783, %v3785
        %v3787 = vrot.slane %v3773, %v3786
        %v3788 = vcombine.high %v3780, 0.0
        %v3790 = vunpack.c.l.s4 1934713408
        %v3791 = vunpack.c.0.s8 %v3790
        %v3792 = vlaneseq
        %v3793 = vshrl.u32 %v3792, 7
        %v3794 = vsub.s32 %v3791, %v3793
        %v3795 = vrot.slane %v3780, %v3794
        %v3797 = vunpack.c.l.s4 1934713408
        %v3798 = vunpack.c.0.s8 %v3797
        %v3799 = vlaneseq
        %v3800 = vshrl.u32 %v3799, 7
        %v3801 = vsub.s32 %v3798, %v3800
        %v3802 = vrot.slane %v3788, %v3801
        %v3803 = vcombine.high %v3787, 0.0
        %v3805 = vunpack.c.l.s4 1934713408
        %v3806 = vunpack.c.0.s8 %v3805
        %v3807 = vlaneseq
        %v3808 = vshrl.u32 %v3807, 7
        %v3809 = vsub.s32 %v3806, %v3808
        %v3810 = vrot.slane %v3787, %v3809
        %v3812 = vunpack.c.l.s4 1934713408
        %v3813 = vunpack.c.0.s8 %v3812
        %v3814 = vlaneseq
        %v3815 = vshrl.u32 %v3814, 7
        %v3816 = vsub.s32 %v3813, %v3815
        %v3817 = vrot.slane %v3803, %v3816
        %v3818 = vcombine.high %v3795, 0.0
        %v3819 = vcombine.high %v3802, 0.0
        %v3820 = vcombine.high %v3810, 0.0
        %v3821 = vcombine.high %v3817, 0.0
        %v3822 = vcombine.high %v3674, 0.0
        %v3824 = vunpack.c.l.s4 1983009808
        %v3825 = vunpack.c.0.s8 %v3824
        %v3826 = vlaneseq
        %v3827 = vshrl.u32 %v3826, 7
        %v3828 = vsub.s32 %v3825, %v3827
        %v3829 = vrot.slane %v3674, %v3828
        %v3831 = vunpack.c.l.s4 1983009808
        %v3832 = vunpack.c.0.s8 %v3831
        %v3833 = vlaneseq
        %v3834 = vshrl.u32 %v3833, 7
        %v3835 = vsub.s32 %v3832, %v3834
        %v3836 = vrot.slane %v3822, %v3835
        %v3837 = vcombine.high %v3829, 0.0
        %v3839 = vunpack.c.l.s4 1934713408
        %v3840 = vunpack.c.0.s8 %v3839
        %v3841 = vlaneseq
        %v3842 = vshrl.u32 %v3841, 7
        %v3843 = vsub.s32 %v3840, %v3842
        %v3844 = vrot.slane %v3829, %v3843
        %v3846 = vunpack.c.l.s4 1934713408
        %v3847 = vunpack.c.0.s8 %v3846
        %v3848 = vlaneseq
        %v3849 = vshrl.u32 %v3848, 7
        %v3850 = vsub.s32 %v3847, %v3849
        %v3851 = vrot.slane %v3837, %v3850
        %v3852 = vcombine.high %v3836, 0.0
        %v3854 = vunpack.c.l.s4 1934713408
        %v3855 = vunpack.c.0.s8 %v3854
        %v3856 = vlaneseq
        %v3857 = vshrl.u32 %v3856, 7
        %v3858 = vsub.s32 %v3855, %v3857
        %v3859 = vrot.slane %v3836, %v3858
        %v3861 = vunpack.c.l.s4 1934713408
        %v3862 = vunpack.c.0.s8 %v3861
        %v3863 = vlaneseq
        %v3864 = vshrl.u32 %v3863, 7
        %v3865 = vsub.s32 %v3862, %v3864
        %v3866 = vrot.slane %v3852, %v3865
        %v3867 = vcombine.high %v3844, 0.0
        %v3868 = vcombine.high %v3851, 0.0
        %v3869 = vcombine.high %v3859, 0.0
        %v3870 = vcombine.high %v3866, 0.0
        %3873 = vrot.lane.b32.xlu0 %v3720, 16
        %v3874 = vpop.permute.xlu0 %3873
        %3875 = vrot.lane.b32.xlu0 %v3818, 16
        %v3876 = vpop.permute.xlu0 %3875
        %3881 = vrot.lane.b32.xlu0 %v3704, 32
        %v3882 = vpop.permute.xlu0 %3881
        %3883 = vrot.lane.b32.xlu0 %v3802, 32
        %v3884 = vpop.permute.xlu0 %3883
        %3889 = vrot.lane.b32.xlu0 %v3721, 48
        %v3890 = vpop.permute.xlu0 %3889
        %3891 = vrot.lane.b32.xlu0 %v3819, 48
        %v3892 = vpop.permute.xlu0 %3891
        %3897 = vrot.lane.b32.xlu0 %v3712, 64
        %v3898 = vpop.permute.xlu0 %3897
        %3899 = vrot.lane.b32.xlu0 %v3810, 64
        %v3900 = vpop.permute.xlu0 %3899
        %3905 = vrot.lane.b32.xlu0 %v3722, 80
        %v3906 = vpop.permute.xlu0 %3905
        %3907 = vrot.lane.b32.xlu0 %v3820, 80
        %v3908 = vpop.permute.xlu0 %3907
        %3913 = vrot.lane.b32.xlu0 %v3719, 96
        %v3914 = vpop.permute.xlu0 %3913
        %3915 = vrot.lane.b32.xlu0 %v3817, 96
        %v3916 = vpop.permute.xlu0 %3915
        %3921 = vrot.lane.b32.xlu0 %v3723, 112
        %v3922 = vpop.permute.xlu0 %3921
        %3923 = vrot.lane.b32.xlu0 %v3821, 112
        %v3924 = vpop.permute.xlu0 %3923
        %3929 = vrot.lane.b32.xlu0 %v3769, 16
        %v3930 = vpop.permute.xlu0 %3929
        %3931 = vrot.lane.b32.xlu0 %v3867, 16
        %v3932 = vpop.permute.xlu0 %3931
        %3937 = vrot.lane.b32.xlu0 %v3753, 32
        %v3938 = vpop.permute.xlu0 %3937
        %3939 = vrot.lane.b32.xlu0 %v3851, 32
        %v3940 = vpop.permute.xlu0 %3939
        %3945 = vrot.lane.b32.xlu0 %v3770, 48
        %v3946 = vpop.permute.xlu0 %3945
        %3947 = vrot.lane.b32.xlu0 %v3868, 48
        %v3948 = vpop.permute.xlu0 %3947
        %3953 = vrot.lane.b32.xlu0 %v3761, 64
        %v3954 = vpop.permute.xlu0 %3953
        %3955 = vrot.lane.b32.xlu0 %v3859, 64
        %v3956 = vpop.permute.xlu0 %3955
        %3961 = vrot.lane.b32.xlu0 %v3771, 80
        %v3962 = vpop.permute.xlu0 %3961
        %3963 = vrot.lane.b32.xlu0 %v3869, 80
        %v3964 = vpop.permute.xlu0 %3963
        %3969 = vrot.lane.b32.xlu0 %v3768, 96
        %v3970 = vpop.permute.xlu0 %3969
        %3971 = vrot.lane.b32.xlu0 %v3866, 96
        %v3972 = vpop.permute.xlu0 %3971
        %3977 = vrot.lane.b32.xlu0 %v3772, 112
        %v3978 = vpop.permute.xlu0 %3977
        %3979 = vrot.lane.b32.xlu0 %v3870, 112
        %v3980 = vpop.permute.xlu0 %3979
        %v3983 = vsel %vm522, %v3697, %v3874
        %v3984 = vsel %vm522, %v3795, %v3876
        %v3985 = vsel %vm363, %v3983, %v3882
        %v3986 = vsel %vm363, %v3984, %v3884
        %v3987 = vsel %vm879, %v3985, %v3890
        %v3988 = vsel %vm879, %v3986, %v3892
        %v3989 = vsel %vm882, %v3987, %v3898
        %v3990 = vsel %vm882, %v3988, %v3900
        %v3991 = vsel %vm885, %v3989, %v3906
        %v3992 = vsel %vm885, %v3990, %v3908
        %v3993 = vsel %vm888, %v3991, %v3914
        %v3994 = vsel %vm888, %v3992, %v3916
        %v3995 = vsel %vm891, %v3993, %v3922
        %v3996 = vsel %vm891, %v3994, %v3924
        %v3997 = vsel %vm522, %v3746, %v3930
        %v3998 = vsel %vm522, %v3844, %v3932
        %v3999 = vsel %vm363, %v3997, %v3938
        %v4000 = vsel %vm363, %v3998, %v3940
        %v4001 = vsel %vm879, %v3999, %v3946
        %v4002 = vsel %vm879, %v4000, %v3948
        %v4003 = vsel %vm882, %v4001, %v3954
        %v4004 = vsel %vm882, %v4002, %v3956
        %v4005 = vsel %vm885, %v4003, %v3962
        %v4006 = vsel %vm885, %v4004, %v3964
        %v4007 = vsel %vm888, %v4005, %v3970
        %v4008 = vsel %vm888, %v4006, %v3972
        %v4009 = vsel %vm891, %v4007, %v3978
        %v4010 = vsel %vm891, %v4008, %v3980
        %v4015 = vcombine.low %v3995, %v4009
        %v4017 = vunpack.c.l.s4 1966171168
        %v4018 = vunpack.c.0.s8 %v4017
        %v4019 = vlaneseq
        %v4020 = vshrl.u32 %v4019, 7
        %v4021 = vsub.s32 %v4018, %v4020
        %v4022 = vrot.slane %v4015, %v4021
        %v4024 = vunpack.c.l.s4 1966171168
        %v4025 = vunpack.c.0.s8 %v4024
        %v4026 = vlaneseq
        %v4027 = vshrl.u32 %v4026, 7
        %v4028 = vsub.s32 %v4025, %v4027
        %v4029 = vrot.slane %v4022, %v4028
        %v4030 = vcombine.low %v3996, %v4010
        %v4032 = vunpack.c.l.s4 1966171168
        %v4033 = vunpack.c.0.s8 %v4032
        %v4034 = vlaneseq
        %v4035 = vshrl.u32 %v4034, 7
        %v4036 = vsub.s32 %v4033, %v4035
        %v4037 = vrot.slane %v4030, %v4036
        %v4039 = vunpack.c.l.s4 1966171168
        %v4040 = vunpack.c.0.s8 %v4039
        %v4041 = vlaneseq
        %v4042 = vshrl.u32 %v4041, 7
        %v4043 = vsub.s32 %v4040, %v4042
        %v4044 = vrot.slane %v4037, %v4043
        %s4047 = scalar_lea.vmem %s325, 5
        %4048 = vst.msk [vmem:[%s4047] ss:$8 sm:$0x3] %vm947, %v4029
        %4049 = vst.msk [vmem:[%s4047] ss:$8 sm:$0x0] %vm947, %v4029
        %s4050 = scalar_lea.vmem %s325, 21
        %4051 = vst.msk [vmem:[%s4050] ss:$8 sm:$0x3] %vm947, %v4044
        %4052 = vst.msk [vmem:[%s4050] ss:$8 sm:$0x0] %vm947, %v4044
        %v4053 = vpack.c.bf16 %v3672, %v3671
        %v4054 = vpack.c.bf16 %v3674, %v3673
        %4055 = vrot.lane.b32.xlu0 %v419, 44
        %v4056 = vpop.permute.xlu0 %4055
        %v4059 = vsel %vm522, %v4053, 0
        %4061 = vmatprep.subr.bf16.mxu0 0
        %4062 = vmatpush1.bf16.msra.mxu0 %v4056
        %4063 = vmatprep.subr.bf16.mxu0 0
        %4064 = vmatpush1.bf16.msra.mxu0 0
        %4065 = vmatprep.subr.bf16.mxu0 0
        %4066 = vmatpush1.bf16.msra.mxu0 0
        %4067 = vmatprep.subr.bf16.mxu0 0
        %4068 = vmatpush1.bf16.msra.mxu0 0
        %4069 = vmatprep.subr.bf16.mxu0 0
        %4070 = vmatpush1.bf16.msra.mxu0 0
        %4071 = vmatprep.subr.bf16.mxu0 0
        %4072 = vmatpush1.bf16.msra.mxu0 0
        %4073 = vmatprep.subr.bf16.mxu0 0
        %4074 = vmatpush1.bf16.msra.mxu0 0
        %4075 = vmatprep.subr.bf16.mxu0 0
        %4076 = vmatpush1.bf16.msra.mxu0 0
        %4077 = vmatprep.subr.bf16.mxu0 0
        %4078 = vmatpush1.bf16.msra.mxu0 0
        %4079 = vmatprep.subr.bf16.mxu0 0
        %4080 = vmatpush1.bf16.msra.mxu0 0
        %4081 = vmatprep.subr.bf16.mxu0 0
        %4082 = vmatpush1.bf16.msra.mxu0 0
        %4083 = vmatprep.subr.bf16.mxu0 0
        %4084 = vmatpush1.bf16.msra.mxu0 0
        %4085 = vmatprep.subr.bf16.mxu0 0
        %4086 = vmatpush1.bf16.msra.mxu0 0
        %4087 = vmatprep.subr.bf16.mxu0 0
        %4088 = vmatpush1.bf16.msra.mxu0 0
        %4089 = vmatprep.subr.bf16.mxu0 0
        %4090 = vmatpush1.bf16.msra.mxu0 0
        %4091 = vmatprep.subr.bf16.mxu0 0
        %4092 = vmatpush1.bf16.msra.mxu0 0
        %4093 = vmatprep.mubr.bf16.mxu0 0
        %4094 = vmatmul.mubr.bf16.gmra.mrb[0].mxu0 %v4059
        %v4095 = vpop.f32.mrb[0].mxu0
        %v4096 = vadd.f32 0.0, %v4095
        %v4097 = vpop.f32.mrb[0].mxu0
        %v4098 = vpop.f32.mrb[0].mxu0
        %v4099 = vadd.f32 0.0, %v4098
        %v4100 = vpop.f32.mrb[0].mxu0
        %4101 = vdwg.mxu0
        %4102 = vrot.lane.b32.xlu0 %v420, 44
        %v4103 = vpop.permute.xlu0 %4102
        %v4106 = vsel %vm522, %v4054, 0
        %4108 = vmatprep.subr.bf16.mxu0 0
        %4109 = vmatpush1.bf16.msra.mxu0 %v4103
        %4110 = vmatprep.subr.bf16.mxu0 0
        %4111 = vmatpush1.bf16.msra.mxu0 0
        %4112 = vmatprep.subr.bf16.mxu0 0
        %4113 = vmatpush1.bf16.msra.mxu0 0
        %4114 = vmatprep.subr.bf16.mxu0 0
        %4115 = vmatpush1.bf16.msra.mxu0 0
        %4116 = vmatprep.subr.bf16.mxu0 0
        %4117 = vmatpush1.bf16.msra.mxu0 0
        %4118 = vmatprep.subr.bf16.mxu0 0
        %4119 = vmatpush1.bf16.msra.mxu0 0
        %4120 = vmatprep.subr.bf16.mxu0 0
        %4121 = vmatpush1.bf16.msra.mxu0 0
        %4122 = vmatprep.subr.bf16.mxu0 0
        %4123 = vmatpush1.bf16.msra.mxu0 0
        %4124 = vmatprep.subr.bf16.mxu0 0
        %4125 = vmatpush1.bf16.msra.mxu0 0
        %4126 = vmatprep.subr.bf16.mxu0 0
        %4127 = vmatpush1.bf16.msra.mxu0 0
        %4128 = vmatprep.subr.bf16.mxu0 0
        %4129 = vmatpush1.bf16.msra.mxu0 0
        %4130 = vmatprep.subr.bf16.mxu0 0
        %4131 = vmatpush1.bf16.msra.mxu0 0
        %4132 = vmatprep.subr.bf16.mxu0 0
        %4133 = vmatpush1.bf16.msra.mxu0 0
        %4134 = vmatprep.subr.bf16.mxu0 0
        %4135 = vmatpush1.bf16.msra.mxu0 0
        %4136 = vmatprep.subr.bf16.mxu0 0
        %4137 = vmatpush1.bf16.msra.mxu0 0
        %4138 = vmatprep.subr.bf16.mxu0 0
        %4139 = vmatpush1.bf16.msra.mxu0 0
        %4140 = vmatprep.mubr.bf16.mxu0 0
        %4141 = vmatmul.mubr.bf16.gmra.mrb[0].mxu0 %v4106
        %v4142 = vpop.f32.mrb[0].mxu0
        %v4143 = vadd.f32 0.0, %v4142
        %v4144 = vpop.f32.mrb[0].mxu0
        %v4145 = vpop.f32.mrb[0].mxu0
        %v4146 = vadd.f32 0.0, %v4145
        %v4147 = vpop.f32.mrb[0].mxu0
        %4148 = vdwg.mxu0
        %4149 = vrot.lane.b32.xlu0 %v419, 104
        %v4150 = vpop.permute.xlu0 %4149
        %4151 = vrot.lane.b32.xlu0 %v419, 72
        %v4152 = vpop.permute.xlu0 %4151
        %v4154 = vsel %vm424, %v4150, 0
        %v4157 = vsel %vm424, %v4152, 0
        %4159 = vmatprep.subr.bf16.mxu0 0
        %4160 = vmatpush1.bf16.xpose.msra.mxu0 %v4157
        %4161 = vmatprep.subr.bf16.mxu0 0
        %4162 = vmatpush1.bf16.xpose.msra.mxu0 0
        %4163 = vmatprep.subr.bf16.mxu0 0
        %4164 = vmatpush1.bf16.xpose.msra.mxu0 0
        %4165 = vmatprep.subr.bf16.mxu0 0
        %4166 = vmatpush1.bf16.xpose.msra.mxu0 0
        %4167 = vmatprep.subr.bf16.mxu0 0
        %4168 = vmatpush1.bf16.xpose.msra.mxu0 0
        %4169 = vmatprep.subr.bf16.mxu0 0
        %4170 = vmatpush1.bf16.xpose.msra.mxu0 0
        %4171 = vmatprep.subr.bf16.mxu0 0
        %4172 = vmatpush1.bf16.xpose.msra.mxu0 0
        %4173 = vmatprep.subr.bf16.mxu0 0
        %4174 = vmatpush1.bf16.xpose.msra.mxu0 0
        %4175 = vmatprep.subr.bf16.mxu0 0
        %4176 = vmatpush1.bf16.xpose.msra.mxu0 0
        %4177 = vmatprep.subr.bf16.mxu0 0
        %4178 = vmatpush1.bf16.xpose.msra.mxu0 0
        %4179 = vmatprep.subr.bf16.mxu0 0
        %4180 = vmatpush1.bf16.xpose.msra.mxu0 0
        %4181 = vmatprep.subr.bf16.mxu0 0
        %4182 = vmatpush1.bf16.xpose.msra.mxu0 0
        %4183 = vmatprep.subr.bf16.mxu0 0
        %4184 = vmatpush1.bf16.xpose.msra.mxu0 0
        %4185 = vmatprep.subr.bf16.mxu0 0
        %4186 = vmatpush1.bf16.xpose.msra.mxu0 0
        %4187 = vmatprep.subr.bf16.mxu0 0
        %4188 = vmatpush1.bf16.xpose.msra.mxu0 0
        %4189 = vmatprep.subr.bf16.mxu0 0
        %4190 = vmatpush1.bf16.xpose.msra.mxu0 0
        %4191 = vmatprep.mubr.bf16.mxu0 0
        %4192 = vmatmul.mubr.bf16.gmra.mrb[0].mxu0 %v4154
        %v4193 = vpop.f32.mrb[0].mxu0
        %v4194 = vadd.f32 0.0, %v4193
        %v4195 = vpop.f32.mrb[0].mxu0
        %v4196 = vpop.f32.mrb[0].mxu0
        %v4197 = vadd.f32 0.0, %v4196
        %v4198 = vpop.f32.mrb[0].mxu0
        %4199 = vdwg.mxu0
        %4200 = vrot.lane.b32.xlu0 %v420, 104
        %v4201 = vpop.permute.xlu0 %4200
        %4202 = vrot.lane.b32.xlu0 %v420, 72
        %v4203 = vpop.permute.xlu0 %4202
        %v4205 = vsel %vm424, %v4201, 0
        %v4208 = vsel %vm424, %v4203, 0
        %4210 = vmatprep.subr.bf16.mxu0 0
        %4211 = vmatpush1.bf16.xpose.msra.mxu0 %v4208
        %4212 = vmatprep.subr.bf16.mxu0 0
        %4213 = vmatpush1.bf16.xpose.msra.mxu0 0
        %4214 = vmatprep.subr.bf16.mxu0 0
        %4215 = vmatpush1.bf16.xpose.msra.mxu0 0
        %4216 = vmatprep.subr.bf16.mxu0 0
        %4217 = vmatpush1.bf16.xpose.msra.mxu0 0
        %4218 = vmatprep.subr.bf16.mxu0 0
        %4219 = vmatpush1.bf16.xpose.msra.mxu0 0
        %4220 = vmatprep.subr.bf16.mxu0 0
        %4221 = vmatpush1.bf16.xpose.msra.mxu0 0
        %4222 = vmatprep.subr.bf16.mxu0 0
        %4223 = vmatpush1.bf16.xpose.msra.mxu0 0
        %4224 = vmatprep.subr.bf16.mxu0 0
        %4225 = vmatpush1.bf16.xpose.msra.mxu0 0
        %4226 = vmatprep.subr.bf16.mxu0 0
        %4227 = vmatpush1.bf16.xpose.msra.mxu0 0
        %4228 = vmatprep.subr.bf16.mxu0 0
        %4229 = vmatpush1.bf16.xpose.msra.mxu0 0
        %4230 = vmatprep.subr.bf16.mxu0 0
        %4231 = vmatpush1.bf16.xpose.msra.mxu0 0
        %4232 = vmatprep.subr.bf16.mxu0 0
        %4233 = vmatpush1.bf16.xpose.msra.mxu0 0
        %4234 = vmatprep.subr.bf16.mxu0 0
        %4235 = vmatpush1.bf16.xpose.msra.mxu0 0
        %4236 = vmatprep.subr.bf16.mxu0 0
        %4237 = vmatpush1.bf16.xpose.msra.mxu0 0
        %4238 = vmatprep.subr.bf16.mxu0 0
        %4239 = vmatpush1.bf16.xpose.msra.mxu0 0
        %4240 = vmatprep.subr.bf16.mxu0 0
        %4241 = vmatpush1.bf16.xpose.msra.mxu0 0
        %4242 = vmatprep.mubr.bf16.mxu0 0
        %4243 = vmatmul.mubr.bf16.gmra.mrb[0].mxu0 %v4205
        %v4244 = vpop.f32.mrb[0].mxu0
        %v4245 = vadd.f32 0.0, %v4244
        %v4246 = vpop.f32.mrb[0].mxu0
        %v4247 = vpop.f32.mrb[0].mxu0
        %v4248 = vadd.f32 0.0, %v4247
        %v4249 = vpop.f32.mrb[0].mxu0
        %4250 = vdwg.mxu0
        %v4251 = vsel %vm522, %v4194, -inf
        %4252 = vmax.xlane.f32.xlu0 %v4251
        %v4253 = vpop.xlane.xlu0 %4252
        %v4254 = vsel %vm522, %v4197, -inf
        %4255 = vmax.xlane.f32.xlu0 %v4254
        %v4256 = vpop.xlane.xlu0 %4255
        %v4257 = vsel %vm522, %v4245, -inf
        %4258 = vmax.xlane.f32.xlu0 %v4257
        %v4259 = vpop.xlane.xlu0 %4258
        %v4260 = vsel %vm522, %v4248, -inf
        %4261 = vmax.xlane.f32.xlu0 %v4260
        %v4262 = vpop.xlane.xlu0 %4261
        %v4263 = vsub.f32 %v4194, %v4253
        %v4264 = vsub.f32 %v4197, %v4256
        %v4265 = vsub.f32 %v4245, %v4259
        %v4266 = vsub.f32 %v4248, %v4262
        %v4267 = vmul.f32 %v4263, 1.442695
        %v4268 = vpow.pop %v4267
        %v4269 = vmul.f32 %v4264, 1.442695
        %v4270 = vpow.pop %v4269
        %v4271 = vmul.f32 %v4265, 1.442695
        %v4272 = vpow.pop %v4271
        %v4273 = vmul.f32 %v4266, 1.442695
        %v4274 = vpow.pop %v4273
        %v4275 = vsel %vm522, %v4268, 0.0
        %4276 = vadd.xlane.f32.xlu0 %v4275
        %v4277 = vpop.xlane.xlu0 %4276
        %v4278 = vsel %vm522, %v4270, 0.0
        %4279 = vadd.xlane.f32.xlu0 %v4278
        %v4280 = vpop.xlane.xlu0 %4279
        %v4281 = vsel %vm522, %v4272, 0.0
        %4282 = vadd.xlane.f32.xlu0 %v4281
        %v4283 = vpop.xlane.xlu0 %4282
        %v4284 = vsel %vm522, %v4274, 0.0
        %4285 = vadd.xlane.f32.xlu0 %v4284
        %v4286 = vpop.xlane.xlu0 %4285
        %v4287 = vrcp.pop %v4277
        %v4288 = vrcp.pop %v4280
        %v4289 = vrcp.pop %v4283
        %v4290 = vrcp.pop %v4286
        %v4291 = vmul.f32 %v4268, %v4287
        %v4292 = vmul.f32 %v4270, %v4288
        %v4293 = vmul.f32 %v4272, %v4289
        %v4294 = vmul.f32 %v4274, %v4290
        %v4295 = vcombine.high %v4291, 0.0
        %v4297 = vunpack.c.l.s4 1983009808
        %v4298 = vunpack.c.0.s8 %v4297
        %v4299 = vlaneseq
        %v4300 = vshrl.u32 %v4299, 7
        %v4301 = vsub.s32 %v4298, %v4300
        %v4302 = vrot.slane %v4291, %v4301
        %v4304 = vunpack.c.l.s4 1983009808
        %v4305 = vunpack.c.0.s8 %v4304
        %v4306 = vlaneseq
        %v4307 = vshrl.u32 %v4306, 7
        %v4308 = vsub.s32 %v4305, %v4307
        %v4309 = vrot.slane %v4295, %v4308
        %v4310 = vcombine.high %v4302, 0.0
        %v4312 = vunpack.c.l.s4 1934713408
        %v4313 = vunpack.c.0.s8 %v4312
        %v4314 = vlaneseq
        %v4315 = vshrl.u32 %v4314, 7
        %v4316 = vsub.s32 %v4313, %v4315
        %v4317 = vrot.slane %v4302, %v4316
        %v4319 = vunpack.c.l.s4 1934713408
        %v4320 = vunpack.c.0.s8 %v4319
        %v4321 = vlaneseq
        %v4322 = vshrl.u32 %v4321, 7
        %v4323 = vsub.s32 %v4320, %v4322
        %v4324 = vrot.slane %v4310, %v4323
        %v4325 = vcombine.high %v4309, 0.0
        %v4327 = vunpack.c.l.s4 1934713408
        %v4328 = vunpack.c.0.s8 %v4327
        %v4329 = vlaneseq
        %v4330 = vshrl.u32 %v4329, 7
        %v4331 = vsub.s32 %v4328, %v4330
        %v4332 = vrot.slane %v4309, %v4331
        %v4334 = vunpack.c.l.s4 1934713408
        %v4335 = vunpack.c.0.s8 %v4334
        %v4336 = vlaneseq
        %v4337 = vshrl.u32 %v4336, 7
        %v4338 = vsub.s32 %v4335, %v4337
        %v4339 = vrot.slane %v4325, %v4338
        %v4340 = vcombine.high %v4317, 0.0
        %v4341 = vcombine.high %v4324, 0.0
        %v4342 = vcombine.high %v4332, 0.0
        %v4343 = vcombine.high %v4339, 0.0
        %v4344 = vcombine.high %v4292, 0.0
        %v4346 = vunpack.c.l.s4 1983009808
        %v4347 = vunpack.c.0.s8 %v4346
        %v4348 = vlaneseq
        %v4349 = vshrl.u32 %v4348, 7
        %v4350 = vsub.s32 %v4347, %v4349
        %v4351 = vrot.slane %v4292, %v4350
        %v4353 = vunpack.c.l.s4 1983009808
        %v4354 = vunpack.c.0.s8 %v4353
        %v4355 = vlaneseq
        %v4356 = vshrl.u32 %v4355, 7
        %v4357 = vsub.s32 %v4354, %v4356
        %v4358 = vrot.slane %v4344, %v4357
        %v4359 = vcombine.high %v4351, 0.0
        %v4361 = vunpack.c.l.s4 1934713408
        %v4362 = vunpack.c.0.s8 %v4361
        %v4363 = vlaneseq
        %v4364 = vshrl.u32 %v4363, 7
        %v4365 = vsub.s32 %v4362, %v4364
        %v4366 = vrot.slane %v4351, %v4365
        %v4368 = vunpack.c.l.s4 1934713408
        %v4369 = vunpack.c.0.s8 %v4368
        %v4370 = vlaneseq
        %v4371 = vshrl.u32 %v4370, 7
        %v4372 = vsub.s32 %v4369, %v4371
        %v4373 = vrot.slane %v4359, %v4372
        %v4374 = vcombine.high %v4358, 0.0
        %v4376 = vunpack.c.l.s4 1934713408
        %v4377 = vunpack.c.0.s8 %v4376
        %v4378 = vlaneseq
        %v4379 = vshrl.u32 %v4378, 7
        %v4380 = vsub.s32 %v4377, %v4379
        %v4381 = vrot.slane %v4358, %v4380
        %v4383 = vunpack.c.l.s4 1934713408
        %v4384 = vunpack.c.0.s8 %v4383
        %v4385 = vlaneseq
        %v4386 = vshrl.u32 %v4385, 7
        %v4387 = vsub.s32 %v4384, %v4386
        %v4388 = vrot.slane %v4374, %v4387
        %v4389 = vcombine.high %v4366, 0.0
        %v4390 = vcombine.high %v4373, 0.0
        %v4391 = vcombine.high %v4381, 0.0
        %v4392 = vcombine.high %v4388, 0.0
        %v4393 = vcombine.high %v4293, 0.0
        %v4395 = vunpack.c.l.s4 1983009808
        %v4396 = vunpack.c.0.s8 %v4395
        %v4397 = vlaneseq
        %v4398 = vshrl.u32 %v4397, 7
        %v4399 = vsub.s32 %v4396, %v4398
        %v4400 = vrot.slane %v4293, %v4399
        %v4402 = vunpack.c.l.s4 1983009808
        %v4403 = vunpack.c.0.s8 %v4402
        %v4404 = vlaneseq
        %v4405 = vshrl.u32 %v4404, 7
        %v4406 = vsub.s32 %v4403, %v4405
        %v4407 = vrot.slane %v4393, %v4406
        %v4408 = vcombine.high %v4400, 0.0
        %v4410 = vunpack.c.l.s4 1934713408
        %v4411 = vunpack.c.0.s8 %v4410
        %v4412 = vlaneseq
        %v4413 = vshrl.u32 %v4412, 7
        %v4414 = vsub.s32 %v4411, %v4413
        %v4415 = vrot.slane %v4400, %v4414
        %v4417 = vunpack.c.l.s4 1934713408
        %v4418 = vunpack.c.0.s8 %v4417
        %v4419 = vlaneseq
        %v4420 = vshrl.u32 %v4419, 7
        %v4421 = vsub.s32 %v4418, %v4420
        %v4422 = vrot.slane %v4408, %v4421
        %v4423 = vcombine.high %v4407, 0.0
        %v4425 = vunpack.c.l.s4 1934713408
        %v4426 = vunpack.c.0.s8 %v4425
        %v4427 = vlaneseq
        %v4428 = vshrl.u32 %v4427, 7
        %v4429 = vsub.s32 %v4426, %v4428
        %v4430 = vrot.slane %v4407, %v4429
        %v4432 = vunpack.c.l.s4 1934713408
        %v4433 = vunpack.c.0.s8 %v4432
        %v4434 = vlaneseq
        %v4435 = vshrl.u32 %v4434, 7
        %v4436 = vsub.s32 %v4433, %v4435
        %v4437 = vrot.slane %v4423, %v4436
        %v4438 = vcombine.high %v4415, 0.0
        %v4439 = vcombine.high %v4422, 0.0
        %v4440 = vcombine.high %v4430, 0.0
        %v4441 = vcombine.high %v4437, 0.0
        %v4442 = vcombine.high %v4294, 0.0
        %v4444 = vunpack.c.l.s4 1983009808
        %v4445 = vunpack.c.0.s8 %v4444
        %v4446 = vlaneseq
        %v4447 = vshrl.u32 %v4446, 7
        %v4448 = vsub.s32 %v4445, %v4447
        %v4449 = vrot.slane %v4294, %v4448
        %v4451 = vunpack.c.l.s4 1983009808
        %v4452 = vunpack.c.0.s8 %v4451
        %v4453 = vlaneseq
        %v4454 = vshrl.u32 %v4453, 7
        %v4455 = vsub.s32 %v4452, %v4454
        %v4456 = vrot.slane %v4442, %v4455
        %v4457 = vcombine.high %v4449, 0.0
        %v4459 = vunpack.c.l.s4 1934713408
        %v4460 = vunpack.c.0.s8 %v4459
        %v4461 = vlaneseq
        %v4462 = vshrl.u32 %v4461, 7
        %v4463 = vsub.s32 %v4460, %v4462
        %v4464 = vrot.slane %v4449, %v4463
        %v4466 = vunpack.c.l.s4 1934713408
        %v4467 = vunpack.c.0.s8 %v4466
        %v4468 = vlaneseq
        %v4469 = vshrl.u32 %v4468, 7
        %v4470 = vsub.s32 %v4467, %v4469
        %v4471 = vrot.slane %v4457, %v4470
        %v4472 = vcombine.high %v4456, 0.0
        %v4474 = vunpack.c.l.s4 1934713408
        %v4475 = vunpack.c.0.s8 %v4474
        %v4476 = vlaneseq
        %v4477 = vshrl.u32 %v4476, 7
        %v4478 = vsub.s32 %v4475, %v4477
        %v4479 = vrot.slane %v4456, %v4478
        %v4481 = vunpack.c.l.s4 1934713408
        %v4482 = vunpack.c.0.s8 %v4481
        %v4483 = vlaneseq
        %v4484 = vshrl.u32 %v4483, 7
        %v4485 = vsub.s32 %v4482, %v4484
        %v4486 = vrot.slane %v4472, %v4485
        %v4487 = vcombine.high %v4464, 0.0
        %v4488 = vcombine.high %v4471, 0.0
        %v4489 = vcombine.high %v4479, 0.0
        %v4490 = vcombine.high %v4486, 0.0
        %4493 = vrot.lane.b32.xlu0 %v4340, 16
        %v4494 = vpop.permute.xlu0 %4493
        %4495 = vrot.lane.b32.xlu0 %v4438, 16
        %v4496 = vpop.permute.xlu0 %4495
        %4501 = vrot.lane.b32.xlu0 %v4324, 32
        %v4502 = vpop.permute.xlu0 %4501
        %4503 = vrot.lane.b32.xlu0 %v4422, 32
        %v4504 = vpop.permute.xlu0 %4503
        %4509 = vrot.lane.b32.xlu0 %v4341, 48
        %v4510 = vpop.permute.xlu0 %4509
        %4511 = vrot.lane.b32.xlu0 %v4439, 48
        %v4512 = vpop.permute.xlu0 %4511
        %4517 = vrot.lane.b32.xlu0 %v4332, 64
        %v4518 = vpop.permute.xlu0 %4517
        %4519 = vrot.lane.b32.xlu0 %v4430, 64
        %v4520 = vpop.permute.xlu0 %4519
        %4525 = vrot.lane.b32.xlu0 %v4342, 80
        %v4526 = vpop.permute.xlu0 %4525
        %4527 = vrot.lane.b32.xlu0 %v4440, 80
        %v4528 = vpop.permute.xlu0 %4527
        %4533 = vrot.lane.b32.xlu0 %v4339, 96
        %v4534 = vpop.permute.xlu0 %4533
        %4535 = vrot.lane.b32.xlu0 %v4437, 96
        %v4536 = vpop.permute.xlu0 %4535
        %4541 = vrot.lane.b32.xlu0 %v4343, 112
        %v4542 = vpop.permute.xlu0 %4541
        %4543 = vrot.lane.b32.xlu0 %v4441, 112
        %v4544 = vpop.permute.xlu0 %4543
        %4549 = vrot.lane.b32.xlu0 %v4389, 16
        %v4550 = vpop.permute.xlu0 %4549
        %4551 = vrot.lane.b32.xlu0 %v4487, 16
        %v4552 = vpop.permute.xlu0 %4551
        %4557 = vrot.lane.b32.xlu0 %v4373, 32
        %v4558 = vpop.permute.xlu0 %4557
        %4559 = vrot.lane.b32.xlu0 %v4471, 32
        %v4560 = vpop.permute.xlu0 %4559
        %4565 = vrot.lane.b32.xlu0 %v4390, 48
        %v4566 = vpop.permute.xlu0 %4565
        %4567 = vrot.lane.b32.xlu0 %v4488, 48
        %v4568 = vpop.permute.xlu0 %4567
        %4573 = vrot.lane.b32.xlu0 %v4381, 64
        %v4574 = vpop.permute.xlu0 %4573
        %4575 = vrot.lane.b32.xlu0 %v4479, 64
        %v4576 = vpop.permute.xlu0 %4575
        %4581 = vrot.lane.b32.xlu0 %v4391, 80
        %v4582 = vpop.permute.xlu0 %4581
        %4583 = vrot.lane.b32.xlu0 %v4489, 80
        %v4584 = vpop.permute.xlu0 %4583
        %4589 = vrot.lane.b32.xlu0 %v4388, 96
        %v4590 = vpop.permute.xlu0 %4589
        %4591 = vrot.lane.b32.xlu0 %v4486, 96
        %v4592 = vpop.permute.xlu0 %4591
        %4597 = vrot.lane.b32.xlu0 %v4392, 112
        %v4598 = vpop.permute.xlu0 %4597
        %4599 = vrot.lane.b32.xlu0 %v4490, 112
        %v4600 = vpop.permute.xlu0 %4599
        %v4603 = vsel %vm522, %v4317, %v4494
        %v4604 = vsel %vm522, %v4415, %v4496
        %v4605 = vsel %vm363, %v4603, %v4502
        %v4606 = vsel %vm363, %v4604, %v4504
        %v4607 = vsel %vm879, %v4605, %v4510
        %v4608 = vsel %vm879, %v4606, %v4512
        %v4609 = vsel %vm882, %v4607, %v4518
        %v4610 = vsel %vm882, %v4608, %v4520
        %v4611 = vsel %vm885, %v4609, %v4526
        %v4612 = vsel %vm885, %v4610, %v4528
        %v4613 = vsel %vm888, %v4611, %v4534
        %v4614 = vsel %vm888, %v4612, %v4536
        %v4615 = vsel %vm891, %v4613, %v4542
        %v4616 = vsel %vm891, %v4614, %v4544
        %v4617 = vsel %vm522, %v4366, %v4550
        %v4618 = vsel %vm522, %v4464, %v4552
        %v4619 = vsel %vm363, %v4617, %v4558
        %v4620 = vsel %vm363, %v4618, %v4560
        %v4621 = vsel %vm879, %v4619, %v4566
        %v4622 = vsel %vm879, %v4620, %v4568
        %v4623 = vsel %vm882, %v4621, %v4574
        %v4624 = vsel %vm882, %v4622, %v4576
        %v4625 = vsel %vm885, %v4623, %v4582
        %v4626 = vsel %vm885, %v4624, %v4584
        %v4627 = vsel %vm888, %v4625, %v4590
        %v4628 = vsel %vm888, %v4626, %v4592
        %v4629 = vsel %vm891, %v4627, %v4598
        %v4630 = vsel %vm891, %v4628, %v4600
        %v4635 = vcombine.low %v4615, %v4629
        %v4637 = vunpack.c.l.s4 1966171168
        %v4638 = vunpack.c.0.s8 %v4637
        %v4639 = vlaneseq
        %v4640 = vshrl.u32 %v4639, 7
        %v4641 = vsub.s32 %v4638, %v4640
        %v4642 = vrot.slane %v4635, %v4641
        %v4644 = vunpack.c.l.s4 1966171168
        %v4645 = vunpack.c.0.s8 %v4644
        %v4646 = vlaneseq
        %v4647 = vshrl.u32 %v4646, 7
        %v4648 = vsub.s32 %v4645, %v4647
        %v4649 = vrot.slane %v4642, %v4648
        %v4650 = vcombine.low %v4616, %v4630
        %v4652 = vunpack.c.l.s4 1966171168
        %v4653 = vunpack.c.0.s8 %v4652
        %v4654 = vlaneseq
        %v4655 = vshrl.u32 %v4654, 7
        %v4656 = vsub.s32 %v4653, %v4655
        %v4657 = vrot.slane %v4650, %v4656
        %v4659 = vunpack.c.l.s4 1966171168
        %v4660 = vunpack.c.0.s8 %v4659
        %v4661 = vlaneseq
        %v4662 = vshrl.u32 %v4661, 7
        %v4663 = vsub.s32 %v4660, %v4662
        %v4664 = vrot.slane %v4657, %v4663
        %s4667 = scalar_lea.vmem %s325, 6
        %4668 = vst.msk [vmem:[%s4667] ss:$8 sm:$0x3] %vm947, %v4649
        %4669 = vst.msk [vmem:[%s4667] ss:$8 sm:$0x0] %vm947, %v4649
        %s4670 = scalar_lea.vmem %s325, 22
        %4671 = vst.msk [vmem:[%s4670] ss:$8 sm:$0x3] %vm947, %v4664
        %4672 = vst.msk [vmem:[%s4670] ss:$8 sm:$0x0] %vm947, %v4664
        %v4673 = vpack.c.bf16 %v4292, %v4291
        %v4674 = vpack.c.bf16 %v4294, %v4293
        %4675 = vrot.lane.b32.xlu0 %v419, 40
        %v4676 = vpop.permute.xlu0 %4675
        %v4679 = vsel %vm522, %v4673, 0
        %4681 = vmatprep.subr.bf16.mxu0 0
        %4682 = vmatpush1.bf16.msra.mxu0 %v4676
        %4683 = vmatprep.subr.bf16.mxu0 0
        %4684 = vmatpush1.bf16.msra.mxu0 0
        %4685 = vmatprep.subr.bf16.mxu0 0
        %4686 = vmatpush1.bf16.msra.mxu0 0
        %4687 = vmatprep.subr.bf16.mxu0 0
        %4688 = vmatpush1.bf16.msra.mxu0 0
        %4689 = vmatprep.subr.bf16.mxu0 0
        %4690 = vmatpush1.bf16.msra.mxu0 0
        %4691 = vmatprep.subr.bf16.mxu0 0
        %4692 = vmatpush1.bf16.msra.mxu0 0
        %4693 = vmatprep.subr.bf16.mxu0 0
        %4694 = vmatpush1.bf16.msra.mxu0 0
        %4695 = vmatprep.subr.bf16.mxu0 0
        %4696 = vmatpush1.bf16.msra.mxu0 0
        %4697 = vmatprep.subr.bf16.mxu0 0
        %4698 = vmatpush1.bf16.msra.mxu0 0
        %4699 = vmatprep.subr.bf16.mxu0 0
        %4700 = vmatpush1.bf16.msra.mxu0 0
        %4701 = vmatprep.subr.bf16.mxu0 0
        %4702 = vmatpush1.bf16.msra.mxu0 0
        %4703 = vmatprep.subr.bf16.mxu0 0
        %4704 = vmatpush1.bf16.msra.mxu0 0
        %4705 = vmatprep.subr.bf16.mxu0 0
        %4706 = vmatpush1.bf16.msra.mxu0 0
        %4707 = vmatprep.subr.bf16.mxu0 0
        %4708 = vmatpush1.bf16.msra.mxu0 0
        %4709 = vmatprep.subr.bf16.mxu0 0
        %4710 = vmatpush1.bf16.msra.mxu0 0
        %4711 = vmatprep.subr.bf16.mxu0 0
        %4712 = vmatpush1.bf16.msra.mxu0 0
        %4713 = vmatprep.mubr.bf16.mxu0 0
        %4714 = vmatmul.mubr.bf16.gmra.mrb[0].mxu0 %v4679
        %v4715 = vpop.f32.mrb[0].mxu0
        %v4716 = vadd.f32 0.0, %v4715
        %v4717 = vpop.f32.mrb[0].mxu0
        %v4718 = vpop.f32.mrb[0].mxu0
        %v4719 = vadd.f32 0.0, %v4718
        %v4720 = vpop.f32.mrb[0].mxu0
        %4721 = vdwg.mxu0
        %4722 = vrot.lane.b32.xlu0 %v420, 40
        %v4723 = vpop.permute.xlu0 %4722
        %v4726 = vsel %vm522, %v4674, 0
        %4728 = vmatprep.subr.bf16.mxu0 0
        %4729 = vmatpush1.bf16.msra.mxu0 %v4723
        %4730 = vmatprep.subr.bf16.mxu0 0
        %4731 = vmatpush1.bf16.msra.mxu0 0
        %4732 = vmatprep.subr.bf16.mxu0 0
        %4733 = vmatpush1.bf16.msra.mxu0 0
        %4734 = vmatprep.subr.bf16.mxu0 0
        %4735 = vmatpush1.bf16.msra.mxu0 0
        %4736 = vmatprep.subr.bf16.mxu0 0
        %4737 = vmatpush1.bf16.msra.mxu0 0
        %4738 = vmatprep.subr.bf16.mxu0 0
        %4739 = vmatpush1.bf16.msra.mxu0 0
        %4740 = vmatprep.subr.bf16.mxu0 0
        %4741 = vmatpush1.bf16.msra.mxu0 0
        %4742 = vmatprep.subr.bf16.mxu0 0
        %4743 = vmatpush1.bf16.msra.mxu0 0
        %4744 = vmatprep.subr.bf16.mxu0 0
        %4745 = vmatpush1.bf16.msra.mxu0 0
        %4746 = vmatprep.subr.bf16.mxu0 0
        %4747 = vmatpush1.bf16.msra.mxu0 0
        %4748 = vmatprep.subr.bf16.mxu0 0
        %4749 = vmatpush1.bf16.msra.mxu0 0
        %4750 = vmatprep.subr.bf16.mxu0 0
        %4751 = vmatpush1.bf16.msra.mxu0 0
        %4752 = vmatprep.subr.bf16.mxu0 0
        %4753 = vmatpush1.bf16.msra.mxu0 0
        %4754 = vmatprep.subr.bf16.mxu0 0
        %4755 = vmatpush1.bf16.msra.mxu0 0
        %4756 = vmatprep.subr.bf16.mxu0 0
        %4757 = vmatpush1.bf16.msra.mxu0 0
        %4758 = vmatprep.subr.bf16.mxu0 0
        %4759 = vmatpush1.bf16.msra.mxu0 0
        %4760 = vmatprep.mubr.bf16.mxu0 0
        %4761 = vmatmul.mubr.bf16.gmra.mrb[0].mxu0 %v4726
        %v4762 = vpop.f32.mrb[0].mxu0
        %v4763 = vadd.f32 0.0, %v4762
        %v4764 = vpop.f32.mrb[0].mxu0
        %v4765 = vpop.f32.mrb[0].mxu0
        %v4766 = vadd.f32 0.0, %v4765
        %v4767 = vpop.f32.mrb[0].mxu0
        %4768 = vdwg.mxu0
        %4769 = vrot.lane.b32.xlu0 %v419, 100
        %v4770 = vpop.permute.xlu0 %4769
        %4771 = vrot.lane.b32.xlu0 %v419, 68
        %v4772 = vpop.permute.xlu0 %4771
        %v4774 = vsel %vm424, %v4770, 0
        %v4777 = vsel %vm424, %v4772, 0
        %4779 = vmatprep.subr.bf16.mxu0 0
        %4780 = vmatpush1.bf16.xpose.msra.mxu0 %v4777
        %4781 = vmatprep.subr.bf16.mxu0 0
        %4782 = vmatpush1.bf16.xpose.msra.mxu0 0
        %4783 = vmatprep.subr.bf16.mxu0 0
        %4784 = vmatpush1.bf16.xpose.msra.mxu0 0
        %4785 = vmatprep.subr.bf16.mxu0 0
        %4786 = vmatpush1.bf16.xpose.msra.mxu0 0
        %4787 = vmatprep.subr.bf16.mxu0 0
        %4788 = vmatpush1.bf16.xpose.msra.mxu0 0
        %4789 = vmatprep.subr.bf16.mxu0 0
        %4790 = vmatpush1.bf16.xpose.msra.mxu0 0
        %4791 = vmatprep.subr.bf16.mxu0 0
        %4792 = vmatpush1.bf16.xpose.msra.mxu0 0
        %4793 = vmatprep.subr.bf16.mxu0 0
        %4794 = vmatpush1.bf16.xpose.msra.mxu0 0
        %4795 = vmatprep.subr.bf16.mxu0 0
        %4796 = vmatpush1.bf16.xpose.msra.mxu0 0
        %4797 = vmatprep.subr.bf16.mxu0 0
        %4798 = vmatpush1.bf16.xpose.msra.mxu0 0
        %4799 = vmatprep.subr.bf16.mxu0 0
        %4800 = vmatpush1.bf16.xpose.msra.mxu0 0
        %4801 = vmatprep.subr.bf16.mxu0 0
        %4802 = vmatpush1.bf16.xpose.msra.mxu0 0
        %4803 = vmatprep.subr.bf16.mxu0 0
        %4804 = vmatpush1.bf16.xpose.msra.mxu0 0
        %4805 = vmatprep.subr.bf16.mxu0 0
        %4806 = vmatpush1.bf16.xpose.msra.mxu0 0
        %4807 = vmatprep.subr.bf16.mxu0 0
        %4808 = vmatpush1.bf16.xpose.msra.mxu0 0
        %4809 = vmatprep.subr.bf16.mxu0 0
        %4810 = vmatpush1.bf16.xpose.msra.mxu0 0
        %4811 = vmatprep.mubr.bf16.mxu0 0
        %4812 = vmatmul.mubr.bf16.gmra.mrb[0].mxu0 %v4774
        %v4813 = vpop.f32.mrb[0].mxu0
        %v4814 = vadd.f32 0.0, %v4813
        %v4815 = vpop.f32.mrb[0].mxu0
        %v4816 = vpop.f32.mrb[0].mxu0
        %v4817 = vadd.f32 0.0, %v4816
        %v4818 = vpop.f32.mrb[0].mxu0
        %4819 = vdwg.mxu0
        %4820 = vrot.lane.b32.xlu0 %v420, 100
        %v4821 = vpop.permute.xlu0 %4820
        %4822 = vrot.lane.b32.xlu0 %v420, 68
        %v4823 = vpop.permute.xlu0 %4822
        %v4825 = vsel %vm424, %v4821, 0
        %v4828 = vsel %vm424, %v4823, 0
        %4830 = vmatprep.subr.bf16.mxu0 0
        %4831 = vmatpush1.bf16.xpose.msra.mxu0 %v4828
        %4832 = vmatprep.subr.bf16.mxu0 0
        %4833 = vmatpush1.bf16.xpose.msra.mxu0 0
        %4834 = vmatprep.subr.bf16.mxu0 0
        %4835 = vmatpush1.bf16.xpose.msra.mxu0 0
        %4836 = vmatprep.subr.bf16.mxu0 0
        %4837 = vmatpush1.bf16.xpose.msra.mxu0 0
        %4838 = vmatprep.subr.bf16.mxu0 0
        %4839 = vmatpush1.bf16.xpose.msra.mxu0 0
        %4840 = vmatprep.subr.bf16.mxu0 0
        %4841 = vmatpush1.bf16.xpose.msra.mxu0 0
        %4842 = vmatprep.subr.bf16.mxu0 0
        %4843 = vmatpush1.bf16.xpose.msra.mxu0 0
        %4844 = vmatprep.subr.bf16.mxu0 0
        %4845 = vmatpush1.bf16.xpose.msra.mxu0 0
        %4846 = vmatprep.subr.bf16.mxu0 0
        %4847 = vmatpush1.bf16.xpose.msra.mxu0 0
        %4848 = vmatprep.subr.bf16.mxu0 0
        %4849 = vmatpush1.bf16.xpose.msra.mxu0 0
        %4850 = vmatprep.subr.bf16.mxu0 0
        %4851 = vmatpush1.bf16.xpose.msra.mxu0 0
        %4852 = vmatprep.subr.bf16.mxu0 0
        %4853 = vmatpush1.bf16.xpose.msra.mxu0 0
        %4854 = vmatprep.subr.bf16.mxu0 0
        %4855 = vmatpush1.bf16.xpose.msra.mxu0 0
        %4856 = vmatprep.subr.bf16.mxu0 0
        %4857 = vmatpush1.bf16.xpose.msra.mxu0 0
        %4858 = vmatprep.subr.bf16.mxu0 0
        %4859 = vmatpush1.bf16.xpose.msra.mxu0 0
        %4860 = vmatprep.subr.bf16.mxu0 0
        %4861 = vmatpush1.bf16.xpose.msra.mxu0 0
        %4862 = vmatprep.mubr.bf16.mxu0 0
        %4863 = vmatmul.mubr.bf16.gmra.mrb[0].mxu0 %v4825
        %v4864 = vpop.f32.mrb[0].mxu0
        %v4865 = vadd.f32 0.0, %v4864
        %v4866 = vpop.f32.mrb[0].mxu0
        %v4867 = vpop.f32.mrb[0].mxu0
        %v4868 = vadd.f32 0.0, %v4867
        %v4869 = vpop.f32.mrb[0].mxu0
        %4870 = vdwg.mxu0
        %v4871 = vsel %vm522, %v4814, -inf
        %4872 = vmax.xlane.f32.xlu0 %v4871
        %v4873 = vpop.xlane.xlu0 %4872
        %v4874 = vsel %vm522, %v4817, -inf
        %4875 = vmax.xlane.f32.xlu0 %v4874
        %v4876 = vpop.xlane.xlu0 %4875
        %v4877 = vsel %vm522, %v4865, -inf
        %4878 = vmax.xlane.f32.xlu0 %v4877
        %v4879 = vpop.xlane.xlu0 %4878
        %v4880 = vsel %vm522, %v4868, -inf
        %4881 = vmax.xlane.f32.xlu0 %v4880
        %v4882 = vpop.xlane.xlu0 %4881
        %v4883 = vsub.f32 %v4814, %v4873
        %v4884 = vsub.f32 %v4817, %v4876
        %v4885 = vsub.f32 %v4865, %v4879
        %v4886 = vsub.f32 %v4868, %v4882
        %v4887 = vmul.f32 %v4883, 1.442695
        %v4888 = vpow.pop %v4887
        %v4889 = vmul.f32 %v4884, 1.442695
        %v4890 = vpow.pop %v4889
        %v4891 = vmul.f32 %v4885, 1.442695
        %v4892 = vpow.pop %v4891
        %v4893 = vmul.f32 %v4886, 1.442695
        %v4894 = vpow.pop %v4893
        %v4895 = vsel %vm522, %v4888, 0.0
        %4896 = vadd.xlane.f32.xlu0 %v4895
        %v4897 = vpop.xlane.xlu0 %4896
        %v4898 = vsel %vm522, %v4890, 0.0
        %4899 = vadd.xlane.f32.xlu0 %v4898
        %v4900 = vpop.xlane.xlu0 %4899
        %v4901 = vsel %vm522, %v4892, 0.0
        %4902 = vadd.xlane.f32.xlu0 %v4901
        %v4903 = vpop.xlane.xlu0 %4902
        %v4904 = vsel %vm522, %v4894, 0.0
        %4905 = vadd.xlane.f32.xlu0 %v4904
        %v4906 = vpop.xlane.xlu0 %4905
        %v4907 = vrcp.pop %v4897
        %v4908 = vrcp.pop %v4900
        %v4909 = vrcp.pop %v4903
        %v4910 = vrcp.pop %v4906
        %v4911 = vmul.f32 %v4888, %v4907
        %v4912 = vmul.f32 %v4890, %v4908
        %v4913 = vmul.f32 %v4892, %v4909
        %v4914 = vmul.f32 %v4894, %v4910
        %v4915 = vcombine.high %v4911, 0.0
        %v4917 = vunpack.c.l.s4 1983009808
        %v4918 = vunpack.c.0.s8 %v4917
        %v4919 = vlaneseq
        %v4920 = vshrl.u32 %v4919, 7
        %v4921 = vsub.s32 %v4918, %v4920
        %v4922 = vrot.slane %v4911, %v4921
        %v4924 = vunpack.c.l.s4 1983009808
        %v4925 = vunpack.c.0.s8 %v4924
        %v4926 = vlaneseq
        %v4927 = vshrl.u32 %v4926, 7
        %v4928 = vsub.s32 %v4925, %v4927
        %v4929 = vrot.slane %v4915, %v4928
        %v4930 = vcombine.high %v4922, 0.0
        %v4932 = vunpack.c.l.s4 1934713408
        %v4933 = vunpack.c.0.s8 %v4932
        %v4934 = vlaneseq
        %v4935 = vshrl.u32 %v4934, 7
        %v4936 = vsub.s32 %v4933, %v4935
        %v4937 = vrot.slane %v4922, %v4936
        %v4939 = vunpack.c.l.s4 1934713408
        %v4940 = vunpack.c.0.s8 %v4939
        %v4941 = vlaneseq
        %v4942 = vshrl.u32 %v4941, 7
        %v4943 = vsub.s32 %v4940, %v4942
        %v4944 = vrot.slane %v4930, %v4943
        %v4945 = vcombine.high %v4929, 0.0
        %v4947 = vunpack.c.l.s4 1934713408
        %v4948 = vunpack.c.0.s8 %v4947
        %v4949 = vlaneseq
        %v4950 = vshrl.u32 %v4949, 7
        %v4951 = vsub.s32 %v4948, %v4950
        %v4952 = vrot.slane %v4929, %v4951
        %v4954 = vunpack.c.l.s4 1934713408
        %v4955 = vunpack.c.0.s8 %v4954
        %v4956 = vlaneseq
        %v4957 = vshrl.u32 %v4956, 7
        %v4958 = vsub.s32 %v4955, %v4957
        %v4959 = vrot.slane %v4945, %v4958
        %v4960 = vcombine.high %v4937, 0.0
        %v4961 = vcombine.high %v4944, 0.0
        %v4962 = vcombine.high %v4952, 0.0
        %v4963 = vcombine.high %v4959, 0.0
        %v4964 = vcombine.high %v4912, 0.0
        %v4966 = vunpack.c.l.s4 1983009808
        %v4967 = vunpack.c.0.s8 %v4966
        %v4968 = vlaneseq
        %v4969 = vshrl.u32 %v4968, 7
        %v4970 = vsub.s32 %v4967, %v4969
        %v4971 = vrot.slane %v4912, %v4970
        %v4973 = vunpack.c.l.s4 1983009808
        %v4974 = vunpack.c.0.s8 %v4973
        %v4975 = vlaneseq
        %v4976 = vshrl.u32 %v4975, 7
        %v4977 = vsub.s32 %v4974, %v4976
        %v4978 = vrot.slane %v4964, %v4977
        %v4979 = vcombine.high %v4971, 0.0
        %v4981 = vunpack.c.l.s4 1934713408
        %v4982 = vunpack.c.0.s8 %v4981
        %v4983 = vlaneseq
        %v4984 = vshrl.u32 %v4983, 7
        %v4985 = vsub.s32 %v4982, %v4984
        %v4986 = vrot.slane %v4971, %v4985
        %v4988 = vunpack.c.l.s4 1934713408
        %v4989 = vunpack.c.0.s8 %v4988
        %v4990 = vlaneseq
        %v4991 = vshrl.u32 %v4990, 7
        %v4992 = vsub.s32 %v4989, %v4991
        %v4993 = vrot.slane %v4979, %v4992
        %v4994 = vcombine.high %v4978, 0.0
        %v4996 = vunpack.c.l.s4 1934713408
        %v4997 = vunpack.c.0.s8 %v4996
        %v4998 = vlaneseq
        %v4999 = vshrl.u32 %v4998, 7
        %v5000 = vsub.s32 %v4997, %v4999
        %v5001 = vrot.slane %v4978, %v5000
        %v5003 = vunpack.c.l.s4 1934713408
        %v5004 = vunpack.c.0.s8 %v5003
        %v5005 = vlaneseq
        %v5006 = vshrl.u32 %v5005, 7
        %v5007 = vsub.s32 %v5004, %v5006
        %v5008 = vrot.slane %v4994, %v5007
        %v5009 = vcombine.high %v4986, 0.0
        %v5010 = vcombine.high %v4993, 0.0
        %v5011 = vcombine.high %v5001, 0.0
        %v5012 = vcombine.high %v5008, 0.0
        %v5013 = vcombine.high %v4913, 0.0
        %v5015 = vunpack.c.l.s4 1983009808
        %v5016 = vunpack.c.0.s8 %v5015
        %v5017 = vlaneseq
        %v5018 = vshrl.u32 %v5017, 7
        %v5019 = vsub.s32 %v5016, %v5018
        %v5020 = vrot.slane %v4913, %v5019
        %v5022 = vunpack.c.l.s4 1983009808
        %v5023 = vunpack.c.0.s8 %v5022
        %v5024 = vlaneseq
        %v5025 = vshrl.u32 %v5024, 7
        %v5026 = vsub.s32 %v5023, %v5025
        %v5027 = vrot.slane %v5013, %v5026
        %v5028 = vcombine.high %v5020, 0.0
        %v5030 = vunpack.c.l.s4 1934713408
        %v5031 = vunpack.c.0.s8 %v5030
        %v5032 = vlaneseq
        %v5033 = vshrl.u32 %v5032, 7
        %v5034 = vsub.s32 %v5031, %v5033
        %v5035 = vrot.slane %v5020, %v5034
        %v5037 = vunpack.c.l.s4 1934713408
        %v5038 = vunpack.c.0.s8 %v5037
        %v5039 = vlaneseq
        %v5040 = vshrl.u32 %v5039, 7
        %v5041 = vsub.s32 %v5038, %v5040
        %v5042 = vrot.slane %v5028, %v5041
        %v5043 = vcombine.high %v5027, 0.0
        %v5045 = vunpack.c.l.s4 1934713408
        %v5046 = vunpack.c.0.s8 %v5045
        %v5047 = vlaneseq
        %v5048 = vshrl.u32 %v5047, 7
        %v5049 = vsub.s32 %v5046, %v5048
        %v5050 = vrot.slane %v5027, %v5049
        %v5052 = vunpack.c.l.s4 1934713408
        %v5053 = vunpack.c.0.s8 %v5052
        %v5054 = vlaneseq
        %v5055 = vshrl.u32 %v5054, 7
        %v5056 = vsub.s32 %v5053, %v5055
        %v5057 = vrot.slane %v5043, %v5056
        %v5058 = vcombine.high %v5035, 0.0
        %v5059 = vcombine.high %v5042, 0.0
        %v5060 = vcombine.high %v5050, 0.0
        %v5061 = vcombine.high %v5057, 0.0
        %v5062 = vcombine.high %v4914, 0.0
        %v5064 = vunpack.c.l.s4 1983009808
        %v5065 = vunpack.c.0.s8 %v5064
        %v5066 = vlaneseq
        %v5067 = vshrl.u32 %v5066, 7
        %v5068 = vsub.s32 %v5065, %v5067
        %v5069 = vrot.slane %v4914, %v5068
        %v5071 = vunpack.c.l.s4 1983009808
        %v5072 = vunpack.c.0.s8 %v5071
        %v5073 = vlaneseq
        %v5074 = vshrl.u32 %v5073, 7
        %v5075 = vsub.s32 %v5072, %v5074
        %v5076 = vrot.slane %v5062, %v5075
        %v5077 = vcombine.high %v5069, 0.0
        %v5079 = vunpack.c.l.s4 1934713408
        %v5080 = vunpack.c.0.s8 %v5079
        %v5081 = vlaneseq
        %v5082 = vshrl.u32 %v5081, 7
        %v5083 = vsub.s32 %v5080, %v5082
        %v5084 = vrot.slane %v5069, %v5083
        %v5086 = vunpack.c.l.s4 1934713408
        %v5087 = vunpack.c.0.s8 %v5086
        %v5088 = vlaneseq
        %v5089 = vshrl.u32 %v5088, 7
        %v5090 = vsub.s32 %v5087, %v5089
        %v5091 = vrot.slane %v5077, %v5090
        %v5092 = vcombine.high %v5076, 0.0
        %v5094 = vunpack.c.l.s4 1934713408
        %v5095 = vunpack.c.0.s8 %v5094
        %v5096 = vlaneseq
        %v5097 = vshrl.u32 %v5096, 7
        %v5098 = vsub.s32 %v5095, %v5097
        %v5099 = vrot.slane %v5076, %v5098
        %v5101 = vunpack.c.l.s4 1934713408
        %v5102 = vunpack.c.0.s8 %v5101
        %v5103 = vlaneseq
        %v5104 = vshrl.u32 %v5103, 7
        %v5105 = vsub.s32 %v5102, %v5104
        %v5106 = vrot.slane %v5092, %v5105
        %v5107 = vcombine.high %v5084, 0.0
        %v5108 = vcombine.high %v5091, 0.0
        %v5109 = vcombine.high %v5099, 0.0
        %v5110 = vcombine.high %v5106, 0.0
        %5113 = vrot.lane.b32.xlu0 %v4960, 16
        %v5114 = vpop.permute.xlu0 %5113
        %5115 = vrot.lane.b32.xlu0 %v5058, 16
        %v5116 = vpop.permute.xlu0 %5115
        %5121 = vrot.lane.b32.xlu0 %v4944, 32
        %v5122 = vpop.permute.xlu0 %5121
        %5123 = vrot.lane.b32.xlu0 %v5042, 32
        %v5124 = vpop.permute.xlu0 %5123
        %5129 = vrot.lane.b32.xlu0 %v4961, 48
        %v5130 = vpop.permute.xlu0 %5129
        %5131 = vrot.lane.b32.xlu0 %v5059, 48
        %v5132 = vpop.permute.xlu0 %5131
        %5137 = vrot.lane.b32.xlu0 %v4952, 64
        %v5138 = vpop.permute.xlu0 %5137
        %5139 = vrot.lane.b32.xlu0 %v5050, 64
        %v5140 = vpop.permute.xlu0 %5139
        %5145 = vrot.lane.b32.xlu0 %v4962, 80
        %v5146 = vpop.permute.xlu0 %5145
        %5147 = vrot.lane.b32.xlu0 %v5060, 80
        %v5148 = vpop.permute.xlu0 %5147
        %5153 = vrot.lane.b32.xlu0 %v4959, 96
        %v5154 = vpop.permute.xlu0 %5153
        %5155 = vrot.lane.b32.xlu0 %v5057, 96
        %v5156 = vpop.permute.xlu0 %5155
        %5161 = vrot.lane.b32.xlu0 %v4963, 112
        %v5162 = vpop.permute.xlu0 %5161
        %5163 = vrot.lane.b32.xlu0 %v5061, 112
        %v5164 = vpop.permute.xlu0 %5163
        %5169 = vrot.lane.b32.xlu0 %v5009, 16
        %v5170 = vpop.permute.xlu0 %5169
        %5171 = vrot.lane.b32.xlu0 %v5107, 16
        %v5172 = vpop.permute.xlu0 %5171
        %5177 = vrot.lane.b32.xlu0 %v4993, 32
        %v5178 = vpop.permute.xlu0 %5177
        %5179 = vrot.lane.b32.xlu0 %v5091, 32
        %v5180 = vpop.permute.xlu0 %5179
        %5185 = vrot.lane.b32.xlu0 %v5010, 48
        %v5186 = vpop.permute.xlu0 %5185
        %5187 = vrot.lane.b32.xlu0 %v5108, 48
        %v5188 = vpop.permute.xlu0 %5187
        %5193 = vrot.lane.b32.xlu0 %v5001, 64
        %v5194 = vpop.permute.xlu0 %5193
        %5195 = vrot.lane.b32.xlu0 %v5099, 64
        %v5196 = vpop.permute.xlu0 %5195
        %5201 = vrot.lane.b32.xlu0 %v5011, 80
        %v5202 = vpop.permute.xlu0 %5201
        %5203 = vrot.lane.b32.xlu0 %v5109, 80
        %v5204 = vpop.permute.xlu0 %5203
        %5209 = vrot.lane.b32.xlu0 %v5008, 96
        %v5210 = vpop.permute.xlu0 %5209
        %5211 = vrot.lane.b32.xlu0 %v5106, 96
        %v5212 = vpop.permute.xlu0 %5211
        %5217 = vrot.lane.b32.xlu0 %v5012, 112
        %v5218 = vpop.permute.xlu0 %5217
        %5219 = vrot.lane.b32.xlu0 %v5110, 112
        %v5220 = vpop.permute.xlu0 %5219
        %v5223 = vsel %vm522, %v4937, %v5114
        %v5224 = vsel %vm522, %v5035, %v5116
        %v5225 = vsel %vm363, %v5223, %v5122
        %v5226 = vsel %vm363, %v5224, %v5124
        %v5227 = vsel %vm879, %v5225, %v5130
        %v5228 = vsel %vm879, %v5226, %v5132
        %v5229 = vsel %vm882, %v5227, %v5138
        %v5230 = vsel %vm882, %v5228, %v5140
        %v5231 = vsel %vm885, %v5229, %v5146
        %v5232 = vsel %vm885, %v5230, %v5148
        %v5233 = vsel %vm888, %v5231, %v5154
        %v5234 = vsel %vm888, %v5232, %v5156
        %v5235 = vsel %vm891, %v5233, %v5162
        %v5236 = vsel %vm891, %v5234, %v5164
        %v5237 = vsel %vm522, %v4986, %v5170
        %v5238 = vsel %vm522, %v5084, %v5172
        %v5239 = vsel %vm363, %v5237, %v5178
        %v5240 = vsel %vm363, %v5238, %v5180
        %v5241 = vsel %vm879, %v5239, %v5186
        %v5242 = vsel %vm879, %v5240, %v5188
        %v5243 = vsel %vm882, %v5241, %v5194
        %v5244 = vsel %vm882, %v5242, %v5196
        %v5245 = vsel %vm885, %v5243, %v5202
        %v5246 = vsel %vm885, %v5244, %v5204
        %v5247 = vsel %vm888, %v5245, %v5210
        %v5248 = vsel %vm888, %v5246, %v5212
        %v5249 = vsel %vm891, %v5247, %v5218
        %v5250 = vsel %vm891, %v5248, %v5220
        %v5255 = vcombine.low %v5235, %v5249
        %v5257 = vunpack.c.l.s4 1966171168
        %v5258 = vunpack.c.0.s8 %v5257
        %v5259 = vlaneseq
        %v5260 = vshrl.u32 %v5259, 7
        %v5261 = vsub.s32 %v5258, %v5260
        %v5262 = vrot.slane %v5255, %v5261
        %v5264 = vunpack.c.l.s4 1966171168
        %v5265 = vunpack.c.0.s8 %v5264
        %v5266 = vlaneseq
        %v5267 = vshrl.u32 %v5266, 7
        %v5268 = vsub.s32 %v5265, %v5267
        %v5269 = vrot.slane %v5262, %v5268
        %v5270 = vcombine.low %v5236, %v5250
        %v5272 = vunpack.c.l.s4 1966171168
        %v5273 = vunpack.c.0.s8 %v5272
        %v5274 = vlaneseq
        %v5275 = vshrl.u32 %v5274, 7
        %v5276 = vsub.s32 %v5273, %v5275
        %v5277 = vrot.slane %v5270, %v5276
        %v5279 = vunpack.c.l.s4 1966171168
        %v5280 = vunpack.c.0.s8 %v5279
        %v5281 = vlaneseq
        %v5282 = vshrl.u32 %v5281, 7
        %v5283 = vsub.s32 %v5280, %v5282
        %v5284 = vrot.slane %v5277, %v5283
        %s5287 = scalar_lea.vmem %s325, 7
        %5288 = vst.msk [vmem:[%s5287] ss:$8 sm:$0x3] %vm947, %v5269
        %5289 = vst.msk [vmem:[%s5287] ss:$8 sm:$0x0] %vm947, %v5269
        %s5290 = scalar_lea.vmem %s325, 23
        %5291 = vst.msk [vmem:[%s5290] ss:$8 sm:$0x3] %vm947, %v5284
        %5292 = vst.msk [vmem:[%s5290] ss:$8 sm:$0x0] %vm947, %v5284
        %v5293 = vpack.c.bf16 %v4912, %v4911
        %v5294 = vpack.c.bf16 %v4914, %v4913
        %5295 = vrot.lane.b32.xlu0 %v419, 36
        %v5296 = vpop.permute.xlu0 %5295
        %v5299 = vsel %vm522, %v5293, 0
        %5301 = vmatprep.subr.bf16.mxu0 0
        %5302 = vmatpush1.bf16.msra.mxu0 %v5296
        %5303 = vmatprep.subr.bf16.mxu0 0
        %5304 = vmatpush1.bf16.msra.mxu0 0
        %5305 = vmatprep.subr.bf16.mxu0 0
        %5306 = vmatpush1.bf16.msra.mxu0 0
        %5307 = vmatprep.subr.bf16.mxu0 0
        %5308 = vmatpush1.bf16.msra.mxu0 0
        %5309 = vmatprep.subr.bf16.mxu0 0
        %5310 = vmatpush1.bf16.msra.mxu0 0
        %5311 = vmatprep.subr.bf16.mxu0 0
        %5312 = vmatpush1.bf16.msra.mxu0 0
        %5313 = vmatprep.subr.bf16.mxu0 0
        %5314 = vmatpush1.bf16.msra.mxu0 0
        %5315 = vmatprep.subr.bf16.mxu0 0
        %5316 = vmatpush1.bf16.msra.mxu0 0
        %5317 = vmatprep.subr.bf16.mxu0 0
        %5318 = vmatpush1.bf16.msra.mxu0 0
        %5319 = vmatprep.subr.bf16.mxu0 0
        %5320 = vmatpush1.bf16.msra.mxu0 0
        %5321 = vmatprep.subr.bf16.mxu0 0
        %5322 = vmatpush1.bf16.msra.mxu0 0
        %5323 = vmatprep.subr.bf16.mxu0 0
        %5324 = vmatpush1.bf16.msra.mxu0 0
        %5325 = vmatprep.subr.bf16.mxu0 0
        %5326 = vmatpush1.bf16.msra.mxu0 0
        %5327 = vmatprep.subr.bf16.mxu0 0
        %5328 = vmatpush1.bf16.msra.mxu0 0
        %5329 = vmatprep.subr.bf16.mxu0 0
        %5330 = vmatpush1.bf16.msra.mxu0 0
        %5331 = vmatprep.subr.bf16.mxu0 0
        %5332 = vmatpush1.bf16.msra.mxu0 0
        %5333 = vmatprep.mubr.bf16.mxu0 0
        %5334 = vmatmul.mubr.bf16.gmra.mrb[0].mxu0 %v5299
        %v5335 = vpop.f32.mrb[0].mxu0
        %v5336 = vadd.f32 0.0, %v5335
        %v5337 = vpop.f32.mrb[0].mxu0
        %v5338 = vpop.f32.mrb[0].mxu0
        %v5339 = vadd.f32 0.0, %v5338
        %v5340 = vpop.f32.mrb[0].mxu0
        %5341 = vdwg.mxu0
        %5342 = vrot.lane.b32.xlu0 %v420, 36
        %v5343 = vpop.permute.xlu0 %5342
        %v5346 = vsel %vm522, %v5294, 0
        %5348 = vmatprep.subr.bf16.mxu0 0
        %5349 = vmatpush1.bf16.msra.mxu0 %v5343
        %5350 = vmatprep.subr.bf16.mxu0 0
        %5351 = vmatpush1.bf16.msra.mxu0 0
        %5352 = vmatprep.subr.bf16.mxu0 0
        %5353 = vmatpush1.bf16.msra.mxu0 0
        %5354 = vmatprep.subr.bf16.mxu0 0
        %5355 = vmatpush1.bf16.msra.mxu0 0
        %5356 = vmatprep.subr.bf16.mxu0 0
        %5357 = vmatpush1.bf16.msra.mxu0 0
        %5358 = vmatprep.subr.bf16.mxu0 0
        %5359 = vmatpush1.bf16.msra.mxu0 0
        %5360 = vmatprep.subr.bf16.mxu0 0
        %5361 = vmatpush1.bf16.msra.mxu0 0
        %5362 = vmatprep.subr.bf16.mxu0 0
        %5363 = vmatpush1.bf16.msra.mxu0 0
        %5364 = vmatprep.subr.bf16.mxu0 0
        %5365 = vmatpush1.bf16.msra.mxu0 0
        %5366 = vmatprep.subr.bf16.mxu0 0
        %5367 = vmatpush1.bf16.msra.mxu0 0
        %5368 = vmatprep.subr.bf16.mxu0 0
        %5369 = vmatpush1.bf16.msra.mxu0 0
        %5370 = vmatprep.subr.bf16.mxu0 0
        %5371 = vmatpush1.bf16.msra.mxu0 0
        %5372 = vmatprep.subr.bf16.mxu0 0
        %5373 = vmatpush1.bf16.msra.mxu0 0
        %5374 = vmatprep.subr.bf16.mxu0 0
        %5375 = vmatpush1.bf16.msra.mxu0 0
        %5376 = vmatprep.subr.bf16.mxu0 0
        %5377 = vmatpush1.bf16.msra.mxu0 0
        %5378 = vmatprep.subr.bf16.mxu0 0
        %5379 = vmatpush1.bf16.msra.mxu0 0
        %5380 = vmatprep.mubr.bf16.mxu0 0
        %5381 = vmatmul.mubr.bf16.gmra.mrb[0].mxu0 %v5346
        %v5382 = vpop.f32.mrb[0].mxu0
        %v5383 = vadd.f32 0.0, %v5382
        %v5384 = vpop.f32.mrb[0].mxu0
        %v5385 = vpop.f32.mrb[0].mxu0
        %v5386 = vadd.f32 0.0, %v5385
        %v5387 = vpop.f32.mrb[0].mxu0
        %5388 = vdwg.mxu0
        %5393 = vrot.lane.b32.xlu0 %v1616, 4
        %v5394 = vpop.permute.xlu0 %5393
        %5395 = vrot.lane.b32.xlu0 %v1619, 4
        %v5396 = vpop.permute.xlu0 %5395
        %5397 = vrot.lane.b32.xlu0 %v1663, 4
        %v5398 = vpop.permute.xlu0 %5397
        %5399 = vrot.lane.b32.xlu0 %v1666, 4
        %v5400 = vpop.permute.xlu0 %5399
        %5409 = vrot.lane.b32.xlu0 %v2236, 8
        %v5410 = vpop.permute.xlu0 %5409
        %5411 = vrot.lane.b32.xlu0 %v2239, 8
        %v5412 = vpop.permute.xlu0 %5411
        %5413 = vrot.lane.b32.xlu0 %v2283, 8
        %v5414 = vpop.permute.xlu0 %5413
        %5415 = vrot.lane.b32.xlu0 %v2286, 8
        %v5416 = vpop.permute.xlu0 %5415
        %5425 = vrot.lane.b32.xlu0 %v2856, 12
        %v5426 = vpop.permute.xlu0 %5425
        %5427 = vrot.lane.b32.xlu0 %v2859, 12
        %v5428 = vpop.permute.xlu0 %5427
        %5429 = vrot.lane.b32.xlu0 %v2903, 12
        %v5430 = vpop.permute.xlu0 %5429
        %5431 = vrot.lane.b32.xlu0 %v2906, 12
        %v5432 = vpop.permute.xlu0 %5431
        %5441 = vrot.lane.b32.xlu0 %v3476, 16
        %v5442 = vpop.permute.xlu0 %5441
        %5443 = vrot.lane.b32.xlu0 %v3479, 16
        %v5444 = vpop.permute.xlu0 %5443
        %5445 = vrot.lane.b32.xlu0 %v3523, 16
        %v5446 = vpop.permute.xlu0 %5445
        %5447 = vrot.lane.b32.xlu0 %v3526, 16
        %v5448 = vpop.permute.xlu0 %5447
        %5457 = vrot.lane.b32.xlu0 %v4096, 20
        %v5458 = vpop.permute.xlu0 %5457
        %5459 = vrot.lane.b32.xlu0 %v4099, 20
        %v5460 = vpop.permute.xlu0 %5459
        %5461 = vrot.lane.b32.xlu0 %v4143, 20
        %v5462 = vpop.permute.xlu0 %5461
        %5463 = vrot.lane.b32.xlu0 %v4146, 20
        %v5464 = vpop.permute.xlu0 %5463
        %5473 = vrot.lane.b32.xlu0 %v4716, 24
        %v5474 = vpop.permute.xlu0 %5473
        %5475 = vrot.lane.b32.xlu0 %v4719, 24
        %v5476 = vpop.permute.xlu0 %5475
        %5477 = vrot.lane.b32.xlu0 %v4763, 24
        %v5478 = vpop.permute.xlu0 %5477
        %5479 = vrot.lane.b32.xlu0 %v4766, 24
        %v5480 = vpop.permute.xlu0 %5479
        %5489 = vrot.lane.b32.xlu0 %v5336, 28
        %v5490 = vpop.permute.xlu0 %5489
        %5491 = vrot.lane.b32.xlu0 %v5339, 28
        %v5492 = vpop.permute.xlu0 %5491
        %5493 = vrot.lane.b32.xlu0 %v5383, 28
        %v5494 = vpop.permute.xlu0 %5493
        %5495 = vrot.lane.b32.xlu0 %v5386, 28
        %v5496 = vpop.permute.xlu0 %5495
        %v5501 = vsel %vm424, %v996, %v5394
        %v5502 = vsel %vm424, %v999, %v5396
        %v5503 = vsel %vm424, %v1043, %v5398
        %v5504 = vsel %vm424, %v1046, %v5400
        %vm5505 = vcmask 64512
        %v5506 = vsel %vm5505, %v5501, %v5410
        %v5507 = vsel %vm5505, %v5502, %v5412
        %v5508 = vsel %vm5505, %v5503, %v5414
        %v5509 = vsel %vm5505, %v5504, %v5416
        %vm5510 = vcmask 97280
        %v5511 = vsel %vm5510, %v5506, %v5426
        %v5512 = vsel %vm5510, %v5507, %v5428
        %v5513 = vsel %vm5510, %v5508, %v5430
        %v5514 = vsel %vm5510, %v5509, %v5432
        %v5515 = vsel %vm522, %v5511, %v5442
        %v5516 = vsel %vm522, %v5512, %v5444
        %v5517 = vsel %vm522, %v5513, %v5446
        %v5518 = vsel %vm522, %v5514, %v5448
        %vm5519 = vcmask 162816
        %v5520 = vsel %vm5519, %v5515, %v5458
        %v5521 = vsel %vm5519, %v5516, %v5460
        %v5522 = vsel %vm5519, %v5517, %v5462
        %v5523 = vsel %vm5519, %v5518, %v5464
        %vm5524 = vcmask 195584
        %v5525 = vsel %vm5524, %v5520, %v5474
        %v5526 = vsel %vm5524, %v5521, %v5476
        %v5527 = vsel %vm5524, %v5522, %v5478
        %v5528 = vsel %vm5524, %v5523, %v5480
        %vm5529 = vcmask 228352
        %v5530 = vsel %vm5529, %v5525, %v5490
        %v5531 = vsel %vm5529, %v5526, %v5492
        %v5532 = vsel %vm5529, %v5527, %v5494
        %v5533 = vsel %vm5529, %v5528, %v5496
        %v5534 = vpack.c.bf16 %v5531, %v5530
        %v5535 = vpack.c.bf16 %v5533, %v5532
        %v5536 = vld [vmem:[#allocation2] sm:$0xf]
        %v5537 = vld [vmem:[#allocation2 + $0x4] sm:$0xf]
        %v5538 = vld [vmem:[#allocation2 + $0x8] sm:$0xf]
        %v5539 = vld [vmem:[#allocation2 + $0xc] sm:$0xf]
        %v5540 = vld [vmem:[#allocation5] sm:$0x1]
        %v5542 = vlaneseq
        %v5543 = vshrl.u32 %v5542, 7
        %v5544 = vsub.s32 0, %v5543
        %v5545 = vrot.slane %v5540, %v5544
        %v5551 = vunpack.c.l.b16 %v5536
        %v5552 = vunpack.c.l.b16 %v5537
        %v5553 = vunpack.c.l.b16 %v5538
        %v5554 = vunpack.c.l.b16 %v5539
        %v5555 = vpack.c.b16 %v5552, %v5551
        %v5556 = vpack.c.b16 %v5554, %v5553
        %v5560 = vsel %vm363, %v5534, 0
        %v5563 = vsel %vm363, %v5535, 0
        %5565 = vmatprep.subr.bf16.mxu0 0
        %5566 = vmatpush1.bf16.msra.mxu0 %v5555
        %5567 = vmatprep.subr.bf16.mxu0 0
        %5568 = vmatpush1.bf16.msra.mxu0 %v5556
        %5569 = vmatprep.subr.bf16.mxu0 0
        %5570 = vmatpush1.bf16.msra.mxu0 0
        %5571 = vmatprep.subr.bf16.mxu0 0
        %5572 = vmatpush1.bf16.msra.mxu0 0
        %5573 = vmatprep.subr.bf16.mxu0 0
        %5574 = vmatpush1.bf16.msra.mxu0 0
        %5575 = vmatprep.subr.bf16.mxu0 0
        %5576 = vmatpush1.bf16.msra.mxu0 0
        %5577 = vmatprep.subr.bf16.mxu0 0
        %5578 = vmatpush1.bf16.msra.mxu0 0
        %5579 = vmatprep.subr.bf16.mxu0 0
        %5580 = vmatpush1.bf16.msra.mxu0 0
        %5581 = vmatprep.subr.bf16.mxu0 0
        %5582 = vmatpush1.bf16.msra.mxu0 0
        %5583 = vmatprep.subr.bf16.mxu0 0
        %5584 = vmatpush1.bf16.msra.mxu0 0
        %5585 = vmatprep.subr.bf16.mxu0 0
        %5586 = vmatpush1.bf16.msra.mxu0 0
        %5587 = vmatprep.subr.bf16.mxu0 0
        %5588 = vmatpush1.bf16.msra.mxu0 0
        %5589 = vmatprep.subr.bf16.mxu0 0
        %5590 = vmatpush1.bf16.msra.mxu0 0
        %5591 = vmatprep.subr.bf16.mxu0 0
        %5592 = vmatpush1.bf16.msra.mxu0 0
        %5593 = vmatprep.subr.bf16.mxu0 0
        %5594 = vmatpush1.bf16.msra.mxu0 0
        %5595 = vmatprep.subr.bf16.mxu0 0
        %5596 = vmatpush1.bf16.msra.mxu0 0
        %5597 = vmatprep.mubr.bf16.mxu0 0
        %5598 = vmatmul.mubr.bf16.gmra.mrb[0].mxu0 %v5560
        %v5599 = vpop.f32.mrb[0].mxu0
        %v5600 = vadd.f32 %v5545, %v5599
        %v5601 = vpop.f32.mrb[0].mxu0
        %v5602 = vpop.f32.mrb[0].mxu0
        %v5603 = vadd.f32 %v5545, %v5602
        %v5604 = vpop.f32.mrb[0].mxu0
        %5605 = vmatprep.mubr.bf16.mxu0 0
        %5606 = vmatmul.mubr.bf16.gmra.mrb[0].mxu0 %v5563
        %v5607 = vpop.f32.mrb[0].mxu0
        %v5608 = vadd.f32 %v5545, %v5607
        %v5609 = vpop.f32.mrb[0].mxu0
        %v5610 = vpop.f32.mrb[0].mxu0
        %v5611 = vadd.f32 %v5545, %v5610
        %v5612 = vpop.f32.mrb[0].mxu0
        %5613 = vdwg.mxu0
        %5614 = vst.msk [vmem:[%s303] sm:$0xff] %vm363, %v5600
        %5615 = vst.msk [vmem:[%s303 + $0x8] sm:$0xff] %vm363, %v5603
        %5616 = vst.msk [vmem:[%s303 + $0x10] sm:$0xff] %vm363, %v5608
        %5617 = vst.msk [vmem:[%s303 + $0x18] sm:$0xff] %vm363, %v5611
        %s5618 = sand.u32 %s163, 1
        %s5619 = scalar_lea.sflag [#allocation4], %s5618
        %s5620 = sand.u32 %s163, 1
        %s5621 = smul.addr %s5620, 32
        %s5622 = scalar_lea.vmem [#allocation7], %s5621
        %s5623 = smul.u32 2, %s24
        %p5624 = scmp.lt.s32.totalorder %s5623, 3
        %s5625 = scalar_select %p5624, %s5623, 3
        %s5626 = smul.addr %s5625, 2
        %s5627 = smul.addr %s5626, 8
        %s5628 = scalar_lea.vmem %s7, %s5627
        // Predicated region
        $region53: #{temporal_attention_forward.1} parent=43 // pred_check
          %p5629 = pneg %p173
        $region54: #{temporal_attention_forward.1} parent=43 // pred_check_branch
          %5631 = sbr.rel (%p5629) target = $region56
        $region55: #{temporal_attention_forward.1} parent=43 // pred_region
          %s5632 = smul.u32 2, %s24
          %s5634 = ssub.s32 512, 512
          %5635 = vsyncadd %s5619, %s5634
          %s5636 = smul.addr %s5632, 2
          %s5637 = smul.addr %s5636, 128
          %s5638 = scalar_lea.hbm %s6, %s5637
          %s5639 = sshll.u32 %s5622, 4
          %s5640 = int_to_ptr.vmem [resolvable:$true] %s5639
          %5645 = dma.vmem_to_hbm [thread:$0]  %s5640, 512, %s5638, %s5619, 128, 128, 8
        $region56: #{temporal_attention_forward.1} parent=43 // pred_fallthru
          _
        // Predicated region
        $region57: #{temporal_attention_forward.1} parent=43 // pred_check
          %p5646 = pneg %p199
        $region58: #{temporal_attention_forward.1} parent=43 // pred_check_branch
          %5648 = sbr.rel (%p5646) target = $region60
        $region59: #{temporal_attention_forward.1} parent=43 // pred_region
          %s5649 = smul.u32 2, %s24
        $region60: #{temporal_attention_forward.1} parent=43 // pred_fallthru
          _
      $region44: #{temporal_attention_forward.1} parent=5 // pred_fallthru
        _
      %p5650 = scmp.le.s32.totalorder 2, %s19
      // Predicated region
      $region61: #{temporal_attention_forward.1} parent=5 // pred_check
        %p5651 = pneg %p5650
      $region62: #{temporal_attention_forward.1} parent=5 // pred_check_branch
        %5653 = sbr.rel (%p5651) target = $region64
      $region63: #{temporal_attention_forward.1} parent=5 // pred_region
        %s5654 = ssub.s32 %s19, 2
        // Predicated region
        $region65: #{temporal_attention_forward.1} parent=63 // pred_check
          %p5655 = pneg %p179
        $region66: #{temporal_attention_forward.1} parent=63 // pred_check_branch
          %5657 = sbr.rel (%p5655) target = $region68
        $region67: #{temporal_attention_forward.1} parent=63 // pred_region
          %s5658 = sand.u32 %s164, 1
          %s5659 = scalar_lea.sflag [#allocation4], %s5658
          %s5660 = sand.u32 %s164, 1
          %s5661 = smul.addr %s5660, 32
          %s5662 = scalar_lea.vmem [#allocation7], %s5661
          %5663 = dma.done %s5659, 512
        $region68: #{temporal_attention_forward.1} parent=63 // pred_fallthru
          _
        // Predicated region
        $region69: #{temporal_attention_forward.1} parent=63 // pred_check
          %p5664 = pneg %p205
        $region70: #{temporal_attention_forward.1} parent=63 // pred_check_branch
          %5666 = sbr.rel (%p5664) target = $region72
        $region71: #{temporal_attention_forward.1} parent=63 // pred_region
          %s5667 = smul.u32 2, %s25
          %p5668 = scmp.lt.s32.totalorder %s5667, 3
          %s5669 = scalar_select %p5668, %s5667, 3
          %s5670 = smul.addr %s5669, 2
          %s5671 = smul.addr %s5670, 8
          %s5672 = scalar_lea.vmem %s7, %s5671
        $region72: #{temporal_attention_forward.1} parent=63 // pred_fallthru
          _
      $region64: #{temporal_attention_forward.1} parent=5 // pred_fallthru
        _
    $region6: #{temporal_attention_forward.1} parent=1 // loop_footer
      %s23 = sadd.s32 1, %s19
    $region7: #{temporal_attention_forward.1} parent=1 // loop_footer_branch
      %18 = sbr.rel target = $region3
    $region8: #{temporal_attention_forward.1} parent=1 // loop_exit
      _
    %5673 = vsyncpa [#allocation3], 1
    %s5674 = scalar_lea.sflag [#allocation3], 1
    %5675 = vsyncpa %s5674, 1
    %5676 = vsyncpa [#allocation6], 1
    %5677 = vsyncpa [#allocation4], 1
    %s5678 = scalar_lea.sflag [#allocation4], 1
    %5679 = vsyncpa %s5678, 1

</llo_original>
